<compile_context>
chip_gen: v7x
topology: tpu7x:2x2x1
jax: 0.10.0
libtpu: 0.0.40
codegen_flags: <defaults>
</compile_context>

<pallas_src>
import functools

import jax
import jax.numpy as jnp
from jax.experimental import pallas as pl
from jax.experimental.pallas import tpu as pltpu


def _round_up(x, m):
    return ((x + m - 1) // m) * m


# ----------------------------------------------------------------------------
# Fused forward kernel: one grid step == one block of `bb` batch elements.
# ----------------------------------------------------------------------------
def _fused_forward_kernel(
    nodeT_ref,   # (2, bb*W, Fin, N)  bf16   node features, pre-transposed
    adj_ref,     # (2, bb*W, N, N)    bf16   adjacencies
    gw1_ref,     # (Fin, Fo, N)       f32    GCN weight, pre-broadcast over nodes
    gb1_ref,     # (1, Fo, 1)         f32
    gw2_ref, gb2_ref,
    w1r_ref,     # (2*Fo, N, DFF)     bf16   embed rows grouped (modality, feat, node)
    b1_ref,      # (1, DFF)           f32
    wt_ref,      # (bb*PRED, bb*W)    bf16   kron(I_bb, wt)  seq->pred projection
    w2_ref,      # (DFF, COUT)        bf16
    tb2_ref,     # (bb*PRED, COUT)    f32    reassociated bias (rowsum(wt) * b2)
    hw_ref,      # (COUT, HOUT)       bf16   block-diag fc1..fc4
    hb_ref,      # (1, HOUT)          f32
    out_ref,     # (bb, PRED, HOUT)   f32
):
    _, G, FIN, N = nodeT_ref.shape          # G = bb * W
    FO = gw1_ref.shape[1]
    DFF = w1r_ref.shape[-1]
    BB, PRED, _ = out_ref.shape

    gw_refs = (gw1_ref, gw2_ref)
    gb_refs = (gb1_ref, gb2_ref)

    # ---- spatial (GCN per modality) + embed accumulation --------------------
    u = jnp.zeros((G, DFF), jnp.float32)
    for m in range(2):                       # static: 2 modalities
        xT = nodeT_ref[m]                    # (G, Fin, N) bf16
        am = adj_ref[m]                      # (G, N, N)   bf16
        # aggregate-then-project (3x fewer flops): batched over g, contract j
        hp = jnp.einsum('gfj,gnj->gfn', xT, am,
                        preferred_element_type=jnp.float32)      # (G, Fin, N) f32
        # tiny Fin contraction as VPU broadcast-FMAs (sublane slices only)
        gw = gw_refs[m]
        xw = hp[:, 0:1, :] * gw[0]                               # (G, Fo, N)
        for f in range(1, FIN):
            xw = xw + hp[:, f:f + 1, :] * gw[f]
        h = jnp.maximum(xw + gb_refs[m][...], 0.0)               # (G, Fo, N) f32
        h = h.astype(jnp.bfloat16)
        # embed: for each gcn feature o contract the node axis with one 2-D dot;
        # NodeSampler mask already folded into zeroed rows of w1r.
        for o in range(FO):                  # static: 8
            u = u + jnp.dot(h[:, o, :], w1r_ref[m * FO + o],
                            preferred_element_type=jnp.float32)  # (G, N)@(N, DFF)
    u = jnp.maximum(u + b1_ref[...], 0.0)                        # (G, DFF) f32

    # ---- temporal (simplified TimesNet core path), time-proj reassociated ---
    tu = jnp.dot(wt_ref[...], u.astype(jnp.bfloat16),
                 preferred_element_type=jnp.float32)             # (bb*PRED, DFF)
    z = jnp.dot(tu.astype(jnp.bfloat16), w2_ref[...],
                preferred_element_type=jnp.float32) + tb2_ref[...]   # (bb*PRED, COUT)

    # ---- fc1..fc4 folded into a single block-diagonal Linear + ReLU ---------
    y = jnp.dot(z.astype(jnp.bfloat16), hw_ref[...],
                preferred_element_type=jnp.float32) + hb_ref[...]
    y = jnp.maximum(y, 0.0)                                      # (bb*PRED, HOUT)
    for b in range(BB):                      # static, small
        out_ref[b] = y[b * PRED:(b + 1) * PRED, :]


def fused_forward(params, nodeT, adj, *, batch, window, node_num):
    B, W, N = batch, window, node_num
    Fin = nodeT.shape[2]
    PRED = params["wt"].shape[0]
    DFF = params["w1r"].shape[-1]
    COUT = params["w2"].shape[-1]
    HOUT = params["hw"].shape[-1]

    # Batch blocking: prefer >=2 grid steps (v7x has 2 TensorCores); shrink the
    # block if the per-step adjacency block would blow the VMEM budget.
    bb = B // 2 if (B % 2 == 0 and B >= 2) else B
    while bb > 1 and bb % 2 == 0 and (2 * bb * W * N * N * 2) > (8 << 20):
        bb //= 2
    grid_b = B // bb

    # Batched seq->pred projection over the batch block (block-diag kron) and
    # its reassociated bias tiled to the same row layout (batch-major, pred).
    wt_blk = jnp.kron(jnp.eye(bb, dtype=jnp.float32),
                      params["wt"]).astype(jnp.bfloat16)         # (bb*PRED, bb*W)
    tb2_blk = jnp.tile(params["tb2"], (bb, 1))                   # (bb*PRED, COUT)

    # TODO(synk): at production node counts, add pipeline_mode=pl.Buffered(1) on
    # the grid-invariant weight specs (v7x 64 MiB VMEM) and tile W as a
    # reduction axis; not needed at these shapes.
    return pl.pallas_call(
        _fused_forward_kernel,
        out_shape=jax.ShapeDtypeStruct((B, PRED, HOUT), jnp.float32),
        grid=(grid_b,),
        in_specs=[
            pl.BlockSpec((2, bb * W, Fin, N), lambda b: (0, b, 0, 0)),
            pl.BlockSpec((2, bb * W, N, N), lambda b: (0, b, 0, 0)),
            pl.BlockSpec(params["gw1"].shape, lambda b: (0, 0, 0)),
            pl.BlockSpec(params["gb1"].shape, lambda b: (0, 0, 0)),
            pl.BlockSpec(params["gw2"].shape, lambda b: (0, 0, 0)),
            pl.BlockSpec(params["gb2"].shape, lambda b: (0, 0, 0)),
            pl.BlockSpec(params["w1r"].shape, lambda b: (0, 0, 0)),
            pl.BlockSpec(params["b1"].shape, lambda b: (0, 0)),
            pl.BlockSpec(wt_blk.shape, lambda b: (0, 0)),
            pl.BlockSpec(params["w2"].shape, lambda b: (0, 0)),
            pl.BlockSpec(tb2_blk.shape, lambda b: (0, 0)),
            pl.BlockSpec(params["hw"].shape, lambda b: (0, 0)),
            pl.BlockSpec(params["hb"].shape, lambda b: (0, 0)),
        ],
        out_specs=pl.BlockSpec((bb, PRED, HOUT), lambda b: (b, 0, 0)),
        compiler_params=pltpu.CompilerParams(
            dimension_semantics=("parallel",),
            vmem_limit_bytes=48 * 1024 * 1024),
    )(nodeT, adj,
      params["gw1"], params["gb1"], params["gw2"], params["gb2"],
      params["w1r"], params["b1"], wt_blk, params["w2"], tb2_blk,
      params["hw"], params["hb"])


# ----------------------------------------------------------------------------
# Parameters (weights stored in kernel-ready, lane-dense, bf16-for-MXU shapes)
# ----------------------------------------------------------------------------
def init_params(key, node_num, window_size, pred_size, in_features=2, gcn_out=8):
    N = node_num
    d_ff = 2 * N
    c_out = 4 * N
    DFF = _round_up(d_ff, 128)
    COUT = _round_up(c_out, 128)
    HOUT = _round_up(c_out, 128)
    ks = jax.random.split(key, 13)

    def nrm(k, shape, scale=0.1):
        return (scale * jax.random.normal(k, shape)).astype(jnp.float32)

    # Generator: one GCN layer per modality (out_features = 8): relu(adj@x@W + b)
    gw1 = nrm(ks[0], (in_features, gcn_out))
    gb1 = nrm(ks[1], (gcn_out,))
    gw2 = nrm(ks[2], (in_features, gcn_out))
    gb2 = nrm(ks[3], (gcn_out,))

    # NodeSampler: deterministic random node subset; the post-ReLU row zeroing is
    # folded exactly into the embed weight's node rows below.
    # TODO(synk): original NodeSampler semantics (and its 'connect' output) unknown.
    sampled = int(N * (2.0 / 3.0))
    perm1 = jax.random.permutation(ks[4], N)
    perm2 = jax.random.permutation(ks[5], N)
    mask1 = jnp.ones((N,), jnp.float32).at[perm1[sampled:]].set(0.0)
    mask2 = jnp.ones((N,), jnp.float32).at[perm2[sampled:]].set(0.0)
    masks = jnp.stack([mask1, mask2], axis=0)                      # (2, N)

    # Simplified TimesNet core path: embed(d_model->d_ff) -> c_out proj -> seq->pred.
    # Embed rows regrouped to (modality, gcn_feature, node) (free permutation of
    # random weights); masked node rows zeroed; columns zero-padded lane-dense.
    w1 = nrm(ks[6], (2, gcn_out, N, d_ff)) * masks[:, None, :, None]
    w1 = jnp.pad(w1, ((0, 0), (0, 0), (0, 0), (0, DFF - d_ff)))
    b1 = jnp.pad(nrm(ks[7], (1, d_ff)), ((0, 0), (0, DFF - d_ff)))
    wt = nrm(ks[8], (pred_size, window_size))                      # seq_len -> pred_len
    w2 = jnp.pad(nrm(ks[9], (d_ff, c_out)),
                 ((0, DFF - d_ff), (0, COUT - c_out)))
    b2 = nrm(ks[10], (1, c_out))
    # Reassociated time projection:  wt @ (u@W2 + b2) = (wt@u)@W2 + rowsum(wt)*b2
    tb2 = jnp.pad(jnp.sum(wt, axis=1, keepdims=True) * b2,
                  ((0, 0), (0, COUT - c_out)))

    # fc1..fc4 (Linear(N,N)+ReLU) folded into one block-diagonal matmul; rows/cols
    # ordered (head, node) to match the c_out column ordering chosen above.
    # TODO(synk): for large node_num replace block-diag by 4 small per-head dots.
    head_w = nrm(ks[11], (4, N, N))
    head_b = nrm(ks[12], (1, 4 * N))
    hw = jnp.zeros((COUT, HOUT), jnp.float32)
    for h in range(4):
        hw = hw.at[h * N:(h + 1) * N, h * N:(h + 1) * N].set(head_w[h])

    return {
        # GCN weights pre-broadcast over nodes / pre-shaped for in-kernel broadcast
        "gw1": jnp.broadcast_to(gw1[:, :, None], (in_features, gcn_out, N)).astype(jnp.float32),
        "gb1": gb1.reshape(1, gcn_out, 1),
        "gw2": jnp.broadcast_to(gw2[:, :, None], (in_features, gcn_out, N)).astype(jnp.float32),
        "gb2": gb2.reshape(1, gcn_out, 1),
        "w1r": w1.reshape(2 * gcn_out, N, DFF).astype(jnp.bfloat16),
        "b1": b1,
        "wt": wt,
        "w2": w2.astype(jnp.bfloat16),
        "tb2": tb2,
        "hw": hw.astype(jnp.bfloat16),
        "hb": jnp.pad(head_b, ((0, 0), (0, HOUT - 4 * N))),
    }


# ----------------------------------------------------------------------------
# Forward (all hot work in the single fused Pallas kernel)
# ----------------------------------------------------------------------------
@functools.partial(jax.jit, static_argnames=("window_size",))
def net_forward(params, bike_node, bike_adj, taxi_node, taxi_adj, window_size):
    # Slice the time window BEFORE the spatial stage (the GCN is per-timestep,
    # so this is equivalent to slicing gcn_output afterwards).
    bike_node = bike_node[:, -window_size:]
    bike_adj = bike_adj[:, -window_size:]
    taxi_node = taxi_node[:, -window_size:]
    taxi_adj = taxi_adj[:, -window_size:]

    B, W, N, Fin = bike_node.shape

    # Merge modalities (half the per-step DMA count), pre-transpose node features
    # to (..., Fin, N), and cast MXU operands to bf16 (this copy IS the cast).
    nodeT = jnp.stack([bike_node, taxi_node], axis=0)              # (2, B, W, N, Fin)
    nodeT = jnp.transpose(nodeT, (0, 1, 2, 4, 3)).reshape(2, B * W, Fin, N)
    nodeT = nodeT.astype(jnp.bfloat16)
    adj = jnp.stack([bike_adj, taxi_adj], axis=0).reshape(2, B * W, N, N)
    adj = adj.astype(jnp.bfloat16)

    out = fused_forward(params, nodeT, adj, batch=B, window=W, node_num=N)
    PRED = params["wt"].shape[0]

    t = out[:, :, :4 * N].reshape(B, PRED, 4, N)   # columns ordered (head, node)
    bike_start = t[:, :, 0, :]
    bike_end = t[:, :, 1, :]
    taxi_start = t[:, :, 2, :]
    taxi_end = t[:, :, 3, :]
    return bike_start, bike_end, taxi_start, taxi_end


if __name__ == "__main__":
    # Small, shape-consistent config
    batch_size = 2
    window_size = 8
    node_num = 16
    in_features = 2
    pred_size = 4

    key = jax.random.PRNGKey(0)
    kp, kd = jax.random.split(key)
    params = init_params(kp, node_num, window_size, pred_size, in_features)

    kd1, kd2, kd3, kd4 = jax.random.split(kd, 4)
    bike_node = jax.random.normal(kd1, (batch_size, window_size, node_num, in_features),
                                  dtype=jnp.float32)
    bike_adj = jax.random.uniform(kd2, (batch_size, window_size, node_num, node_num),
                                  dtype=jnp.float32)
    taxi_node = jax.random.normal(kd3, (batch_size, window_size, node_num, in_features),
                                  dtype=jnp.float32)
    taxi_adj = jax.random.uniform(kd4, (batch_size, window_size, node_num, node_num),
                                  dtype=jnp.float32)

    outs = net_forward(params, bike_node, bike_adj, taxi_node, taxi_adj,
                       window_size=window_size)
    outs = jax.block_until_ready(outs)

    expected = (batch_size, pred_size, node_num)
    assert all(o.shape == expected for o in outs), [o.shape for o in outs]
    assert all(bool(jnp.all(jnp.isfinite(o))) for o in outs)
    print("KERNEL_OK")
</pallas_src>

<mosaic_0001>
module attributes {stable_mosaic.version = 11 : i64} {
  func.func @_fused_forward_kernel(%arg0: i32, %arg1: memref<2x8x2x16xbf16, #tpu.memory_space<vmem>>, %arg2: memref<2x8x16x16xbf16, #tpu.memory_space<vmem>>, %arg3: memref<2x8x16xf32, #tpu.memory_space<vmem>>, %arg4: memref<1x8x1xf32, #tpu.memory_space<vmem>>, %arg5: memref<2x8x16xf32, #tpu.memory_space<vmem>>, %arg6: memref<1x8x1xf32, #tpu.memory_space<vmem>>, %arg7: memref<16x16x128xbf16, #tpu.memory_space<vmem>>, %arg8: memref<1x128xf32, #tpu.memory_space<vmem>>, %arg9: memref<4x8xbf16, #tpu.memory_space<vmem>>, %arg10: memref<128x128xbf16, #tpu.memory_space<vmem>>, %arg11: memref<4x128xf32, #tpu.memory_space<vmem>>, %arg12: memref<128x128xbf16, #tpu.memory_space<vmem>>, %arg13: memref<1x128xf32, #tpu.memory_space<vmem>>, %arg14: memref<1x4x128xf32, #tpu.memory_space<vmem>>) attributes {dimension_semantics = [#tpu.dimension_semantics<parallel>], iteration_bounds = array<i64: 2>, scalar_prefetch = 0 : i64, scratch_operands = 0 : i64, tpu.core_type = #tpu.core_type<tc>, window_params = [{transform_indices = @transform_0, window_bounds = array<i64: 2, 8, 2, 16>}, {transform_indices = @transform_1, window_bounds = array<i64: 2, 8, 16, 16>}, {pipeline_mode = #tpu.pipeline_mode<synchronous>, transform_indices = @transform_2, window_bounds = array<i64: 2, 8, 16>}, {pipeline_mode = #tpu.pipeline_mode<synchronous>, transform_indices = @transform_3, window_bounds = array<i64: 1, 8, 1>}, {pipeline_mode = #tpu.pipeline_mode<synchronous>, transform_indices = @transform_4, window_bounds = array<i64: 2, 8, 16>}, {pipeline_mode = #tpu.pipeline_mode<synchronous>, transform_indices = @transform_5, window_bounds = array<i64: 1, 8, 1>}, {pipeline_mode = #tpu.pipeline_mode<synchronous>, transform_indices = @transform_6, window_bounds = array<i64: 16, 16, 128>}, {pipeline_mode = #tpu.pipeline_mode<synchronous>, transform_indices = @transform_7, window_bounds = array<i64: 1, 128>}, {pipeline_mode = #tpu.pipeline_mode<synchronous>, transform_indices = @transform_8, window_bounds = array<i64: 4, 8>}, {pipeline_mode = #tpu.pipeline_mode<synchronous>, transform_indices = @transform_9, window_bounds = array<i64: 128, 128>}, {pipeline_mode = #tpu.pipeline_mode<synchronous>, transform_indices = @transform_10, window_bounds = array<i64: 4, 128>}, {pipeline_mode = #tpu.pipeline_mode<synchronous>, transform_indices = @transform_11, window_bounds = array<i64: 128, 128>}, {pipeline_mode = #tpu.pipeline_mode<synchronous>, transform_indices = @transform_12, window_bounds = array<i64: 1, 128>}, {transform_indices = @transform_13, window_bounds = array<i64: 1, 4, 128>}]} {
    %cst = arith.constant 0.000000e+00 : f32
    %0 = vector.broadcast %cst : f32 to vector<8x128xf32>
    %c0 = arith.constant 0 : index
    %c0_0 = arith.constant 0 : index
    %c0_1 = arith.constant 0 : index
    %c0_2 = arith.constant 0 : index
    %1 = vector.load %arg1[%c0, %c0_0, %c0_1, %c0_2] : memref<2x8x2x16xbf16, #tpu.memory_space<vmem>>, vector<1x8x2x16xbf16>
    %2 = vector.shape_cast %1 : vector<1x8x2x16xbf16> to vector<8x2x16xbf16>
    %c0_3 = arith.constant 0 : index
    %c0_4 = arith.constant 0 : index
    %c0_5 = arith.constant 0 : index
    %c0_6 = arith.constant 0 : index
    %3 = vector.load %arg2[%c0_3, %c0_4, %c0_5, %c0_6] : memref<2x8x16x16xbf16, #tpu.memory_space<vmem>>, vector<1x8x16x16xbf16>
    %4 = vector.shape_cast %3 : vector<1x8x16x16xbf16> to vector<8x16x16xbf16>
    "tpu.trace_start"() <{level = 10 : i32, message = "gfj,gnj->gfn"}> : () -> ()
    %cst_7 = arith.constant dense<0.000000e+00> : vector<8x2x16xf32>
    %5 = tpu.matmul %2, %4, %cst_7 {dimension_numbers = #tpu.dot_dimension_numbers<[2], [2], [1], [1], [0, 0, 0, 1, 1, 1], [0], [0]>} : vector<8x2x16xbf16>, vector<8x16x16xbf16>, vector<8x2x16xf32> -> vector<8x2x16xf32>
    "tpu.trace_stop"() : () -> ()
    %6 = vector.extract_strided_slice %5 {offsets = [0, 0, 0], sizes = [8, 1, 16], strides = [1, 1, 1]} : vector<8x2x16xf32> to vector<8x1x16xf32>
    %c0_8 = arith.constant 0 : index
    %c0_9 = arith.constant 0 : index
    %c0_10 = arith.constant 0 : index
    %7 = vector.load %arg3[%c0_8, %c0_9, %c0_10] : memref<2x8x16xf32, #tpu.memory_space<vmem>>, vector<1x8x16xf32>
    %8 = vector.shape_cast %7 : vector<1x8x16xf32> to vector<8x16xf32>
    %9 = vector.shape_cast %8 : vector<8x16xf32> to vector<1x8x16xf32>
    %10 = vector.broadcast %6 : vector<8x1x16xf32> to vector<8x8x16xf32>
    %11 = vector.broadcast %9 : vector<1x8x16xf32> to vector<8x8x16xf32>
    %12 = arith.mulf %10, %11 : vector<8x8x16xf32>
    %13 = vector.extract_strided_slice %5 {offsets = [0, 1, 0], sizes = [8, 1, 16], strides = [1, 1, 1]} : vector<8x2x16xf32> to vector<8x1x16xf32>
    %c1 = arith.constant 1 : index
    %c0_11 = arith.constant 0 : index
    %c0_12 = arith.constant 0 : index
    %14 = vector.load %arg3[%c1, %c0_11, %c0_12] : memref<2x8x16xf32, #tpu.memory_space<vmem>>, vector<1x8x16xf32>
    %15 = vector.shape_cast %14 : vector<1x8x16xf32> to vector<8x16xf32>
    %16 = vector.shape_cast %15 : vector<8x16xf32> to vector<1x8x16xf32>
    %17 = vector.broadcast %13 : vector<8x1x16xf32> to vector<8x8x16xf32>
    %18 = vector.broadcast %16 : vector<1x8x16xf32> to vector<8x8x16xf32>
    %19 = arith.mulf %17, %18 : vector<8x8x16xf32>
    %20 = arith.addf %12, %19 : vector<8x8x16xf32>
    %c0_13 = arith.constant 0 : index
    %c0_14 = arith.constant 0 : index
    %c0_15 = arith.constant 0 : index
    %21 = vector.load %arg4[%c0_13, %c0_14, %c0_15] : memref<1x8x1xf32, #tpu.memory_space<vmem>>, vector<1x8x1xf32>
    %22 = vector.broadcast %21 : vector<1x8x1xf32> to vector<8x8x16xf32>
    %23 = arith.addf %20, %22 : vector<8x8x16xf32>
    %cst_16 = arith.constant 0.000000e+00 : f32
    %24 = vector.broadcast %cst_16 : f32 to vector<8x8x16xf32>
    %25 = arith.maximumf %23, %24 : vector<8x8x16xf32>
    %26 = arith.truncf %25 : vector<8x8x16xf32> to vector<8x8x16xbf16>
    %27 = vector.extract_strided_slice %26 {offsets = [0, 0, 0], sizes = [8, 1, 16], strides = [1, 1, 1]} : vector<8x8x16xbf16> to vector<8x1x16xbf16>
    %28 = vector.shape_cast %27 : vector<8x1x16xbf16> to vector<8x16xbf16>
    %c0_17 = arith.constant 0 : index
    %c0_18 = arith.constant 0 : index
    %c0_19 = arith.constant 0 : index
    %29 = vector.load %arg7[%c0_17, %c0_18, %c0_19] : memref<16x16x128xbf16, #tpu.memory_space<vmem>>, vector<1x16x128xbf16>
    %30 = vector.shape_cast %29 : vector<1x16x128xbf16> to vector<16x128xbf16>
    %cst_20 = arith.constant dense<0.000000e+00> : vector<8x128xf32>
    %31 = tpu.matmul %28, %30, %cst_20 {dimension_numbers = #tpu.dot_dimension_numbers<[1], [0], [0], [1], [0, 0, 1, 1], [], []>} : vector<8x16xbf16>, vector<16x128xbf16>, vector<8x128xf32> -> vector<8x128xf32>
    %32 = arith.addf %0, %31 : vector<8x128xf32>
    %33 = vector.extract_strided_slice %26 {offsets = [0, 1, 0], sizes = [8, 1, 16], strides = [1, 1, 1]} : vector<8x8x16xbf16> to vector<8x1x16xbf16>
    %34 = vector.shape_cast %33 : vector<8x1x16xbf16> to vector<8x16xbf16>
    %c1_21 = arith.constant 1 : index
    %c0_22 = arith.constant 0 : index
    %c0_23 = arith.constant 0 : index
    %35 = vector.load %arg7[%c1_21, %c0_22, %c0_23] : memref<16x16x128xbf16, #tpu.memory_space<vmem>>, vector<1x16x128xbf16>
    %36 = vector.shape_cast %35 : vector<1x16x128xbf16> to vector<16x128xbf16>
    %cst_24 = arith.constant dense<0.000000e+00> : vector<8x128xf32>
    %37 = tpu.matmul %34, %36, %cst_24 {dimension_numbers = #tpu.dot_dimension_numbers<[1], [0], [0], [1], [0, 0, 1, 1], [], []>} : vector<8x16xbf16>, vector<16x128xbf16>, vector<8x128xf32> -> vector<8x128xf32>
    %38 = arith.addf %32, %37 : vector<8x128xf32>
    %39 = vector.extract_strided_slice %26 {offsets = [0, 2, 0], sizes = [8, 1, 16], strides = [1, 1, 1]} : vector<8x8x16xbf16> to vector<8x1x16xbf16>
    %40 = vector.shape_cast %39 : vector<8x1x16xbf16> to vector<8x16xbf16>
    %c2 = arith.constant 2 : index
    %c0_25 = arith.constant 0 : index
    %c0_26 = arith.constant 0 : index
    %41 = vector.load %arg7[%c2, %c0_25, %c0_26] : memref<16x16x128xbf16, #tpu.memory_space<vmem>>, vector<1x16x128xbf16>
    %42 = vector.shape_cast %41 : vector<1x16x128xbf16> to vector<16x128xbf16>
    %cst_27 = arith.constant dense<0.000000e+00> : vector<8x128xf32>
    %43 = tpu.matmul %40, %42, %cst_27 {dimension_numbers = #tpu.dot_dimension_numbers<[1], [0], [0], [1], [0, 0, 1, 1], [], []>} : vector<8x16xbf16>, vector<16x128xbf16>, vector<8x128xf32> -> vector<8x128xf32>
    %44 = arith.addf %38, %43 : vector<8x128xf32>
    %45 = vector.extract_strided_slice %26 {offsets = [0, 3, 0], sizes = [8, 1, 16], strides = [1, 1, 1]} : vector<8x8x16xbf16> to vector<8x1x16xbf16>
    %46 = vector.shape_cast %45 : vector<8x1x16xbf16> to vector<8x16xbf16>
    %c3 = arith.constant 3 : index
    %c0_28 = arith.constant 0 : index
    %c0_29 = arith.constant 0 : index
    %47 = vector.load %arg7[%c3, %c0_28, %c0_29] : memref<16x16x128xbf16, #tpu.memory_space<vmem>>, vector<1x16x128xbf16>
    %48 = vector.shape_cast %47 : vector<1x16x128xbf16> to vector<16x128xbf16>
    %cst_30 = arith.constant dense<0.000000e+00> : vector<8x128xf32>
    %49 = tpu.matmul %46, %48, %cst_30 {dimension_numbers = #tpu.dot_dimension_numbers<[1], [0], [0], [1], [0, 0, 1, 1], [], []>} : vector<8x16xbf16>, vector<16x128xbf16>, vector<8x128xf32> -> vector<8x128xf32>
    %50 = arith.addf %44, %49 : vector<8x128xf32>
    %51 = vector.extract_strided_slice %26 {offsets = [0, 4, 0], sizes = [8, 1, 16], strides = [1, 1, 1]} : vector<8x8x16xbf16> to vector<8x1x16xbf16>
    %52 = vector.shape_cast %51 : vector<8x1x16xbf16> to vector<8x16xbf16>
    %c4 = arith.constant 4 : index
    %c0_31 = arith.constant 0 : index
    %c0_32 = arith.constant 0 : index
    %53 = vector.load %arg7[%c4, %c0_31, %c0_32] : memref<16x16x128xbf16, #tpu.memory_space<vmem>>, vector<1x16x128xbf16>
    %54 = vector.shape_cast %53 : vector<1x16x128xbf16> to vector<16x128xbf16>
    %cst_33 = arith.constant dense<0.000000e+00> : vector<8x128xf32>
    %55 = tpu.matmul %52, %54, %cst_33 {dimension_numbers = #tpu.dot_dimension_numbers<[1], [0], [0], [1], [0, 0, 1, 1], [], []>} : vector<8x16xbf16>, vector<16x128xbf16>, vector<8x128xf32> -> vector<8x128xf32>
    %56 = arith.addf %50, %55 : vector<8x128xf32>
    %57 = vector.extract_strided_slice %26 {offsets = [0, 5, 0], sizes = [8, 1, 16], strides = [1, 1, 1]} : vector<8x8x16xbf16> to vector<8x1x16xbf16>
    %58 = vector.shape_cast %57 : vector<8x1x16xbf16> to vector<8x16xbf16>
    %c5 = arith.constant 5 : index
    %c0_34 = arith.constant 0 : index
    %c0_35 = arith.constant 0 : index
    %59 = vector.load %arg7[%c5, %c0_34, %c0_35] : memref<16x16x128xbf16, #tpu.memory_space<vmem>>, vector<1x16x128xbf16>
    %60 = vector.shape_cast %59 : vector<1x16x128xbf16> to vector<16x128xbf16>
    %cst_36 = arith.constant dense<0.000000e+00> : vector<8x128xf32>
    %61 = tpu.matmul %58, %60, %cst_36 {dimension_numbers = #tpu.dot_dimension_numbers<[1], [0], [0], [1], [0, 0, 1, 1], [], []>} : vector<8x16xbf16>, vector<16x128xbf16>, vector<8x128xf32> -> vector<8x128xf32>
    %62 = arith.addf %56, %61 : vector<8x128xf32>
    %63 = vector.extract_strided_slice %26 {offsets = [0, 6, 0], sizes = [8, 1, 16], strides = [1, 1, 1]} : vector<8x8x16xbf16> to vector<8x1x16xbf16>
    %64 = vector.shape_cast %63 : vector<8x1x16xbf16> to vector<8x16xbf16>
    %c6 = arith.constant 6 : index
    %c0_37 = arith.constant 0 : index
    %c0_38 = arith.constant 0 : index
    %65 = vector.load %arg7[%c6, %c0_37, %c0_38] : memref<16x16x128xbf16, #tpu.memory_space<vmem>>, vector<1x16x128xbf16>
    %66 = vector.shape_cast %65 : vector<1x16x128xbf16> to vector<16x128xbf16>
    %cst_39 = arith.constant dense<0.000000e+00> : vector<8x128xf32>
    %67 = tpu.matmul %64, %66, %cst_39 {dimension_numbers = #tpu.dot_dimension_numbers<[1], [0], [0], [1], [0, 0, 1, 1], [], []>} : vector<8x16xbf16>, vector<16x128xbf16>, vector<8x128xf32> -> vector<8x128xf32>
    %68 = arith.addf %62, %67 : vector<8x128xf32>
    %69 = vector.extract_strided_slice %26 {offsets = [0, 7, 0], sizes = [8, 1, 16], strides = [1, 1, 1]} : vector<8x8x16xbf16> to vector<8x1x16xbf16>
    %70 = vector.shape_cast %69 : vector<8x1x16xbf16> to vector<8x16xbf16>
    %c7 = arith.constant 7 : index
    %c0_40 = arith.constant 0 : index
    %c0_41 = arith.constant 0 : index
    %71 = vector.load %arg7[%c7, %c0_40, %c0_41] : memref<16x16x128xbf16, #tpu.memory_space<vmem>>, vector<1x16x128xbf16>
    %72 = vector.shape_cast %71 : vector<1x16x128xbf16> to vector<16x128xbf16>
    %cst_42 = arith.constant dense<0.000000e+00> : vector<8x128xf32>
    %73 = tpu.matmul %70, %72, %cst_42 {dimension_numbers = #tpu.dot_dimension_numbers<[1], [0], [0], [1], [0, 0, 1, 1], [], []>} : vector<8x16xbf16>, vector<16x128xbf16>, vector<8x128xf32> -> vector<8x128xf32>
    %74 = arith.addf %68, %73 : vector<8x128xf32>
    %c1_43 = arith.constant 1 : index
    %c0_44 = arith.constant 0 : index
    %c0_45 = arith.constant 0 : index
    %c0_46 = arith.constant 0 : index
    %75 = vector.load %arg1[%c1_43, %c0_44, %c0_45, %c0_46] : memref<2x8x2x16xbf16, #tpu.memory_space<vmem>>, vector<1x8x2x16xbf16>
    %76 = vector.shape_cast %75 : vector<1x8x2x16xbf16> to vector<8x2x16xbf16>
    %c1_47 = arith.constant 1 : index
    %c0_48 = arith.constant 0 : index
    %c0_49 = arith.constant 0 : index
    %c0_50 = arith.constant 0 : index
    %77 = vector.load %arg2[%c1_47, %c0_48, %c0_49, %c0_50] : memref<2x8x16x16xbf16, #tpu.memory_space<vmem>>, vector<1x8x16x16xbf16>
    %78 = vector.shape_cast %77 : vector<1x8x16x16xbf16> to vector<8x16x16xbf16>
    "tpu.trace_start"() <{level = 10 : i32, message = "gfj,gnj->gfn"}> : () -> ()
    %cst_51 = arith.constant dense<0.000000e+00> : vector<8x2x16xf32>
    %79 = tpu.matmul %76, %78, %cst_51 {dimension_numbers = #tpu.dot_dimension_numbers<[2], [2], [1], [1], [0, 0, 0, 1, 1, 1], [0], [0]>} : vector<8x2x16xbf16>, vector<8x16x16xbf16>, vector<8x2x16xf32> -> vector<8x2x16xf32>
    "tpu.trace_stop"() : () -> ()
    %80 = vector.extract_strided_slice %79 {offsets = [0, 0, 0], sizes = [8, 1, 16], strides = [1, 1, 1]} : vector<8x2x16xf32> to vector<8x1x16xf32>
    %c0_52 = arith.constant 0 : index
    %c0_53 = arith.constant 0 : index
    %c0_54 = arith.constant 0 : index
    %81 = vector.load %arg5[%c0_52, %c0_53, %c0_54] : memref<2x8x16xf32, #tpu.memory_space<vmem>>, vector<1x8x16xf32>
    %82 = vector.shape_cast %81 : vector<1x8x16xf32> to vector<8x16xf32>
    %83 = vector.shape_cast %82 : vector<8x16xf32> to vector<1x8x16xf32>
    %84 = vector.broadcast %80 : vector<8x1x16xf32> to vector<8x8x16xf32>
    %85 = vector.broadcast %83 : vector<1x8x16xf32> to vector<8x8x16xf32>
    %86 = arith.mulf %84, %85 : vector<8x8x16xf32>
    %87 = vector.extract_strided_slice %79 {offsets = [0, 1, 0], sizes = [8, 1, 16], strides = [1, 1, 1]} : vector<8x2x16xf32> to vector<8x1x16xf32>
    %c1_55 = arith.constant 1 : index
    %c0_56 = arith.constant 0 : index
    %c0_57 = arith.constant 0 : index
    %88 = vector.load %arg5[%c1_55, %c0_56, %c0_57] : memref<2x8x16xf32, #tpu.memory_space<vmem>>, vector<1x8x16xf32>
    %89 = vector.shape_cast %88 : vector<1x8x16xf32> to vector<8x16xf32>
    %90 = vector.shape_cast %89 : vector<8x16xf32> to vector<1x8x16xf32>
    %91 = vector.broadcast %87 : vector<8x1x16xf32> to vector<8x8x16xf32>
    %92 = vector.broadcast %90 : vector<1x8x16xf32> to vector<8x8x16xf32>
    %93 = arith.mulf %91, %92 : vector<8x8x16xf32>
    %94 = arith.addf %86, %93 : vector<8x8x16xf32>
    %c0_58 = arith.constant 0 : index
    %c0_59 = arith.constant 0 : index
    %c0_60 = arith.constant 0 : index
    %95 = vector.load %arg6[%c0_58, %c0_59, %c0_60] : memref<1x8x1xf32, #tpu.memory_space<vmem>>, vector<1x8x1xf32>
    %96 = vector.broadcast %95 : vector<1x8x1xf32> to vector<8x8x16xf32>
    %97 = arith.addf %94, %96 : vector<8x8x16xf32>
    %cst_61 = arith.constant 0.000000e+00 : f32
    %98 = vector.broadcast %cst_61 : f32 to vector<8x8x16xf32>
    %99 = arith.maximumf %97, %98 : vector<8x8x16xf32>
    %100 = arith.truncf %99 : vector<8x8x16xf32> to vector<8x8x16xbf16>
    %101 = vector.extract_strided_slice %100 {offsets = [0, 0, 0], sizes = [8, 1, 16], strides = [1, 1, 1]} : vector<8x8x16xbf16> to vector<8x1x16xbf16>
    %102 = vector.shape_cast %101 : vector<8x1x16xbf16> to vector<8x16xbf16>
    %c8 = arith.constant 8 : index
    %c0_62 = arith.constant 0 : index
    %c0_63 = arith.constant 0 : index
    %103 = vector.load %arg7[%c8, %c0_62, %c0_63] : memref<16x16x128xbf16, #tpu.memory_space<vmem>>, vector<1x16x128xbf16>
    %104 = vector.shape_cast %103 : vector<1x16x128xbf16> to vector<16x128xbf16>
    %cst_64 = arith.constant dense<0.000000e+00> : vector<8x128xf32>
    %105 = tpu.matmul %102, %104, %cst_64 {dimension_numbers = #tpu.dot_dimension_numbers<[1], [0], [0], [1], [0, 0, 1, 1], [], []>} : vector<8x16xbf16>, vector<16x128xbf16>, vector<8x128xf32> -> vector<8x128xf32>
    %106 = arith.addf %74, %105 : vector<8x128xf32>
    %107 = vector.extract_strided_slice %100 {offsets = [0, 1, 0], sizes = [8, 1, 16], strides = [1, 1, 1]} : vector<8x8x16xbf16> to vector<8x1x16xbf16>
    %108 = vector.shape_cast %107 : vector<8x1x16xbf16> to vector<8x16xbf16>
    %c9 = arith.constant 9 : index
    %c0_65 = arith.constant 0 : index
    %c0_66 = arith.constant 0 : index
    %109 = vector.load %arg7[%c9, %c0_65, %c0_66] : memref<16x16x128xbf16, #tpu.memory_space<vmem>>, vector<1x16x128xbf16>
    %110 = vector.shape_cast %109 : vector<1x16x128xbf16> to vector<16x128xbf16>
    %cst_67 = arith.constant dense<0.000000e+00> : vector<8x128xf32>
    %111 = tpu.matmul %108, %110, %cst_67 {dimension_numbers = #tpu.dot_dimension_numbers<[1], [0], [0], [1], [0, 0, 1, 1], [], []>} : vector<8x16xbf16>, vector<16x128xbf16>, vector<8x128xf32> -> vector<8x128xf32>
    %112 = arith.addf %106, %111 : vector<8x128xf32>
    %113 = vector.extract_strided_slice %100 {offsets = [0, 2, 0], sizes = [8, 1, 16], strides = [1, 1, 1]} : vector<8x8x16xbf16> to vector<8x1x16xbf16>
    %114 = vector.shape_cast %113 : vector<8x1x16xbf16> to vector<8x16xbf16>
    %c10 = arith.constant 10 : index
    %c0_68 = arith.constant 0 : index
    %c0_69 = arith.constant 0 : index
    %115 = vector.load %arg7[%c10, %c0_68, %c0_69] : memref<16x16x128xbf16, #tpu.memory_space<vmem>>, vector<1x16x128xbf16>
    %116 = vector.shape_cast %115 : vector<1x16x128xbf16> to vector<16x128xbf16>
    %cst_70 = arith.constant dense<0.000000e+00> : vector<8x128xf32>
    %117 = tpu.matmul %114, %116, %cst_70 {dimension_numbers = #tpu.dot_dimension_numbers<[1], [0], [0], [1], [0, 0, 1, 1], [], []>} : vector<8x16xbf16>, vector<16x128xbf16>, vector<8x128xf32> -> vector<8x128xf32>
    %118 = arith.addf %112, %117 : vector<8x128xf32>
    %119 = vector.extract_strided_slice %100 {offsets = [0, 3, 0], sizes = [8, 1, 16], strides = [1, 1, 1]} : vector<8x8x16xbf16> to vector<8x1x16xbf16>
    %120 = vector.shape_cast %119 : vector<8x1x16xbf16> to vector<8x16xbf16>
    %c11 = arith.constant 11 : index
    %c0_71 = arith.constant 0 : index
    %c0_72 = arith.constant 0 : index
    %121 = vector.load %arg7[%c11, %c0_71, %c0_72] : memref<16x16x128xbf16, #tpu.memory_space<vmem>>, vector<1x16x128xbf16>
    %122 = vector.shape_cast %121 : vector<1x16x128xbf16> to vector<16x128xbf16>
    %cst_73 = arith.constant dense<0.000000e+00> : vector<8x128xf32>
    %123 = tpu.matmul %120, %122, %cst_73 {dimension_numbers = #tpu.dot_dimension_numbers<[1], [0], [0], [1], [0, 0, 1, 1], [], []>} : vector<8x16xbf16>, vector<16x128xbf16>, vector<8x128xf32> -> vector<8x128xf32>
    %124 = arith.addf %118, %123 : vector<8x128xf32>
    %125 = vector.extract_strided_slice %100 {offsets = [0, 4, 0], sizes = [8, 1, 16], strides = [1, 1, 1]} : vector<8x8x16xbf16> to vector<8x1x16xbf16>
    %126 = vector.shape_cast %125 : vector<8x1x16xbf16> to vector<8x16xbf16>
    %c12 = arith.constant 12 : index
    %c0_74 = arith.constant 0 : index
    %c0_75 = arith.constant 0 : index
    %127 = vector.load %arg7[%c12, %c0_74, %c0_75] : memref<16x16x128xbf16, #tpu.memory_space<vmem>>, vector<1x16x128xbf16>
    %128 = vector.shape_cast %127 : vector<1x16x128xbf16> to vector<16x128xbf16>
    %cst_76 = arith.constant dense<0.000000e+00> : vector<8x128xf32>
    %129 = tpu.matmul %126, %128, %cst_76 {dimension_numbers = #tpu.dot_dimension_numbers<[1], [0], [0], [1], [0, 0, 1, 1], [], []>} : vector<8x16xbf16>, vector<16x128xbf16>, vector<8x128xf32> -> vector<8x128xf32>
    %130 = arith.addf %124, %129 : vector<8x128xf32>
    %131 = vector.extract_strided_slice %100 {offsets = [0, 5, 0], sizes = [8, 1, 16], strides = [1, 1, 1]} : vector<8x8x16xbf16> to vector<8x1x16xbf16>
    %132 = vector.shape_cast %131 : vector<8x1x16xbf16> to vector<8x16xbf16>
    %c13 = arith.constant 13 : index
    %c0_77 = arith.constant 0 : index
    %c0_78 = arith.constant 0 : index
    %133 = vector.load %arg7[%c13, %c0_77, %c0_78] : memref<16x16x128xbf16, #tpu.memory_space<vmem>>, vector<1x16x128xbf16>
    %134 = vector.shape_cast %133 : vector<1x16x128xbf16> to vector<16x128xbf16>
    %cst_79 = arith.constant dense<0.000000e+00> : vector<8x128xf32>
    %135 = tpu.matmul %132, %134, %cst_79 {dimension_numbers = #tpu.dot_dimension_numbers<[1], [0], [0], [1], [0, 0, 1, 1], [], []>} : vector<8x16xbf16>, vector<16x128xbf16>, vector<8x128xf32> -> vector<8x128xf32>
    %136 = arith.addf %130, %135 : vector<8x128xf32>
    %137 = vector.extract_strided_slice %100 {offsets = [0, 6, 0], sizes = [8, 1, 16], strides = [1, 1, 1]} : vector<8x8x16xbf16> to vector<8x1x16xbf16>
    %138 = vector.shape_cast %137 : vector<8x1x16xbf16> to vector<8x16xbf16>
    %c14 = arith.constant 14 : index
    %c0_80 = arith.constant 0 : index
    %c0_81 = arith.constant 0 : index
    %139 = vector.load %arg7[%c14, %c0_80, %c0_81] : memref<16x16x128xbf16, #tpu.memory_space<vmem>>, vector<1x16x128xbf16>
    %140 = vector.shape_cast %139 : vector<1x16x128xbf16> to vector<16x128xbf16>
    %cst_82 = arith.constant dense<0.000000e+00> : vector<8x128xf32>
    %141 = tpu.matmul %138, %140, %cst_82 {dimension_numbers = #tpu.dot_dimension_numbers<[1], [0], [0], [1], [0, 0, 1, 1], [], []>} : vector<8x16xbf16>, vector<16x128xbf16>, vector<8x128xf32> -> vector<8x128xf32>
    %142 = arith.addf %136, %141 : vector<8x128xf32>
    %143 = vector.extract_strided_slice %100 {offsets = [0, 7, 0], sizes = [8, 1, 16], strides = [1, 1, 1]} : vector<8x8x16xbf16> to vector<8x1x16xbf16>
    %144 = vector.shape_cast %143 : vector<8x1x16xbf16> to vector<8x16xbf16>
    %c15 = arith.constant 15 : index
    %c0_83 = arith.constant 0 : index
    %c0_84 = arith.constant 0 : index
    %145 = vector.load %arg7[%c15, %c0_83, %c0_84] : memref<16x16x128xbf16, #tpu.memory_space<vmem>>, vector<1x16x128xbf16>
    %146 = vector.shape_cast %145 : vector<1x16x128xbf16> to vector<16x128xbf16>
    %cst_85 = arith.constant dense<0.000000e+00> : vector<8x128xf32>
    %147 = tpu.matmul %144, %146, %cst_85 {dimension_numbers = #tpu.dot_dimension_numbers<[1], [0], [0], [1], [0, 0, 1, 1], [], []>} : vector<8x16xbf16>, vector<16x128xbf16>, vector<8x128xf32> -> vector<8x128xf32>
    %148 = arith.addf %142, %147 : vector<8x128xf32>
    %c0_86 = arith.constant 0 : index
    %c0_87 = arith.constant 0 : index
    %149 = vector.load %arg8[%c0_86, %c0_87] : memref<1x128xf32, #tpu.memory_space<vmem>>, vector<1x128xf32>
    %150 = vector.broadcast %149 : vector<1x128xf32> to vector<8x128xf32>
    %151 = arith.addf %148, %150 : vector<8x128xf32>
    %cst_88 = arith.constant 0.000000e+00 : f32
    %152 = vector.broadcast %cst_88 : f32 to vector<8x128xf32>
    %153 = arith.maximumf %151, %152 : vector<8x128xf32>
    %c0_89 = arith.constant 0 : index
    %c0_90 = arith.constant 0 : index
    %154 = vector.load %arg9[%c0_89, %c0_90] : memref<4x8xbf16, #tpu.memory_space<vmem>>, vector<4x8xbf16>
    %155 = arith.truncf %153 : vector<8x128xf32> to vector<8x128xbf16>
    %cst_91 = arith.constant dense<0.000000e+00> : vector<4x128xf32>
    %156 = tpu.matmul %154, %155, %cst_91 {dimension_numbers = #tpu.dot_dimension_numbers<[1], [0], [0], [1], [0, 0, 1, 1], [], []>} : vector<4x8xbf16>, vector<8x128xbf16>, vector<4x128xf32> -> vector<4x128xf32>
    %157 = arith.truncf %156 : vector<4x128xf32> to vector<4x128xbf16>
    %c0_92 = arith.constant 0 : index
    %c0_93 = arith.constant 0 : index
    %158 = vector.load %arg10[%c0_92, %c0_93] : memref<128x128xbf16, #tpu.memory_space<vmem>>, vector<128x128xbf16>
    %cst_94 = arith.constant dense<0.000000e+00> : vector<4x128xf32>
    %159 = tpu.matmul %157, %158, %cst_94 {dimension_numbers = #tpu.dot_dimension_numbers<[1], [0], [0], [1], [0, 0, 1, 1], [], []>} : vector<4x128xbf16>, vector<128x128xbf16>, vector<4x128xf32> -> vector<4x128xf32>
    %c0_95 = arith.constant 0 : index
    %c0_96 = arith.constant 0 : index
    %160 = vector.load %arg11[%c0_95, %c0_96] : memref<4x128xf32, #tpu.memory_space<vmem>>, vector<4x128xf32>
    %161 = arith.addf %159, %160 : vector<4x128xf32>
    %162 = arith.truncf %161 : vector<4x128xf32> to vector<4x128xbf16>
    %c0_97 = arith.constant 0 : index
    %c0_98 = arith.constant 0 : index
    %163 = vector.load %arg12[%c0_97, %c0_98] : memref<128x128xbf16, #tpu.memory_space<vmem>>, vector<128x128xbf16>
    %cst_99 = arith.constant dense<0.000000e+00> : vector<4x128xf32>
    %164 = tpu.matmul %162, %163, %cst_99 {dimension_numbers = #tpu.dot_dimension_numbers<[1], [0], [0], [1], [0, 0, 1, 1], [], []>} : vector<4x128xbf16>, vector<128x128xbf16>, vector<4x128xf32> -> vector<4x128xf32>
    %c0_100 = arith.constant 0 : index
    %c0_101 = arith.constant 0 : index
    %165 = vector.load %arg13[%c0_100, %c0_101] : memref<1x128xf32, #tpu.memory_space<vmem>>, vector<1x128xf32>
    %166 = vector.broadcast %165 : vector<1x128xf32> to vector<4x128xf32>
    %167 = arith.addf %164, %166 : vector<4x128xf32>
    %cst_102 = arith.constant 0.000000e+00 : f32
    %168 = vector.broadcast %cst_102 : f32 to vector<4x128xf32>
    %169 = arith.maximumf %167, %168 : vector<4x128xf32>
    %c0_103 = arith.constant 0 : index
    %c0_104 = arith.constant 0 : index
    %c0_105 = arith.constant 0 : index
    %170 = vector.load %arg14[%c0_103, %c0_104, %c0_105] : memref<1x4x128xf32, #tpu.memory_space<vmem>>, vector<1x4x128xf32>
    %171 = vector.shape_cast %170 : vector<1x4x128xf32> to vector<4x128xf32>
    %172 = vector.shape_cast %169 : vector<4x128xf32> to vector<1x4x128xf32>
    tpu.vector_store %arg14[%c0_103, %c0_104, %c0_105], %172 {strides = array<i32>} : memref<1x4x128xf32, #tpu.memory_space<vmem>>, vector<1x4x128xf32>,
    return
  }
  func.func @transform_0(%arg0: i32) -> (i32, i32, i32, i32) {
    %c0_i32 = arith.constant 0 : i32
    %c0_i32_0 = arith.constant 0 : i32
    %c0_i32_1 = arith.constant 0 : i32
    %c0_i32_2 = arith.constant 0 : i32
    return %c0_i32, %arg0, %c0_i32_0, %c0_i32_1 : i32, i32, i32, i32
  }
  func.func @transform_1(%arg0: i32) -> (i32, i32, i32, i32) {
    %c0_i32 = arith.constant 0 : i32
    %c0_i32_0 = arith.constant 0 : i32
    %c0_i32_1 = arith.constant 0 : i32
    %c0_i32_2 = arith.constant 0 : i32
    return %c0_i32, %arg0, %c0_i32_0, %c0_i32_1 : i32, i32, i32, i32
  }
  func.func @transform_2(%arg0: i32) -> (i32, i32, i32) {
    %c0_i32 = arith.constant 0 : i32
    %c0_i32_0 = arith.constant 0 : i32
    %c0_i32_1 = arith.constant 0 : i32
    %c0_i32_2 = arith.constant 0 : i32
    return %c0_i32, %c0_i32_0, %c0_i32_1 : i32, i32, i32
  }
  func.func @transform_3(%arg0: i32) -> (i32, i32, i32) {
    %c0_i32 = arith.constant 0 : i32
    %c0_i32_0 = arith.constant 0 : i32
    %c0_i32_1 = arith.constant 0 : i32
    %c0_i32_2 = arith.constant 0 : i32
    return %c0_i32, %c0_i32_0, %c0_i32_1 : i32, i32, i32
  }
  func.func @transform_4(%arg0: i32) -> (i32, i32, i32) {
    %c0_i32 = arith.constant 0 : i32
    %c0_i32_0 = arith.constant 0 : i32
    %c0_i32_1 = arith.constant 0 : i32
    %c0_i32_2 = arith.constant 0 : i32
    return %c0_i32, %c0_i32_0, %c0_i32_1 : i32, i32, i32
  }
  func.func @transform_5(%arg0: i32) -> (i32, i32, i32) {
    %c0_i32 = arith.constant 0 : i32
    %c0_i32_0 = arith.constant 0 : i32
    %c0_i32_1 = arith.constant 0 : i32
    %c0_i32_2 = arith.constant 0 : i32
    return %c0_i32, %c0_i32_0, %c0_i32_1 : i32, i32, i32
  }
  func.func @transform_6(%arg0: i32) -> (i32, i32, i32) {
    %c0_i32 = arith.constant 0 : i32
    %c0_i32_0 = arith.constant 0 : i32
    %c0_i32_1 = arith.constant 0 : i32
    %c0_i32_2 = arith.constant 0 : i32
    return %c0_i32, %c0_i32_0, %c0_i32_1 : i32, i32, i32
  }
  func.func @transform_7(%arg0: i32) -> (i32, i32) {
    %c0_i32 = arith.constant 0 : i32
    %c0_i32_0 = arith.constant 0 : i32
    %c0_i32_1 = arith.constant 0 : i32
    return %c0_i32, %c0_i32_0 : i32, i32
  }
  func.func @transform_8(%arg0: i32) -> (i32, i32) {
    %c0_i32 = arith.constant 0 : i32
    %c0_i32_0 = arith.constant 0 : i32
    %c0_i32_1 = arith.constant 0 : i32
    return %c0_i32, %c0_i32_0 : i32, i32
  }
  func.func @transform_9(%arg0: i32) -> (i32, i32) {
    %c0_i32 = arith.constant 0 : i32
    %c0_i32_0 = arith.constant 0 : i32
    %c0_i32_1 = arith.constant 0 : i32
    return %c0_i32, %c0_i32_0 : i32, i32
  }
  func.func @transform_10(%arg0: i32) -> (i32, i32) {
    %c0_i32 = arith.constant 0 : i32
    %c0_i32_0 = arith.constant 0 : i32
    %c0_i32_1 = arith.constant 0 : i32
    return %c0_i32, %c0_i32_0 : i32, i32
  }
  func.func @transform_11(%arg0: i32) -> (i32, i32) {
    %c0_i32 = arith.constant 0 : i32
    %c0_i32_0 = arith.constant 0 : i32
    %c0_i32_1 = arith.constant 0 : i32
    return %c0_i32, %c0_i32_0 : i32, i32
  }
  func.func @transform_12(%arg0: i32) -> (i32, i32) {
    %c0_i32 = arith.constant 0 : i32
    %c0_i32_0 = arith.constant 0 : i32
    %c0_i32_1 = arith.constant 0 : i32
    return %c0_i32, %c0_i32_0 : i32, i32
  }
  func.func @transform_13(%arg0: i32) -> (i32, i32, i32) {
    %c0_i32 = arith.constant 0 : i32
    %c0_i32_0 = arith.constant 0 : i32
    %c0_i32_1 = arith.constant 0 : i32
    return %arg0, %c0_i32, %c0_i32_0 : i32, i32, i32
  }
}

</mosaic_0001>

<llo_original>
// kernel: net_forward.1
$region0: #{net_forward.1}
  #allocation0 [shape = 'u32[]', space=smem, size = 0x4, offset = 0x4, fixed_abs, tag = 'smem constant byte address 0x4 - core index']
  #allocation1 [shape = 'u32[144,128]{1,0:T(1,128)}', space=vmem, size = 0x12000, scoped, tag = 'internal scratch']
  %s0 = inlined_call_operand.vmem [shape: bf16[2,16,2,16], index: 0, kind: input, shape index: {}]
  %s1 = inlined_call_operand.vmem [shape: bf16[2,16,16,16], index: 1, kind: input, shape index: {}]
  %s2 = inlined_call_operand.vmem [shape: f32[2,8,16], index: 2, kind: input, shape index: {}]
  %s3 = inlined_call_operand.vmem [shape: f32[1,8,1], index: 3, kind: input, shape index: {}]
  %s4 = inlined_call_operand.vmem [shape: f32[2,8,16], index: 4, kind: input, shape index: {}]
  %s5 = inlined_call_operand.vmem [shape: f32[1,8,1], index: 5, kind: input, shape index: {}]
  %s6 = inlined_call_operand.vmem [shape: bf16[16,16,128], index: 6, kind: input, shape index: {}]
  %s7 = inlined_call_operand.vmem [shape: f32[1,128], index: 7, kind: input, shape index: {}]
  %s8 = inlined_call_operand.vmem [shape: bf16[4,8], index: 8, kind: input, shape index: {}]
  %s9 = inlined_call_operand.vmem [shape: bf16[128,128], index: 9, kind: input, shape index: {}]
  %s10 = inlined_call_operand.vmem [shape: f32[4,128], index: 10, kind: input, shape index: {}]
  %s11 = inlined_call_operand.vmem [shape: bf16[128,128], index: 11, kind: input, shape index: {}]
  %s12 = inlined_call_operand.vmem [shape: f32[1,128], index: 12, kind: input, shape index: {}]
  %s13 = inlined_call_operand.vmem [shape: f32[2,4,128], index: 13, kind: output, shape index: {}]
  %s14 = sld [smem:[#allocation0]]
  $region164: #{net_forward.1} parent=0
    _
  %s16 = ssub.s32 1, %s14
  %s17 = scalar_select 0, %s16, %s14
  $region1: #{net_forward.1} parent=0
    #allocation2 [shape = 'u8[16384]{0}', space=vmem, size = 0x4000, scoped, tag = 'input window, operand 0']
    #allocation3 [shape = 'u8[131072]{0}', space=vmem, size = 0x20000, scoped, tag = 'input window, operand 1']
    loop: start=0, step=1, limit=4
    $region2: #{net_forward.1} parent=1 // loop_pre_header
      _
    $region3: #{net_forward.1} parent=1 // loop_header
      %s19 = sphi 0, %s23
      %p20 = scmp.ge.s32.totalorder %s19, 4
      %s29 = sphi 0, %s31
      %s32 = sphi 0, %s29
      %s33 = sphi 0, %s32
      %s49 = sphi 0, %s33
      %s55 = sphi 0, %s57
      %s58 = sphi 0, %s55
      %s59 = sphi 0, %s58
      %s75 = sphi 0, %s59
      %s79 = sphi 0, %s79
      %s81 = sphi 0, %s79
      %s82 = sphi 0, %s81
      %s96 = sphi 0, %s82
      %s100 = sphi 0, %s100
      %s102 = sphi 0, %s100
      %s103 = sphi 0, %s102
      %s117 = sphi 0, %s103
      %s121 = sphi 0, %s121
      %s123 = sphi 0, %s121
      %s124 = sphi 0, %s123
      %s138 = sphi 0, %s124
      %s142 = sphi 0, %s142
      %s144 = sphi 0, %s142
      %s145 = sphi 0, %s144
      %s159 = sphi 0, %s145
      %s163 = sphi 0, %s163
      %s165 = sphi 0, %s163
      %s166 = sphi 0, %s165
      %s180 = sphi 0, %s166
      %s184 = sphi 0, %s184
      %s186 = sphi 0, %s184
      %s187 = sphi 0, %s186
      %s201 = sphi 0, %s187
      %s205 = sphi 0, %s205
      %s207 = sphi 0, %s205
      %s208 = sphi 0, %s207
      %s222 = sphi 0, %s208
      %s226 = sphi 0, %s226
      %s228 = sphi 0, %s226
      %s229 = sphi 0, %s228
      %s243 = sphi 0, %s229
      %s247 = sphi 0, %s247
      %s249 = sphi 0, %s247
      %s250 = sphi 0, %s249
      %s264 = sphi 0, %s250
      %s268 = sphi 0, %s268
      %s270 = sphi 0, %s268
      %s271 = sphi 0, %s270
      %s285 = sphi 0, %s271
      %s289 = sphi 0, %s289
      %s291 = sphi 0, %s289
      %s292 = sphi 0, %s291
      %s306 = sphi 0, %s292
      %s312 = sphi 0, %s314
      %s315 = sphi 0, %s312
      %s316 = sphi 0, %s315
      %s332 = sphi 0, %s316
    $region4: #{net_forward.1} parent=1 // loop_header_branch
      %22 = sbr.rel (%p20) target = $region8
    $region5: #{net_forward.1} parent=1 // loop_body
      %s24 = ssub.s32 %s19, 1
      %s25 = ssub.s32 %s19, 2
      %s26 = sadd.s32 %s19, 1
      %s27 = ssub.s32 %s19, %s26
      %p28 = scmp.eq.s32.totalorder %s27, 0
      %s30 = sadd.s32 %s29, 1
      %s31 = scalar_select %p28, %s29, %s30
      %p34 = pneg %p28
      %p35 = scmp.eq.s32.totalorder %s19, 1
      %p36 = por %p34, %p35
      %p37 = scmp.ne.s32.totalorder %s29, %s32
      %p38 = scmp.eq.s32.totalorder %s19, 0
      %p39 = por %p37, %p38
      %p40 = scmp.ne.s32.totalorder %s29, %s32
      %p41 = scmp.eq.s32.totalorder %s24, 1
      %p42 = por %p40, %p41
      %p43 = scmp.ne.s32.totalorder %s32, %s33
      %p44 = scmp.eq.s32.totalorder %s24, 0
      %p45 = por %p43, %p44
      %p46 = scmp.ne.s32.totalorder %s32, %s33
      %p47 = scmp.eq.s32.totalorder %s25, 1
      %p48 = por %p46, %p47
      %p50 = scmp.ne.s32.totalorder %s33, %s49
      %p51 = scmp.eq.s32.totalorder %s25, 0
      %p52 = por %p50, %p51
      %s53 = ssub.s32 %s19, %s26
      %p54 = scmp.eq.s32.totalorder %s53, 0
      %s56 = sadd.s32 %s55, 1
      %s57 = scalar_select %p54, %s55, %s56
      %p60 = pneg %p54
      %p61 = scmp.eq.s32.totalorder %s19, 1
      %p62 = por %p60, %p61
      %p63 = scmp.ne.s32.totalorder %s55, %s58
      %p64 = scmp.eq.s32.totalorder %s19, 0
      %p65 = por %p63, %p64
      %p66 = scmp.ne.s32.totalorder %s55, %s58
      %p67 = scmp.eq.s32.totalorder %s24, 1
      %p68 = por %p66, %p67
      %p69 = scmp.ne.s32.totalorder %s58, %s59
      %p70 = scmp.eq.s32.totalorder %s24, 0
      %p71 = por %p69, %p70
      %p72 = scmp.ne.s32.totalorder %s58, %s59
      %p73 = scmp.eq.s32.totalorder %s25, 1
      %p74 = por %p72, %p73
      %p76 = scmp.ne.s32.totalorder %s59, %s75
      %p77 = scmp.eq.s32.totalorder %s25, 0
      %p78 = por %p76, %p77
      %s80 = sadd.s32 %s79, 1
      %p83 = scmp.eq.s32.totalorder %s19, 1
      %p84 = scmp.ne.s32.totalorder %s79, %s81
      %p85 = scmp.eq.s32.totalorder %s19, 0
      %p86 = por %p84, %p85
      %p87 = scmp.ne.s32.totalorder %s79, %s81
      %p88 = scmp.eq.s32.totalorder %s24, 1
      %p89 = por %p87, %p88
      %p90 = scmp.ne.s32.totalorder %s81, %s82
      %p91 = scmp.eq.s32.totalorder %s24, 0
      %p92 = por %p90, %p91
      %p93 = scmp.ne.s32.totalorder %s81, %s82
      %p94 = scmp.eq.s32.totalorder %s25, 1
      %p95 = por %p93, %p94
      %p97 = scmp.ne.s32.totalorder %s82, %s96
      %p98 = scmp.eq.s32.totalorder %s25, 0
      %p99 = por %p97, %p98
      %s101 = sadd.s32 %s100, 1
      %p104 = scmp.eq.s32.totalorder %s19, 1
      %p105 = scmp.ne.s32.totalorder %s100, %s102
      %p106 = scmp.eq.s32.totalorder %s19, 0
      %p107 = por %p105, %p106
      %p108 = scmp.ne.s32.totalorder %s100, %s102
      %p109 = scmp.eq.s32.totalorder %s24, 1
      %p110 = por %p108, %p109
      %p111 = scmp.ne.s32.totalorder %s102, %s103
      %p112 = scmp.eq.s32.totalorder %s24, 0
      %p113 = por %p111, %p112
      %p114 = scmp.ne.s32.totalorder %s102, %s103
      %p115 = scmp.eq.s32.totalorder %s25, 1
      %p116 = por %p114, %p115
      %p118 = scmp.ne.s32.totalorder %s103, %s117
      %p119 = scmp.eq.s32.totalorder %s25, 0
      %p120 = por %p118, %p119
      %s122 = sadd.s32 %s121, 1
      %p125 = scmp.eq.s32.totalorder %s19, 1
      %p126 = scmp.ne.s32.totalorder %s121, %s123
      %p127 = scmp.eq.s32.totalorder %s19, 0
      %p128 = por %p126, %p127
      %p129 = scmp.ne.s32.totalorder %s121, %s123
      %p130 = scmp.eq.s32.totalorder %s24, 1
      %p131 = por %p129, %p130
      %p132 = scmp.ne.s32.totalorder %s123, %s124
      %p133 = scmp.eq.s32.totalorder %s24, 0
      %p134 = por %p132, %p133
      %p135 = scmp.ne.s32.totalorder %s123, %s124
      %p136 = scmp.eq.s32.totalorder %s25, 1
      %p137 = por %p135, %p136
      %p139 = scmp.ne.s32.totalorder %s124, %s138
      %p140 = scmp.eq.s32.totalorder %s25, 0
      %p141 = por %p139, %p140
      %s143 = sadd.s32 %s142, 1
      %p146 = scmp.eq.s32.totalorder %s19, 1
      %p147 = scmp.ne.s32.totalorder %s142, %s144
      %p148 = scmp.eq.s32.totalorder %s19, 0
      %p149 = por %p147, %p148
      %p150 = scmp.ne.s32.totalorder %s142, %s144
      %p151 = scmp.eq.s32.totalorder %s24, 1
      %p152 = por %p150, %p151
      %p153 = scmp.ne.s32.totalorder %s144, %s145
      %p154 = scmp.eq.s32.totalorder %s24, 0
      %p155 = por %p153, %p154
      %p156 = scmp.ne.s32.totalorder %s144, %s145
      %p157 = scmp.eq.s32.totalorder %s25, 1
      %p158 = por %p156, %p157
      %p160 = scmp.ne.s32.totalorder %s145, %s159
      %p161 = scmp.eq.s32.totalorder %s25, 0
      %p162 = por %p160, %p161
      %s164 = sadd.s32 %s163, 1
      %p167 = scmp.eq.s32.totalorder %s19, 1
      %p168 = scmp.ne.s32.totalorder %s163, %s165
      %p169 = scmp.eq.s32.totalorder %s19, 0
      %p170 = por %p168, %p169
      %p171 = scmp.ne.s32.totalorder %s163, %s165
      %p172 = scmp.eq.s32.totalorder %s24, 1
      %p173 = por %p171, %p172
      %p174 = scmp.ne.s32.totalorder %s165, %s166
      %p175 = scmp.eq.s32.totalorder %s24, 0
      %p176 = por %p174, %p175
      %p177 = scmp.ne.s32.totalorder %s165, %s166
      %p178 = scmp.eq.s32.totalorder %s25, 1
      %p179 = por %p177, %p178
      %p181 = scmp.ne.s32.totalorder %s166, %s180
      %p182 = scmp.eq.s32.totalorder %s25, 0
      %p183 = por %p181, %p182
      %s185 = sadd.s32 %s184, 1
      %p188 = scmp.eq.s32.totalorder %s19, 1
      %p189 = scmp.ne.s32.totalorder %s184, %s186
      %p190 = scmp.eq.s32.totalorder %s19, 0
      %p191 = por %p189, %p190
      %p192 = scmp.ne.s32.totalorder %s184, %s186
      %p193 = scmp.eq.s32.totalorder %s24, 1
      %p194 = por %p192, %p193
      %p195 = scmp.ne.s32.totalorder %s186, %s187
      %p196 = scmp.eq.s32.totalorder %s24, 0
      %p197 = por %p195, %p196
      %p198 = scmp.ne.s32.totalorder %s186, %s187
      %p199 = scmp.eq.s32.totalorder %s25, 1
      %p200 = por %p198, %p199
      %p202 = scmp.ne.s32.totalorder %s187, %s201
      %p203 = scmp.eq.s32.totalorder %s25, 0
      %p204 = por %p202, %p203
      %s206 = sadd.s32 %s205, 1
      %p209 = scmp.eq.s32.totalorder %s19, 1
      %p210 = scmp.ne.s32.totalorder %s205, %s207
      %p211 = scmp.eq.s32.totalorder %s19, 0
      %p212 = por %p210, %p211
      %p213 = scmp.ne.s32.totalorder %s205, %s207
      %p214 = scmp.eq.s32.totalorder %s24, 1
      %p215 = por %p213, %p214
      %p216 = scmp.ne.s32.totalorder %s207, %s208
      %p217 = scmp.eq.s32.totalorder %s24, 0
      %p218 = por %p216, %p217
      %p219 = scmp.ne.s32.totalorder %s207, %s208
      %p220 = scmp.eq.s32.totalorder %s25, 1
      %p221 = por %p219, %p220
      %p223 = scmp.ne.s32.totalorder %s208, %s222
      %p224 = scmp.eq.s32.totalorder %s25, 0
      %p225 = por %p223, %p224
      %s227 = sadd.s32 %s226, 1
      %p230 = scmp.eq.s32.totalorder %s19, 1
      %p231 = scmp.ne.s32.totalorder %s226, %s228
      %p232 = scmp.eq.s32.totalorder %s19, 0
      %p233 = por %p231, %p232
      %p234 = scmp.ne.s32.totalorder %s226, %s228
      %p235 = scmp.eq.s32.totalorder %s24, 1
      %p236 = por %p234, %p235
      %p237 = scmp.ne.s32.totalorder %s228, %s229
      %p238 = scmp.eq.s32.totalorder %s24, 0
      %p239 = por %p237, %p238
      %p240 = scmp.ne.s32.totalorder %s228, %s229
      %p241 = scmp.eq.s32.totalorder %s25, 1
      %p242 = por %p240, %p241
      %p244 = scmp.ne.s32.totalorder %s229, %s243
      %p245 = scmp.eq.s32.totalorder %s25, 0
      %p246 = por %p244, %p245
      %s248 = sadd.s32 %s247, 1
      %p251 = scmp.eq.s32.totalorder %s19, 1
      %p252 = scmp.ne.s32.totalorder %s247, %s249
      %p253 = scmp.eq.s32.totalorder %s19, 0
      %p254 = por %p252, %p253
      %p255 = scmp.ne.s32.totalorder %s247, %s249
      %p256 = scmp.eq.s32.totalorder %s24, 1
      %p257 = por %p255, %p256
      %p258 = scmp.ne.s32.totalorder %s249, %s250
      %p259 = scmp.eq.s32.totalorder %s24, 0
      %p260 = por %p258, %p259
      %p261 = scmp.ne.s32.totalorder %s249, %s250
      %p262 = scmp.eq.s32.totalorder %s25, 1
      %p263 = por %p261, %p262
      %p265 = scmp.ne.s32.totalorder %s250, %s264
      %p266 = scmp.eq.s32.totalorder %s25, 0
      %p267 = por %p265, %p266
      %s269 = sadd.s32 %s268, 1
      %p272 = scmp.eq.s32.totalorder %s19, 1
      %p273 = scmp.ne.s32.totalorder %s268, %s270
      %p274 = scmp.eq.s32.totalorder %s19, 0
      %p275 = por %p273, %p274
      %p276 = scmp.ne.s32.totalorder %s268, %s270
      %p277 = scmp.eq.s32.totalorder %s24, 1
      %p278 = por %p276, %p277
      %p279 = scmp.ne.s32.totalorder %s270, %s271
      %p280 = scmp.eq.s32.totalorder %s24, 0
      %p281 = por %p279, %p280
      %p282 = scmp.ne.s32.totalorder %s270, %s271
      %p283 = scmp.eq.s32.totalorder %s25, 1
      %p284 = por %p282, %p283
      %p286 = scmp.ne.s32.totalorder %s271, %s285
      %p287 = scmp.eq.s32.totalorder %s25, 0
      %p288 = por %p286, %p287
      %s290 = sadd.s32 %s289, 1
      %p293 = scmp.eq.s32.totalorder %s19, 1
      %p294 = scmp.ne.s32.totalorder %s289, %s291
      %p295 = scmp.eq.s32.totalorder %s19, 0
      %p296 = por %p294, %p295
      %p297 = scmp.ne.s32.totalorder %s289, %s291
      %p298 = scmp.eq.s32.totalorder %s24, 1
      %p299 = por %p297, %p298
      %p300 = scmp.ne.s32.totalorder %s291, %s292
      %p301 = scmp.eq.s32.totalorder %s24, 0
      %p302 = por %p300, %p301
      %p303 = scmp.ne.s32.totalorder %s291, %s292
      %p304 = scmp.eq.s32.totalorder %s25, 1
      %p305 = por %p303, %p304
      %p307 = scmp.ne.s32.totalorder %s292, %s306
      %p308 = scmp.eq.s32.totalorder %s25, 0
      %p309 = por %p307, %p308
      %s310 = ssub.s32 %s19, %s26
      %p311 = scmp.eq.s32.totalorder %s310, 0
      %s313 = sadd.s32 %s312, 1
      %s314 = scalar_select %p311, %s312, %s313
      %p317 = pneg %p311
      %p318 = scmp.eq.s32.totalorder %s19, 1
      %p319 = por %p317, %p318
      %p320 = scmp.ne.s32.totalorder %s312, %s315
      %p321 = scmp.eq.s32.totalorder %s19, 0
      %p322 = por %p320, %p321
      %p323 = scmp.ne.s32.totalorder %s312, %s315
      %p324 = scmp.eq.s32.totalorder %s24, 1
      %p325 = por %p323, %p324
      %p326 = scmp.ne.s32.totalorder %s315, %s316
      %p327 = scmp.eq.s32.totalorder %s24, 0
      %p328 = por %p326, %p327
      %p329 = scmp.ne.s32.totalorder %s315, %s316
      %p330 = scmp.eq.s32.totalorder %s25, 1
      %p331 = por %p329, %p330
      %p333 = scmp.ne.s32.totalorder %s316, %s332
      %p334 = scmp.eq.s32.totalorder %s25, 0
      %p335 = por %p333, %p334
      %p336 = scmp.le.s32.totalorder 1, %s19
      %p337 = scmp.lt.s32.totalorder %s19, 3
      %p338 = pnand %p336, %p337
      %p339 = pneg %p338
      // Predicated region
      $region9: #{net_forward.1} parent=5 // pred_check
        _
      $region10: #{net_forward.1} parent=5 // pred_check_branch
        %341 = sbr.rel (%p338) target = $region12
      $region11: #{net_forward.1} parent=5 // pred_region
        %s342 = ssub.s32 %s19, 1
        // Predicated region
        $region13: #{net_forward.1} parent=11 // pred_check
          %p343 = pneg %p92
        $region14: #{net_forward.1} parent=11 // pred_check_branch
          %345 = sbr.rel (%p343) target = $region16
        $region15: #{net_forward.1} parent=11 // pred_region
          _
        $region16: #{net_forward.1} parent=11 // pred_fallthru
          _
        // Predicated region
        $region17: #{net_forward.1} parent=11 // pred_check
          %p346 = pneg %p113
        $region18: #{net_forward.1} parent=11 // pred_check_branch
          %348 = sbr.rel (%p346) target = $region20
        $region19: #{net_forward.1} parent=11 // pred_region
          _
        $region20: #{net_forward.1} parent=11 // pred_fallthru
          _
        // Predicated region
        $region21: #{net_forward.1} parent=11 // pred_check
          %p349 = pneg %p134
        $region22: #{net_forward.1} parent=11 // pred_check_branch
          %351 = sbr.rel (%p349) target = $region24
        $region23: #{net_forward.1} parent=11 // pred_region
          _
        $region24: #{net_forward.1} parent=11 // pred_fallthru
          _
        // Predicated region
        $region25: #{net_forward.1} parent=11 // pred_check
          %p352 = pneg %p155
        $region26: #{net_forward.1} parent=11 // pred_check_branch
          %354 = sbr.rel (%p352) target = $region28
        $region27: #{net_forward.1} parent=11 // pred_region
          _
        $region28: #{net_forward.1} parent=11 // pred_fallthru
          _
        // Predicated region
        $region29: #{net_forward.1} parent=11 // pred_check
          %p355 = pneg %p176
        $region30: #{net_forward.1} parent=11 // pred_check_branch
          %357 = sbr.rel (%p355) target = $region32
        $region31: #{net_forward.1} parent=11 // pred_region
          _
        $region32: #{net_forward.1} parent=11 // pred_fallthru
          _
        // Predicated region
        $region33: #{net_forward.1} parent=11 // pred_check
          %p358 = pneg %p197
        $region34: #{net_forward.1} parent=11 // pred_check_branch
          %360 = sbr.rel (%p358) target = $region36
        $region35: #{net_forward.1} parent=11 // pred_region
          _
        $region36: #{net_forward.1} parent=11 // pred_fallthru
          _
        // Predicated region
        $region37: #{net_forward.1} parent=11 // pred_check
          %p361 = pneg %p218
        $region38: #{net_forward.1} parent=11 // pred_check_branch
          %363 = sbr.rel (%p361) target = $region40
        $region39: #{net_forward.1} parent=11 // pred_region
          _
        $region40: #{net_forward.1} parent=11 // pred_fallthru
          _
        // Predicated region
        $region41: #{net_forward.1} parent=11 // pred_check
          %p364 = pneg %p239
        $region42: #{net_forward.1} parent=11 // pred_check_branch
          %366 = sbr.rel (%p364) target = $region44
        $region43: #{net_forward.1} parent=11 // pred_region
          _
        $region44: #{net_forward.1} parent=11 // pred_fallthru
          _
        // Predicated region
        $region45: #{net_forward.1} parent=11 // pred_check
          %p367 = pneg %p260
        $region46: #{net_forward.1} parent=11 // pred_check_branch
          %369 = sbr.rel (%p367) target = $region48
        $region47: #{net_forward.1} parent=11 // pred_region
          _
        $region48: #{net_forward.1} parent=11 // pred_fallthru
          _
        // Predicated region
        $region49: #{net_forward.1} parent=11 // pred_check
          %p370 = pneg %p281
        $region50: #{net_forward.1} parent=11 // pred_check_branch
          %372 = sbr.rel (%p370) target = $region52
        $region51: #{net_forward.1} parent=11 // pred_region
          _
        $region52: #{net_forward.1} parent=11 // pred_fallthru
          _
        // Predicated region
        $region53: #{net_forward.1} parent=11 // pred_check
          %p373 = pneg %p302
        $region54: #{net_forward.1} parent=11 // pred_check_branch
          %375 = sbr.rel (%p373) target = $region56
        $region55: #{net_forward.1} parent=11 // pred_region
          _
        $region56: #{net_forward.1} parent=11 // pred_fallthru
          _
      $region12: #{net_forward.1} parent=5 // pred_fallthru
        _
      %p376 = scmp.lt.s32.totalorder %s19, 2
      // Predicated region
      $region57: #{net_forward.1} parent=5 // pred_check
        %p377 = pneg %p376
      $region58: #{net_forward.1} parent=5 // pred_check_branch
        %379 = sbr.rel (%p377) target = $region60
      $region59: #{net_forward.1} parent=5 // pred_region
        // Predicated region
        $region61: #{net_forward.1} parent=59 // pred_check
          %p380 = pneg %p39
        $region62: #{net_forward.1} parent=59 // pred_check_branch
          %382 = sbr.rel (%p380) target = $region64
        $region63: #{net_forward.1} parent=59 // pred_region
          %s383 = sand.u32 %s29, 1
          %s384 = sand.u32 %s29, 1
          %s385 = smul.addr %s384, 16
          %s386 = scalar_lea.vmem [#allocation2], %s385
          %s387 = smul.u32 8, %s19
          %s388 = scalar_lea.vmem %s0, %s387
          // Predicated region
          $region65: #{net_forward.1} parent=63 // pred_check
            _
          $region66: #{net_forward.1} parent=63 // pred_check_branch
            %390 = sbr.rel (0) target = $region68
          $region67: #{net_forward.1} parent=63 // pred_region
            // Predicated region
            $region69: #{net_forward.1} parent=67 // pred_check
              _
            $region70: #{net_forward.1} parent=67 // pred_check_branch
              %392 = sbr.rel (0) target = $region72
            $region71: #{net_forward.1} parent=67 // pred_region
              // Predicated region
              $region84: #{net_forward.1} parent=71 // pred_check
                _
              $region85: #{net_forward.1} parent=71 // pred_check_branch
                %409 = sbr.rel (0) target = $region87
              $region86: #{net_forward.1} parent=71 // pred_region
                loop: start=0, step=1, limit=1
                $region88: #{net_forward.1} parent=86 // loop_pre_header
                  _
                $region89: #{net_forward.1} parent=86 // loop_header
                  %s411 = sphi 0, %s415
                  %p412 = scmp.ge.s32.totalorder %s411, 1
                  %s416 = sphi %s388, %s388
                  %s417 = sphi %s386, %s386
                $region90: #{net_forward.1} parent=86 // loop_header_branch
                  %414 = sbr.rel (%p412) target = $region94
                $region91: #{net_forward.1} parent=86 // loop_body
                  %v418 = vld [vmem:[%s416] sm:$0xff]
                  %419 = vst [vmem:[%s417] sm:$0xff] %v418
                  %v420 = vld [vmem:[%s416 + $0x10] sm:$0xff]
                  %421 = vst [vmem:[%s417 + $0x8] sm:$0xff] %v420
                $region92: #{net_forward.1} parent=86 // loop_footer
                  %s415 = sadd.s32 1, %s411
                $region93: #{net_forward.1} parent=86 // loop_footer_branch
                  %410 = sbr.rel target = $region89
                $region94: #{net_forward.1} parent=86 // loop_exit
                  _
              $region87: #{net_forward.1} parent=71 // pred_fallthru
                _
              // Predicated region
              $region95: #{net_forward.1} parent=71 // pred_check
                _
              $region96: #{net_forward.1} parent=71 // pred_check_branch
                %423 = sbr.rel target = $region98
              $region97: #{net_forward.1} parent=71 // pred_region
                _
              $region98: #{net_forward.1} parent=71 // pred_fallthru
                _
            $region72: #{net_forward.1} parent=67 // pred_fallthru
              _
            // Predicated region
            $region73: #{net_forward.1} parent=67 // pred_check
              _
            $region74: #{net_forward.1} parent=67 // pred_check_branch
              %394 = sbr.rel target = $region76
            $region75: #{net_forward.1} parent=67 // pred_region
              loop: start=0, step=1, limit=1
              $region77: #{net_forward.1} parent=75 // loop_pre_header
                _
              $region78: #{net_forward.1} parent=75 // loop_header
                %s397 = sphi 0, %s401
                %p398 = scmp.ge.s32.totalorder %s397, 1
                %s402 = sphi %s388, %s388
                %s403 = sphi %s386, %s386
              $region79: #{net_forward.1} parent=75 // loop_header_branch
                %400 = sbr.rel (%p398) target = $region83
              $region80: #{net_forward.1} parent=75 // loop_body
                %v404 = vld [vmem:[%s402] sm:$0xff]
                %405 = vst [vmem:[%s403] sm:$0xff] %v404
                %v406 = vld [vmem:[%s402 + $0x10] sm:$0xff]
                %407 = vst [vmem:[%s403 + $0x8] sm:$0xff] %v406
              $region81: #{net_forward.1} parent=75 // loop_footer
                %s401 = sadd.s32 1, %s397
              $region82: #{net_forward.1} parent=75 // loop_footer_branch
                %396 = sbr.rel target = $region78
              $region83: #{net_forward.1} parent=75 // loop_exit
                _
            $region76: #{net_forward.1} parent=67 // pred_fallthru
              _
          $region68: #{net_forward.1} parent=63 // pred_fallthru
            _
          %424 = vnop
        $region64: #{net_forward.1} parent=59 // pred_fallthru
          _
        // Predicated region
        $region99: #{net_forward.1} parent=59 // pred_check
          %p425 = pneg %p65
        $region100: #{net_forward.1} parent=59 // pred_check_branch
          %427 = sbr.rel (%p425) target = $region102
        $region101: #{net_forward.1} parent=59 // pred_region
          %s428 = sand.u32 %s55, 1
          %s429 = sand.u32 %s55, 1
          %s430 = smul.addr %s429, 128
          %s431 = scalar_lea.vmem [#allocation3], %s430
          %s432 = smul.u32 8, %s19
          %s433 = smul.addr %s432, 2
          %s434 = smul.addr %s433, 4
          %s435 = scalar_lea.vmem %s1, %s434
          // Predicated region
          $region103: #{net_forward.1} parent=101 // pred_check
            _
          $region104: #{net_forward.1} parent=101 // pred_check_branch
            %437 = sbr.rel (0) target = $region106
          $region105: #{net_forward.1} parent=101 // pred_region
            // Predicated region
            $region107: #{net_forward.1} parent=105 // pred_check
              _
            $region108: #{net_forward.1} parent=105 // pred_check_branch
              %439 = sbr.rel target = $region110
            $region109: #{net_forward.1} parent=105 // pred_region
              // Predicated region
              $region122: #{net_forward.1} parent=109 // pred_check
                _
              $region123: #{net_forward.1} parent=109 // pred_check_branch
                %516 = sbr.rel (0) target = $region125
              $region124: #{net_forward.1} parent=109 // pred_region
                loop: start=0, step=1, limit=1
                $region126: #{net_forward.1} parent=124 // loop_pre_header
                  _
                $region127: #{net_forward.1} parent=124 // loop_header
                  %s518 = sphi 0, %s522
                  %p519 = scmp.ge.s32.totalorder %s518, 1
                  %s523 = sphi %s435, %s435
                  %s524 = sphi %s431, %s431
                $region128: #{net_forward.1} parent=124 // loop_header_branch
                  %521 = sbr.rel (%p519) target = $region132
                $region129: #{net_forward.1} parent=124 // loop_body
                  _
                $region130: #{net_forward.1} parent=124 // loop_footer
                  %s522 = sadd.s32 1, %s518
                $region131: #{net_forward.1} parent=124 // loop_footer_branch
                  %517 = sbr.rel target = $region127
                $region132: #{net_forward.1} parent=124 // loop_exit
                  _
                loop: start=0, step=1, limit=1
                $region133: #{net_forward.1} parent=124 // loop_pre_header
                  _
                $region134: #{net_forward.1} parent=124 // loop_header
                  %s527 = sphi 0, %s531
                  %p528 = scmp.ge.s32.totalorder %s527, 1
                  %s532 = sphi %s435, %s435
                  %s533 = sphi %s431, %s431
                $region135: #{net_forward.1} parent=124 // loop_header_branch
                  %530 = sbr.rel (%p528) target = $region139
                $region136: #{net_forward.1} parent=124 // loop_body
                  %v534 = vld [vmem:[%s532] sm:$0xf]
                  %535 = vst [vmem:[%s533] sm:$0xf] %v534
                  %v536 = vld [vmem:[%s532 + $0x4] sm:$0xf]
                  %537 = vst [vmem:[%s533 + $0x4] sm:$0xf] %v536
                  %v538 = vld [vmem:[%s532 + $0x8] sm:$0xf]
                  %539 = vst [vmem:[%s533 + $0x8] sm:$0xf] %v538
                  %v540 = vld [vmem:[%s532 + $0xc] sm:$0xf]
                  %541 = vst [vmem:[%s533 + $0xc] sm:$0xf] %v540
                  %v542 = vld [vmem:[%s532 + $0x10] sm:$0xf]
                  %543 = vst [vmem:[%s533 + $0x10] sm:$0xf] %v542
                  %v544 = vld [vmem:[%s532 + $0x14] sm:$0xf]
                  %545 = vst [vmem:[%s533 + $0x14] sm:$0xf] %v544
                  %v546 = vld [vmem:[%s532 + $0x18] sm:$0xf]
                  %547 = vst [vmem:[%s533 + $0x18] sm:$0xf] %v546
                  %v548 = vld [vmem:[%s532 + $0x1c] sm:$0xf]
                  %549 = vst [vmem:[%s533 + $0x1c] sm:$0xf] %v548
                  %v550 = vld [vmem:[%s532 + $0x20] sm:$0xf]
                  %551 = vst [vmem:[%s533 + $0x20] sm:$0xf] %v550
                  %v552 = vld [vmem:[%s532 + $0x24] sm:$0xf]
                  %553 = vst [vmem:[%s533 + $0x24] sm:$0xf] %v552
                  %v554 = vld [vmem:[%s532 + $0x28] sm:$0xf]
                  %555 = vst [vmem:[%s533 + $0x28] sm:$0xf] %v554
                  %v556 = vld [vmem:[%s532 + $0x2c] sm:$0xf]
                  %557 = vst [vmem:[%s533 + $0x2c] sm:$0xf] %v556
                  %v558 = vld [vmem:[%s532 + $0x30] sm:$0xf]
                  %559 = vst [vmem:[%s533 + $0x30] sm:$0xf] %v558
                  %v560 = vld [vmem:[%s532 + $0x34] sm:$0xf]
                  %561 = vst [vmem:[%s533 + $0x34] sm:$0xf] %v560
                  %v562 = vld [vmem:[%s532 + $0x38] sm:$0xf]
                  %563 = vst [vmem:[%s533 + $0x38] sm:$0xf] %v562
                  %v564 = vld [vmem:[%s532 + $0x3c] sm:$0xf]
                  %565 = vst [vmem:[%s533 + $0x3c] sm:$0xf] %v564
                  %v566 = vld [vmem:[%s532 + $0x80] sm:$0xf]
                  %567 = vst [vmem:[%s533 + $0x40] sm:$0xf] %v566
                  %v568 = vld [vmem:[%s532 + $0x84] sm:$0xf]
                  %569 = vst [vmem:[%s533 + $0x44] sm:$0xf] %v568
                  %v570 = vld [vmem:[%s532 + $0x88] sm:$0xf]
                  %571 = vst [vmem:[%s533 + $0x48] sm:$0xf] %v570
                  %v572 = vld [vmem:[%s532 + $0x8c] sm:$0xf]
                  %573 = vst [vmem:[%s533 + $0x4c] sm:$0xf] %v572
                  %v574 = vld [vmem:[%s532 + $0x90] sm:$0xf]
                  %575 = vst [vmem:[%s533 + $0x50] sm:$0xf] %v574
                  %v576 = vld [vmem:[%s532 + $0x94] sm:$0xf]
                  %577 = vst [vmem:[%s533 + $0x54] sm:$0xf] %v576
                  %v578 = vld [vmem:[%s532 + $0x98] sm:$0xf]
                  %579 = vst [vmem:[%s533 + $0x58] sm:$0xf] %v578
                  %v580 = vld [vmem:[%s532 + $0x9c] sm:$0xf]
                  %581 = vst [vmem:[%s533 + $0x5c] sm:$0xf] %v580
                  %v582 = vld [vmem:[%s532 + $0xa0] sm:$0xf]
                  %583 = vst [vmem:[%s533 + $0x60] sm:$0xf] %v582
                  %v584 = vld [vmem:[%s532 + $0xa4] sm:$0xf]
                  %585 = vst [vmem:[%s533 + $0x64] sm:$0xf] %v584
                  %v586 = vld [vmem:[%s532 + $0xa8] sm:$0xf]
                  %587 = vst [vmem:[%s533 + $0x68] sm:$0xf] %v586
                  %v588 = vld [vmem:[%s532 + $0xac] sm:$0xf]
                  %589 = vst [vmem:[%s533 + $0x6c] sm:$0xf] %v588
                  %v590 = vld [vmem:[%s532 + $0xb0] sm:$0xf]
                  %591 = vst [vmem:[%s533 + $0x70] sm:$0xf] %v590
                  %v592 = vld [vmem:[%s532 + $0xb4] sm:$0xf]
                  %593 = vst [vmem:[%s533 + $0x74] sm:$0xf] %v592
                  %v594 = vld [vmem:[%s532 + $0xb8] sm:$0xf]
                  %595 = vst [vmem:[%s533 + $0x78] sm:$0xf] %v594
                  %v596 = vld [vmem:[%s532 + $0xbc] sm:$0xf]
                  %597 = vst [vmem:[%s533 + $0x7c] sm:$0xf] %v596
                $region137: #{net_forward.1} parent=124 // loop_footer
                  %s531 = sadd.s32 1, %s527
                $region138: #{net_forward.1} parent=124 // loop_footer_branch
                  %526 = sbr.rel target = $region134
                $region139: #{net_forward.1} parent=124 // loop_exit
                  _
              $region125: #{net_forward.1} parent=109 // pred_fallthru
                _
            $region110: #{net_forward.1} parent=105 // pred_fallthru
              _
            // Predicated region
            $region111: #{net_forward.1} parent=105 // pred_check
              _
            $region112: #{net_forward.1} parent=105 // pred_check_branch
              %441 = sbr.rel (0) target = $region114
            $region113: #{net_forward.1} parent=105 // pred_region
              loop: start=0, step=1, limit=1
              $region115: #{net_forward.1} parent=113 // loop_pre_header
                _
              $region116: #{net_forward.1} parent=113 // loop_header
                %s444 = sphi 0, %s448
                %p445 = scmp.ge.s32.totalorder %s444, 1
                %s449 = sphi %s435, %s435
                %s450 = sphi %s431, %s431
              $region117: #{net_forward.1} parent=113 // loop_header_branch
                %447 = sbr.rel (%p445) target = $region121
              $region118: #{net_forward.1} parent=113 // loop_body
                %v451 = vld [vmem:[%s449] sm:$0xf]
                %452 = vst [vmem:[%s450] sm:$0xf] %v451
                %v453 = vld [vmem:[%s449 + $0x4] sm:$0xf]
                %454 = vst [vmem:[%s450 + $0x4] sm:$0xf] %v453
                %v455 = vld [vmem:[%s449 + $0x8] sm:$0xf]
                %456 = vst [vmem:[%s450 + $0x8] sm:$0xf] %v455
                %v457 = vld [vmem:[%s449 + $0xc] sm:$0xf]
                %458 = vst [vmem:[%s450 + $0xc] sm:$0xf] %v457
                %v459 = vld [vmem:[%s449 + $0x10] sm:$0xf]
                %460 = vst [vmem:[%s450 + $0x10] sm:$0xf] %v459
                %v461 = vld [vmem:[%s449 + $0x14] sm:$0xf]
                %462 = vst [vmem:[%s450 + $0x14] sm:$0xf] %v461
                %v463 = vld [vmem:[%s449 + $0x18] sm:$0xf]
                %464 = vst [vmem:[%s450 + $0x18] sm:$0xf] %v463
                %v465 = vld [vmem:[%s449 + $0x1c] sm:$0xf]
                %466 = vst [vmem:[%s450 + $0x1c] sm:$0xf] %v465
                %v467 = vld [vmem:[%s449 + $0x20] sm:$0xf]
                %468 = vst [vmem:[%s450 + $0x20] sm:$0xf] %v467
                %v469 = vld [vmem:[%s449 + $0x24] sm:$0xf]
                %470 = vst [vmem:[%s450 + $0x24] sm:$0xf] %v469
                %v471 = vld [vmem:[%s449 + $0x28] sm:$0xf]
                %472 = vst [vmem:[%s450 + $0x28] sm:$0xf] %v471
                %v473 = vld [vmem:[%s449 + $0x2c] sm:$0xf]
                %474 = vst [vmem:[%s450 + $0x2c] sm:$0xf] %v473
                %v475 = vld [vmem:[%s449 + $0x30] sm:$0xf]
                %476 = vst [vmem:[%s450 + $0x30] sm:$0xf] %v475
                %v477 = vld [vmem:[%s449 + $0x34] sm:$0xf]
                %478 = vst [vmem:[%s450 + $0x34] sm:$0xf] %v477
                %v479 = vld [vmem:[%s449 + $0x38] sm:$0xf]
                %480 = vst [vmem:[%s450 + $0x38] sm:$0xf] %v479
                %v481 = vld [vmem:[%s449 + $0x3c] sm:$0xf]
                %482 = vst [vmem:[%s450 + $0x3c] sm:$0xf] %v481
                %v483 = vld [vmem:[%s449 + $0x80] sm:$0xf]
                %484 = vst [vmem:[%s450 + $0x40] sm:$0xf] %v483
                %v485 = vld [vmem:[%s449 + $0x84] sm:$0xf]
                %486 = vst [vmem:[%s450 + $0x44] sm:$0xf] %v485
                %v487 = vld [vmem:[%s449 + $0x88] sm:$0xf]
                %488 = vst [vmem:[%s450 + $0x48] sm:$0xf] %v487
                %v489 = vld [vmem:[%s449 + $0x8c] sm:$0xf]
                %490 = vst [vmem:[%s450 + $0x4c] sm:$0xf] %v489
                %v491 = vld [vmem:[%s449 + $0x90] sm:$0xf]
                %492 = vst [vmem:[%s450 + $0x50] sm:$0xf] %v491
                %v493 = vld [vmem:[%s449 + $0x94] sm:$0xf]
                %494 = vst [vmem:[%s450 + $0x54] sm:$0xf] %v493
                %v495 = vld [vmem:[%s449 + $0x98] sm:$0xf]
                %496 = vst [vmem:[%s450 + $0x58] sm:$0xf] %v495
                %v497 = vld [vmem:[%s449 + $0x9c] sm:$0xf]
                %498 = vst [vmem:[%s450 + $0x5c] sm:$0xf] %v497
                %v499 = vld [vmem:[%s449 + $0xa0] sm:$0xf]
                %500 = vst [vmem:[%s450 + $0x60] sm:$0xf] %v499
                %v501 = vld [vmem:[%s449 + $0xa4] sm:$0xf]
                %502 = vst [vmem:[%s450 + $0x64] sm:$0xf] %v501
                %v503 = vld [vmem:[%s449 + $0xa8] sm:$0xf]
                %504 = vst [vmem:[%s450 + $0x68] sm:$0xf] %v503
                %v505 = vld [vmem:[%s449 + $0xac] sm:$0xf]
                %506 = vst [vmem:[%s450 + $0x6c] sm:$0xf] %v505
                %v507 = vld [vmem:[%s449 + $0xb0] sm:$0xf]
                %508 = vst [vmem:[%s450 + $0x70] sm:$0xf] %v507
                %v509 = vld [vmem:[%s449 + $0xb4] sm:$0xf]
                %510 = vst [vmem:[%s450 + $0x74] sm:$0xf] %v509
                %v511 = vld [vmem:[%s449 + $0xb8] sm:$0xf]
                %512 = vst [vmem:[%s450 + $0x78] sm:$0xf] %v511
                %v513 = vld [vmem:[%s449 + $0xbc] sm:$0xf]
                %514 = vst [vmem:[%s450 + $0x7c] sm:$0xf] %v513
              $region119: #{net_forward.1} parent=113 // loop_footer
                %s448 = sadd.s32 1, %s444
              $region120: #{net_forward.1} parent=113 // loop_footer_branch
                %443 = sbr.rel target = $region116
              $region121: #{net_forward.1} parent=113 // loop_exit
                _
            $region114: #{net_forward.1} parent=105 // pred_fallthru
              _
          $region106: #{net_forward.1} parent=101 // pred_fallthru
            _
          %598 = vnop
        $region102: #{net_forward.1} parent=59 // pred_fallthru
          _
      $region60: #{net_forward.1} parent=5 // pred_fallthru
        _
      %p599 = scmp.le.s32.totalorder 1, %s19
      %p600 = scmp.lt.s32.totalorder %s19, 3
      %p601 = pnand %p599, %p600
      %p602 = pneg %p601
      // Predicated region
      $region140: #{net_forward.1} parent=5 // pred_check
        _
      $region141: #{net_forward.1} parent=5 // pred_check_branch
        %604 = sbr.rel (%p601) target = $region143
      $region142: #{net_forward.1} parent=5 // pred_region
        %s605 = ssub.s32 %s19, 1
        %s606 = sand.u32 %s32, 1
        %s607 = sand.u32 %s32, 1
        %s608 = smul.addr %s607, 16
        %s609 = scalar_lea.vmem [#allocation2], %s608
        // Predicated region
        $region144: #{net_forward.1} parent=142 // pred_check
          %p610 = pneg %p45
        $region145: #{net_forward.1} parent=142 // pred_check_branch
          %612 = sbr.rel (%p610) target = $region147
        $region146: #{net_forward.1} parent=142 // pred_region
          _
        $region147: #{net_forward.1} parent=142 // pred_fallthru
          _
        %s613 = sand.u32 %s58, 1
        %s614 = sand.u32 %s58, 1
        %s615 = smul.addr %s614, 128
        %s616 = scalar_lea.vmem [#allocation3], %s615
        // Predicated region
        $region148: #{net_forward.1} parent=142 // pred_check
          %p617 = pneg %p71
        $region149: #{net_forward.1} parent=142 // pred_check_branch
          %619 = sbr.rel (%p617) target = $region151
        $region150: #{net_forward.1} parent=142 // pred_region
          _
        $region151: #{net_forward.1} parent=142 // pred_fallthru
          _
        %s620 = sand.u32 %s32, 1
        %s621 = sand.u32 %s32, 1
        %s622 = smul.addr %s621, 16
        %s623 = scalar_lea.vmem [#allocation2], %s622
        %p624 = pneg %p45
        %p625 = pneg %p42
        %s626 = sand.u32 %s58, 1
        %s627 = sand.u32 %s58, 1
        %s628 = smul.addr %s627, 128
        %s629 = scalar_lea.vmem [#allocation3], %s628
        %p630 = pneg %p71
        %p631 = pneg %p68
        %p632 = pneg %p92
        %p633 = pneg %p89
        %p634 = pneg %p113
        %p635 = pneg %p110
        %p636 = pneg %p134
        %p637 = pneg %p131
        %p638 = pneg %p155
        %p639 = pneg %p152
        %p640 = pneg %p176
        %p641 = pneg %p173
        %p642 = pneg %p197
        %p643 = pneg %p194
        %p644 = pneg %p218
        %p645 = pneg %p215
        %p646 = pneg %p239
        %p647 = pneg %p236
        %p648 = pneg %p260
        %p649 = pneg %p257
        %p650 = pneg %p281
        %p651 = pneg %p278
        %p652 = pneg %p302
        %p653 = pneg %p299
        %p654 = pneg %p328
        %p655 = pneg %p325
        %p656 = scmp.lt.s32.totalorder %s24, 1
        %s657 = scalar_select %p656, %s24, 1
        %s658 = smul.addr %s657, 4
        %s659 = scalar_lea.vmem %s13, %s658
        %s660 = smul.u32 8, %s24
        %s661 = smul.u32 8, %s24
        %p662 = scmp.lt.s32.totalorder %s24, 1
        %s663 = scalar_select %p662, %s24, 1
        %s664 = smul.addr %s663, 4
        %s665 = scalar_lea.vmem %s13, %s664
        %v667 = vld [vmem:[%s609] sm:$0x1]
        %v668 = vld [vmem:[%s609 + $0x1] sm:$0x1]
        %v669 = vld [vmem:[%s609 + $0x2] sm:$0x1]
        %v670 = vld [vmem:[%s609 + $0x3] sm:$0x1]
        %v671 = vld [vmem:[%s609 + $0x4] sm:$0x1]
        %v672 = vld [vmem:[%s609 + $0x5] sm:$0x1]
        %v673 = vld [vmem:[%s609 + $0x6] sm:$0x1]
        %v674 = vld [vmem:[%s609 + $0x7] sm:$0x1]
        %v675 = vld [vmem:[%s616] sm:$0xf]
        %v676 = vld [vmem:[%s616 + $0x4] sm:$0xf]
        %v677 = vld [vmem:[%s616 + $0x8] sm:$0xf]
        %v678 = vld [vmem:[%s616 + $0xc] sm:$0xf]
        %v679 = vld [vmem:[%s616 + $0x10] sm:$0xf]
        %v680 = vld [vmem:[%s616 + $0x14] sm:$0xf]
        %v681 = vld [vmem:[%s616 + $0x18] sm:$0xf]
        %v682 = vld [vmem:[%s616 + $0x1c] sm:$0xf]
        %v683 = vld [vmem:[%s616 + $0x20] sm:$0xf]
        %v684 = vld [vmem:[%s616 + $0x24] sm:$0xf]
        %v685 = vld [vmem:[%s616 + $0x28] sm:$0xf]
        %v686 = vld [vmem:[%s616 + $0x2c] sm:$0xf]
        %v687 = vld [vmem:[%s616 + $0x30] sm:$0xf]
        %v688 = vld [vmem:[%s616 + $0x34] sm:$0xf]
        %v689 = vld [vmem:[%s616 + $0x38] sm:$0xf]
        %v690 = vld [vmem:[%s616 + $0x3c] sm:$0xf]
        %v693 = vunpack.c.l.b16 %v675
        %v694 = vunpack.c.l.b16 %v676
        %v695 = vpack.c.b16 %v694, %v693
        %vm696 = vcmask 130048
        %v698 = vsel %vm696, %v667, 0
        %v701 = vsel %vm696, %v695, 0
        %703 = vmatprep.subr.bf16.mxu0 0
        %704 = vmatpush1.bf16.xpose.msra.mxu0 %v701
        %705 = vmatprep.subr.bf16.mxu0 0
        %706 = vmatpush1.bf16.xpose.msra.mxu0 0
        %707 = vmatprep.subr.bf16.mxu0 0
        %708 = vmatpush1.bf16.xpose.msra.mxu0 0
        %709 = vmatprep.subr.bf16.mxu0 0
        %710 = vmatpush1.bf16.xpose.msra.mxu0 0
        %711 = vmatprep.subr.bf16.mxu0 0
        %712 = vmatpush1.bf16.xpose.msra.mxu0 0
        %713 = vmatprep.subr.bf16.mxu0 0
        %714 = vmatpush1.bf16.xpose.msra.mxu0 0
        %715 = vmatprep.subr.bf16.mxu0 0
        %716 = vmatpush1.bf16.xpose.msra.mxu0 0
        %717 = vmatprep.subr.bf16.mxu0 0
        %718 = vmatpush1.bf16.xpose.msra.mxu0 0
        %719 = vmatprep.subr.bf16.mxu0 0
        %720 = vmatpush1.bf16.xpose.msra.mxu0 0
        %721 = vmatprep.subr.bf16.mxu0 0
        %722 = vmatpush1.bf16.xpose.msra.mxu0 0
        %723 = vmatprep.subr.bf16.mxu0 0
        %724 = vmatpush1.bf16.xpose.msra.mxu0 0
        %725 = vmatprep.subr.bf16.mxu0 0
        %726 = vmatpush1.bf16.xpose.msra.mxu0 0
        %727 = vmatprep.subr.bf16.mxu0 0
        %728 = vmatpush1.bf16.xpose.msra.mxu0 0
        %729 = vmatprep.subr.bf16.mxu0 0
        %730 = vmatpush1.bf16.xpose.msra.mxu0 0
        %731 = vmatprep.subr.bf16.mxu0 0
        %732 = vmatpush1.bf16.xpose.msra.mxu0 0
        %733 = vmatprep.subr.bf16.mxu0 0
        %734 = vmatpush1.bf16.xpose.msra.mxu0 0
        %735 = vmatprep.mubr.bf16.mxu0 0
        %736 = vmatmul.mubr.bf16.gmra.mrb[0].mxu0 %v698
        %v737 = vpop.f32.mrb[0].mxu0
        %v738 = vadd.f32 0.0, %v737
        %v739 = vpop.f32.mrb[0].mxu0
        %v740 = vpop.f32.mrb[0].mxu0
        %v741 = vpop.f32.mrb[0].mxu0
        %742 = vdwg.mxu0
        %v745 = vunpack.c.l.b16 %v677
        %v746 = vunpack.c.l.b16 %v678
        %v747 = vpack.c.b16 %v746, %v745
        %v749 = vsel %vm696, %v668, 0
        %v752 = vsel %vm696, %v747, 0
        %754 = vmatprep.subr.bf16.mxu0 0
        %755 = vmatpush1.bf16.xpose.msra.mxu0 %v752
        %756 = vmatprep.subr.bf16.mxu0 0
        %757 = vmatpush1.bf16.xpose.msra.mxu0 0
        %758 = vmatprep.subr.bf16.mxu0 0
        %759 = vmatpush1.bf16.xpose.msra.mxu0 0
        %760 = vmatprep.subr.bf16.mxu0 0
        %761 = vmatpush1.bf16.xpose.msra.mxu0 0
        %762 = vmatprep.subr.bf16.mxu0 0
        %763 = vmatpush1.bf16.xpose.msra.mxu0 0
        %764 = vmatprep.subr.bf16.mxu0 0
        %765 = vmatpush1.bf16.xpose.msra.mxu0 0
        %766 = vmatprep.subr.bf16.mxu0 0
        %767 = vmatpush1.bf16.xpose.msra.mxu0 0
        %768 = vmatprep.subr.bf16.mxu0 0
        %769 = vmatpush1.bf16.xpose.msra.mxu0 0
        %770 = vmatprep.subr.bf16.mxu0 0
        %771 = vmatpush1.bf16.xpose.msra.mxu0 0
        %772 = vmatprep.subr.bf16.mxu0 0
        %773 = vmatpush1.bf16.xpose.msra.mxu0 0
        %774 = vmatprep.subr.bf16.mxu0 0
        %775 = vmatpush1.bf16.xpose.msra.mxu0 0
        %776 = vmatprep.subr.bf16.mxu0 0
        %777 = vmatpush1.bf16.xpose.msra.mxu0 0
        %778 = vmatprep.subr.bf16.mxu0 0
        %779 = vmatpush1.bf16.xpose.msra.mxu0 0
        %780 = vmatprep.subr.bf16.mxu0 0
        %781 = vmatpush1.bf16.xpose.msra.mxu0 0
        %782 = vmatprep.subr.bf16.mxu0 0
        %783 = vmatpush1.bf16.xpose.msra.mxu0 0
        %784 = vmatprep.subr.bf16.mxu0 0
        %785 = vmatpush1.bf16.xpose.msra.mxu0 0
        %786 = vmatprep.mubr.bf16.mxu0 0
        %787 = vmatmul.mubr.bf16.gmra.mrb[0].mxu0 %v749
        %v788 = vpop.f32.mrb[0].mxu0
        %v789 = vadd.f32 0.0, %v788
        %v790 = vpop.f32.mrb[0].mxu0
        %v791 = vpop.f32.mrb[0].mxu0
        %v792 = vpop.f32.mrb[0].mxu0
        %793 = vdwg.mxu0
        %v796 = vunpack.c.l.b16 %v679
        %v797 = vunpack.c.l.b16 %v680
        %v798 = vpack.c.b16 %v797, %v796
        %v800 = vsel %vm696, %v669, 0
        %v803 = vsel %vm696, %v798, 0
        %805 = vmatprep.subr.bf16.mxu0 0
        %806 = vmatpush1.bf16.xpose.msra.mxu0 %v803
        %807 = vmatprep.subr.bf16.mxu0 0
        %808 = vmatpush1.bf16.xpose.msra.mxu0 0
        %809 = vmatprep.subr.bf16.mxu0 0
        %810 = vmatpush1.bf16.xpose.msra.mxu0 0
        %811 = vmatprep.subr.bf16.mxu0 0
        %812 = vmatpush1.bf16.xpose.msra.mxu0 0
        %813 = vmatprep.subr.bf16.mxu0 0
        %814 = vmatpush1.bf16.xpose.msra.mxu0 0
        %815 = vmatprep.subr.bf16.mxu0 0
        %816 = vmatpush1.bf16.xpose.msra.mxu0 0
        %817 = vmatprep.subr.bf16.mxu0 0
        %818 = vmatpush1.bf16.xpose.msra.mxu0 0
        %819 = vmatprep.subr.bf16.mxu0 0
        %820 = vmatpush1.bf16.xpose.msra.mxu0 0
        %821 = vmatprep.subr.bf16.mxu0 0
        %822 = vmatpush1.bf16.xpose.msra.mxu0 0
        %823 = vmatprep.subr.bf16.mxu0 0
        %824 = vmatpush1.bf16.xpose.msra.mxu0 0
        %825 = vmatprep.subr.bf16.mxu0 0
        %826 = vmatpush1.bf16.xpose.msra.mxu0 0
        %827 = vmatprep.subr.bf16.mxu0 0
        %828 = vmatpush1.bf16.xpose.msra.mxu0 0
        %829 = vmatprep.subr.bf16.mxu0 0
        %830 = vmatpush1.bf16.xpose.msra.mxu0 0
        %831 = vmatprep.subr.bf16.mxu0 0
        %832 = vmatpush1.bf16.xpose.msra.mxu0 0
        %833 = vmatprep.subr.bf16.mxu0 0
        %834 = vmatpush1.bf16.xpose.msra.mxu0 0
        %835 = vmatprep.subr.bf16.mxu0 0
        %836 = vmatpush1.bf16.xpose.msra.mxu0 0
        %837 = vmatprep.mubr.bf16.mxu0 0
        %838 = vmatmul.mubr.bf16.gmra.mrb[0].mxu0 %v800
        %v839 = vpop.f32.mrb[0].mxu0
        %v840 = vadd.f32 0.0, %v839
        %v841 = vpop.f32.mrb[0].mxu0
        %v842 = vpop.f32.mrb[0].mxu0
        %v843 = vpop.f32.mrb[0].mxu0
        %844 = vdwg.mxu0
        %v847 = vunpack.c.l.b16 %v681
        %v848 = vunpack.c.l.b16 %v682
        %v849 = vpack.c.b16 %v848, %v847
        %v851 = vsel %vm696, %v670, 0
        %v854 = vsel %vm696, %v849, 0
        %856 = vmatprep.subr.bf16.mxu0 0
        %857 = vmatpush1.bf16.xpose.msra.mxu0 %v854
        %858 = vmatprep.subr.bf16.mxu0 0
        %859 = vmatpush1.bf16.xpose.msra.mxu0 0
        %860 = vmatprep.subr.bf16.mxu0 0
        %861 = vmatpush1.bf16.xpose.msra.mxu0 0
        %862 = vmatprep.subr.bf16.mxu0 0
        %863 = vmatpush1.bf16.xpose.msra.mxu0 0
        %864 = vmatprep.subr.bf16.mxu0 0
        %865 = vmatpush1.bf16.xpose.msra.mxu0 0
        %866 = vmatprep.subr.bf16.mxu0 0
        %867 = vmatpush1.bf16.xpose.msra.mxu0 0
        %868 = vmatprep.subr.bf16.mxu0 0
        %869 = vmatpush1.bf16.xpose.msra.mxu0 0
        %870 = vmatprep.subr.bf16.mxu0 0
        %871 = vmatpush1.bf16.xpose.msra.mxu0 0
        %872 = vmatprep.subr.bf16.mxu0 0
        %873 = vmatpush1.bf16.xpose.msra.mxu0 0
        %874 = vmatprep.subr.bf16.mxu0 0
        %875 = vmatpush1.bf16.xpose.msra.mxu0 0
        %876 = vmatprep.subr.bf16.mxu0 0
        %877 = vmatpush1.bf16.xpose.msra.mxu0 0
        %878 = vmatprep.subr.bf16.mxu0 0
        %879 = vmatpush1.bf16.xpose.msra.mxu0 0
        %880 = vmatprep.subr.bf16.mxu0 0
        %881 = vmatpush1.bf16.xpose.msra.mxu0 0
        %882 = vmatprep.subr.bf16.mxu0 0
        %883 = vmatpush1.bf16.xpose.msra.mxu0 0
        %884 = vmatprep.subr.bf16.mxu0 0
        %885 = vmatpush1.bf16.xpose.msra.mxu0 0
        %886 = vmatprep.subr.bf16.mxu0 0
        %887 = vmatpush1.bf16.xpose.msra.mxu0 0
        %888 = vmatprep.mubr.bf16.mxu0 0
        %889 = vmatmul.mubr.bf16.gmra.mrb[0].mxu0 %v851
        %v890 = vpop.f32.mrb[0].mxu0
        %v891 = vadd.f32 0.0, %v890
        %v892 = vpop.f32.mrb[0].mxu0
        %v893 = vpop.f32.mrb[0].mxu0
        %v894 = vpop.f32.mrb[0].mxu0
        %895 = vdwg.mxu0
        %v898 = vunpack.c.l.b16 %v683
        %v899 = vunpack.c.l.b16 %v684
        %v900 = vpack.c.b16 %v899, %v898
        %v902 = vsel %vm696, %v671, 0
        %v905 = vsel %vm696, %v900, 0
        %907 = vmatprep.subr.bf16.mxu0 0
        %908 = vmatpush1.bf16.xpose.msra.mxu0 %v905
        %909 = vmatprep.subr.bf16.mxu0 0
        %910 = vmatpush1.bf16.xpose.msra.mxu0 0
        %911 = vmatprep.subr.bf16.mxu0 0
        %912 = vmatpush1.bf16.xpose.msra.mxu0 0
        %913 = vmatprep.subr.bf16.mxu0 0
        %914 = vmatpush1.bf16.xpose.msra.mxu0 0
        %915 = vmatprep.subr.bf16.mxu0 0
        %916 = vmatpush1.bf16.xpose.msra.mxu0 0
        %917 = vmatprep.subr.bf16.mxu0 0
        %918 = vmatpush1.bf16.xpose.msra.mxu0 0
        %919 = vmatprep.subr.bf16.mxu0 0
        %920 = vmatpush1.bf16.xpose.msra.mxu0 0
        %921 = vmatprep.subr.bf16.mxu0 0
        %922 = vmatpush1.bf16.xpose.msra.mxu0 0
        %923 = vmatprep.subr.bf16.mxu0 0
        %924 = vmatpush1.bf16.xpose.msra.mxu0 0
        %925 = vmatprep.subr.bf16.mxu0 0
        %926 = vmatpush1.bf16.xpose.msra.mxu0 0
        %927 = vmatprep.subr.bf16.mxu0 0
        %928 = vmatpush1.bf16.xpose.msra.mxu0 0
        %929 = vmatprep.subr.bf16.mxu0 0
        %930 = vmatpush1.bf16.xpose.msra.mxu0 0
        %931 = vmatprep.subr.bf16.mxu0 0
        %932 = vmatpush1.bf16.xpose.msra.mxu0 0
        %933 = vmatprep.subr.bf16.mxu0 0
        %934 = vmatpush1.bf16.xpose.msra.mxu0 0
        %935 = vmatprep.subr.bf16.mxu0 0
        %936 = vmatpush1.bf16.xpose.msra.mxu0 0
        %937 = vmatprep.subr.bf16.mxu0 0
        %938 = vmatpush1.bf16.xpose.msra.mxu0 0
        %939 = vmatprep.mubr.bf16.mxu0 0
        %940 = vmatmul.mubr.bf16.gmra.mrb[0].mxu0 %v902
        %v941 = vpop.f32.mrb[0].mxu0
        %v942 = vadd.f32 0.0, %v941
        %v943 = vpop.f32.mrb[0].mxu0
        %v944 = vpop.f32.mrb[0].mxu0
        %v945 = vpop.f32.mrb[0].mxu0
        %946 = vdwg.mxu0
        %v949 = vunpack.c.l.b16 %v685
        %v950 = vunpack.c.l.b16 %v686
        %v951 = vpack.c.b16 %v950, %v949
        %v953 = vsel %vm696, %v672, 0
        %v956 = vsel %vm696, %v951, 0
        %958 = vmatprep.subr.bf16.mxu0 0
        %959 = vmatpush1.bf16.xpose.msra.mxu0 %v956
        %960 = vmatprep.subr.bf16.mxu0 0
        %961 = vmatpush1.bf16.xpose.msra.mxu0 0
        %962 = vmatprep.subr.bf16.mxu0 0
        %963 = vmatpush1.bf16.xpose.msra.mxu0 0
        %964 = vmatprep.subr.bf16.mxu0 0
        %965 = vmatpush1.bf16.xpose.msra.mxu0 0
        %966 = vmatprep.subr.bf16.mxu0 0
        %967 = vmatpush1.bf16.xpose.msra.mxu0 0
        %968 = vmatprep.subr.bf16.mxu0 0
        %969 = vmatpush1.bf16.xpose.msra.mxu0 0
        %970 = vmatprep.subr.bf16.mxu0 0
        %971 = vmatpush1.bf16.xpose.msra.mxu0 0
        %972 = vmatprep.subr.bf16.mxu0 0
        %973 = vmatpush1.bf16.xpose.msra.mxu0 0
        %974 = vmatprep.subr.bf16.mxu0 0
        %975 = vmatpush1.bf16.xpose.msra.mxu0 0
        %976 = vmatprep.subr.bf16.mxu0 0
        %977 = vmatpush1.bf16.xpose.msra.mxu0 0
        %978 = vmatprep.subr.bf16.mxu0 0
        %979 = vmatpush1.bf16.xpose.msra.mxu0 0
        %980 = vmatprep.subr.bf16.mxu0 0
        %981 = vmatpush1.bf16.xpose.msra.mxu0 0
        %982 = vmatprep.subr.bf16.mxu0 0
        %983 = vmatpush1.bf16.xpose.msra.mxu0 0
        %984 = vmatprep.subr.bf16.mxu0 0
        %985 = vmatpush1.bf16.xpose.msra.mxu0 0
        %986 = vmatprep.subr.bf16.mxu0 0
        %987 = vmatpush1.bf16.xpose.msra.mxu0 0
        %988 = vmatprep.subr.bf16.mxu0 0
        %989 = vmatpush1.bf16.xpose.msra.mxu0 0
        %990 = vmatprep.mubr.bf16.mxu0 0
        %991 = vmatmul.mubr.bf16.gmra.mrb[0].mxu0 %v953
        %v992 = vpop.f32.mrb[0].mxu0
        %v993 = vadd.f32 0.0, %v992
        %v994 = vpop.f32.mrb[0].mxu0
        %v995 = vpop.f32.mrb[0].mxu0
        %v996 = vpop.f32.mrb[0].mxu0
        %997 = vdwg.mxu0
        %v1000 = vunpack.c.l.b16 %v687
        %v1001 = vunpack.c.l.b16 %v688
        %v1002 = vpack.c.b16 %v1001, %v1000
        %v1004 = vsel %vm696, %v673, 0
        %v1007 = vsel %vm696, %v1002, 0
        %1009 = vmatprep.subr.bf16.mxu0 0
        %1010 = vmatpush1.bf16.xpose.msra.mxu0 %v1007
        %1011 = vmatprep.subr.bf16.mxu0 0
        %1012 = vmatpush1.bf16.xpose.msra.mxu0 0
        %1013 = vmatprep.subr.bf16.mxu0 0
        %1014 = vmatpush1.bf16.xpose.msra.mxu0 0
        %1015 = vmatprep.subr.bf16.mxu0 0
        %1016 = vmatpush1.bf16.xpose.msra.mxu0 0
        %1017 = vmatprep.subr.bf16.mxu0 0
        %1018 = vmatpush1.bf16.xpose.msra.mxu0 0
        %1019 = vmatprep.subr.bf16.mxu0 0
        %1020 = vmatpush1.bf16.xpose.msra.mxu0 0
        %1021 = vmatprep.subr.bf16.mxu0 0
        %1022 = vmatpush1.bf16.xpose.msra.mxu0 0
        %1023 = vmatprep.subr.bf16.mxu0 0
        %1024 = vmatpush1.bf16.xpose.msra.mxu0 0
        %1025 = vmatprep.subr.bf16.mxu0 0
        %1026 = vmatpush1.bf16.xpose.msra.mxu0 0
        %1027 = vmatprep.subr.bf16.mxu0 0
        %1028 = vmatpush1.bf16.xpose.msra.mxu0 0
        %1029 = vmatprep.subr.bf16.mxu0 0
        %1030 = vmatpush1.bf16.xpose.msra.mxu0 0
        %1031 = vmatprep.subr.bf16.mxu0 0
        %1032 = vmatpush1.bf16.xpose.msra.mxu0 0
        %1033 = vmatprep.subr.bf16.mxu0 0
        %1034 = vmatpush1.bf16.xpose.msra.mxu0 0
        %1035 = vmatprep.subr.bf16.mxu0 0
        %1036 = vmatpush1.bf16.xpose.msra.mxu0 0
        %1037 = vmatprep.subr.bf16.mxu0 0
        %1038 = vmatpush1.bf16.xpose.msra.mxu0 0
        %1039 = vmatprep.subr.bf16.mxu0 0
        %1040 = vmatpush1.bf16.xpose.msra.mxu0 0
        %1041 = vmatprep.mubr.bf16.mxu0 0
        %1042 = vmatmul.mubr.bf16.gmra.mrb[0].mxu0 %v1004
        %v1043 = vpop.f32.mrb[0].mxu0
        %v1044 = vadd.f32 0.0, %v1043
        %v1045 = vpop.f32.mrb[0].mxu0
        %v1046 = vpop.f32.mrb[0].mxu0
        %v1047 = vpop.f32.mrb[0].mxu0
        %1048 = vdwg.mxu0
        %v1051 = vunpack.c.l.b16 %v689
        %v1052 = vunpack.c.l.b16 %v690
        %v1053 = vpack.c.b16 %v1052, %v1051
        %v1055 = vsel %vm696, %v674, 0
        %v1058 = vsel %vm696, %v1053, 0
        %1060 = vmatprep.subr.bf16.mxu0 0
        %1061 = vmatpush1.bf16.xpose.msra.mxu0 %v1058
        %1062 = vmatprep.subr.bf16.mxu0 0
        %1063 = vmatpush1.bf16.xpose.msra.mxu0 0
        %1064 = vmatprep.subr.bf16.mxu0 0
        %1065 = vmatpush1.bf16.xpose.msra.mxu0 0
        %1066 = vmatprep.subr.bf16.mxu0 0
        %1067 = vmatpush1.bf16.xpose.msra.mxu0 0
        %1068 = vmatprep.subr.bf16.mxu0 0
        %1069 = vmatpush1.bf16.xpose.msra.mxu0 0
        %1070 = vmatprep.subr.bf16.mxu0 0
        %1071 = vmatpush1.bf16.xpose.msra.mxu0 0
        %1072 = vmatprep.subr.bf16.mxu0 0
        %1073 = vmatpush1.bf16.xpose.msra.mxu0 0
        %1074 = vmatprep.subr.bf16.mxu0 0
        %1075 = vmatpush1.bf16.xpose.msra.mxu0 0
        %1076 = vmatprep.subr.bf16.mxu0 0
        %1077 = vmatpush1.bf16.xpose.msra.mxu0 0
        %1078 = vmatprep.subr.bf16.mxu0 0
        %1079 = vmatpush1.bf16.xpose.msra.mxu0 0
        %1080 = vmatprep.subr.bf16.mxu0 0
        %1081 = vmatpush1.bf16.xpose.msra.mxu0 0
        %1082 = vmatprep.subr.bf16.mxu0 0
        %1083 = vmatpush1.bf16.xpose.msra.mxu0 0
        %1084 = vmatprep.subr.bf16.mxu0 0
        %1085 = vmatpush1.bf16.xpose.msra.mxu0 0
        %1086 = vmatprep.subr.bf16.mxu0 0
        %1087 = vmatpush1.bf16.xpose.msra.mxu0 0
        %1088 = vmatprep.subr.bf16.mxu0 0
        %1089 = vmatpush1.bf16.xpose.msra.mxu0 0
        %1090 = vmatprep.subr.bf16.mxu0 0
        %1091 = vmatpush1.bf16.xpose.msra.mxu0 0
        %1092 = vmatprep.mubr.bf16.mxu0 0
        %1093 = vmatmul.mubr.bf16.gmra.mrb[0].mxu0 %v1055
        %v1094 = vpop.f32.mrb[0].mxu0
        %v1095 = vadd.f32 0.0, %v1094
        %v1096 = vpop.f32.mrb[0].mxu0
        %v1097 = vpop.f32.mrb[0].mxu0
        %v1098 = vpop.f32.mrb[0].mxu0
        %1099 = vdwg.mxu0
        %v1100 = vld [vmem:[%s2] sm:$0xff]
        %v1101 = vlaneseq
        %v1102 = vshrl.u32 %v1101, 7
        %v1103 = vsub.s32 0, %v1102
        %v1104 = vrot.slane %v738, %v1103
        %v1105 = vlaneseq
        %v1106 = vshrl.u32 %v1105, 7
        %v1107 = vsub.s32 0, %v1106
        %v1108 = vrot.slane %v789, %v1107
        %v1109 = vlaneseq
        %v1110 = vshrl.u32 %v1109, 7
        %v1111 = vsub.s32 0, %v1110
        %v1112 = vrot.slane %v840, %v1111
        %v1113 = vlaneseq
        %v1114 = vshrl.u32 %v1113, 7
        %v1115 = vsub.s32 0, %v1114
        %v1116 = vrot.slane %v891, %v1115
        %v1117 = vlaneseq
        %v1118 = vshrl.u32 %v1117, 7
        %v1119 = vsub.s32 0, %v1118
        %v1120 = vrot.slane %v942, %v1119
        %v1121 = vlaneseq
        %v1122 = vshrl.u32 %v1121, 7
        %v1123 = vsub.s32 0, %v1122
        %v1124 = vrot.slane %v993, %v1123
        %v1125 = vlaneseq
        %v1126 = vshrl.u32 %v1125, 7
        %v1127 = vsub.s32 0, %v1126
        %v1128 = vrot.slane %v1044, %v1127
        %v1129 = vlaneseq
        %v1130 = vshrl.u32 %v1129, 7
        %v1131 = vsub.s32 0, %v1130
        %v1132 = vrot.slane %v1095, %v1131
        %v1133 = vmul.f32 %v1104, %v1100
        %v1134 = vmul.f32 %v1108, %v1100
        %v1135 = vmul.f32 %v1112, %v1100
        %v1136 = vmul.f32 %v1116, %v1100
        %v1137 = vmul.f32 %v1120, %v1100
        %v1138 = vmul.f32 %v1124, %v1100
        %v1139 = vmul.f32 %v1128, %v1100
        %v1140 = vmul.f32 %v1132, %v1100
        %s1141 = scalar_lea.vmem %s2, 8
        %v1142 = vld [vmem:[%s1141] sm:$0xff]
        %v1143 = vlaneseq
        %v1144 = vshrl.u32 %v1143, 7
        %v1145 = vsub.s32 1, %v1144
        %v1146 = vrot.slane %v738, %v1145
        %v1147 = vlaneseq
        %v1148 = vshrl.u32 %v1147, 7
        %v1149 = vsub.s32 1, %v1148
        %v1150 = vrot.slane %v789, %v1149
        %v1151 = vlaneseq
        %v1152 = vshrl.u32 %v1151, 7
        %v1153 = vsub.s32 1, %v1152
        %v1154 = vrot.slane %v840, %v1153
        %v1155 = vlaneseq
        %v1156 = vshrl.u32 %v1155, 7
        %v1157 = vsub.s32 1, %v1156
        %v1158 = vrot.slane %v891, %v1157
        %v1159 = vlaneseq
        %v1160 = vshrl.u32 %v1159, 7
        %v1161 = vsub.s32 1, %v1160
        %v1162 = vrot.slane %v942, %v1161
        %v1163 = vlaneseq
        %v1164 = vshrl.u32 %v1163, 7
        %v1165 = vsub.s32 1, %v1164
        %v1166 = vrot.slane %v993, %v1165
        %v1167 = vlaneseq
        %v1168 = vshrl.u32 %v1167, 7
        %v1169 = vsub.s32 1, %v1168
        %v1170 = vrot.slane %v1044, %v1169
        %v1171 = vlaneseq
        %v1172 = vshrl.u32 %v1171, 7
        %v1173 = vsub.s32 1, %v1172
        %v1174 = vrot.slane %v1095, %v1173
        %v1175 = vmul.f32 %v1146, %v1142
        %v1176 = vmul.f32 %v1150, %v1142
        %v1177 = vmul.f32 %v1154, %v1142
        %v1178 = vmul.f32 %v1158, %v1142
        %v1179 = vmul.f32 %v1162, %v1142
        %v1180 = vmul.f32 %v1166, %v1142
        %v1181 = vmul.f32 %v1170, %v1142
        %v1182 = vmul.f32 %v1174, %v1142
        %v1183 = vadd.f32 %v1133, %v1175
        %v1184 = vadd.f32 %v1134, %v1176
        %v1185 = vadd.f32 %v1135, %v1177
        %v1186 = vadd.f32 %v1136, %v1178
        %v1187 = vadd.f32 %v1137, %v1179
        %v1188 = vadd.f32 %v1138, %v1180
        %v1189 = vadd.f32 %v1139, %v1181
        %v1190 = vadd.f32 %v1140, %v1182
        %v1191 = vld [vmem:[%s3] sm:$0xff]
        %1193 = vset.pattern.permute.xlu0 0
        %1194 = vperm.xlu0 %1193, %v1191
        %v1195 = vpop.permute.xlu0 %1194
        %v1197 = vadd.f32 %v1183, %v1195
        %v1198 = vadd.f32 %v1184, %v1195
        %v1199 = vadd.f32 %v1185, %v1195
        %v1200 = vadd.f32 %v1186, %v1195
        %v1201 = vadd.f32 %v1187, %v1195
        %v1202 = vadd.f32 %v1188, %v1195
        %v1203 = vadd.f32 %v1189, %v1195
        %v1204 = vadd.f32 %v1190, %v1195
        %v1205 = vmax.f32 %v1197, 0.0
        %v1206 = vmax.f32 %v1198, 0.0
        %v1207 = vmax.f32 %v1199, 0.0
        %v1208 = vmax.f32 %v1200, 0.0
        %v1209 = vmax.f32 %v1201, 0.0
        %v1210 = vmax.f32 %v1202, 0.0
        %v1211 = vmax.f32 %v1203, 0.0
        %v1212 = vmax.f32 %v1204, 0.0
        %v1213 = vpack.c.bf16 %v1205, %v1205
        %v1214 = vpack.c.bf16 %v1206, %v1206
        %v1215 = vpack.c.bf16 %v1207, %v1207
        %v1216 = vpack.c.bf16 %v1208, %v1208
        %v1217 = vpack.c.bf16 %v1209, %v1209
        %v1218 = vpack.c.bf16 %v1210, %v1210
        %v1219 = vpack.c.bf16 %v1211, %v1211
        %v1220 = vpack.c.bf16 %v1212, %v1212
        %v1221 = vld [vmem:[%s6] sm:$0xf]
        %v1222 = vld [vmem:[%s6 + $0x4] sm:$0xf]
        %s1223 = scalar_lea.vmem %s6, 8
        %v1224 = vld [vmem:[%s1223] sm:$0xf]
        %v1225 = vld [vmem:[%s1223 + $0x4] sm:$0xf]
        %v1234 = vunpack.c.l.b16 %v1213
        %v1235 = vunpack.c.l.b16 %v1214
        %v1236 = vunpack.c.l.b16 %v1215
        %v1237 = vunpack.c.l.b16 %v1216
        %v1238 = vunpack.c.l.b16 %v1217
        %v1239 = vunpack.c.l.b16 %v1218
        %v1240 = vunpack.c.l.b16 %v1219
        %v1241 = vunpack.c.l.b16 %v1220
        %v1242 = vrot.slane %v1234, 1
        %vm1243 = vcmask 1041409
        %v1244 = vsel %vm1243, %v1235, %v1242
        %v1245 = vrot.slane %v1236, 7
        %vm1246 = vcmask 1042434
        %v1247 = vsel %vm1246, %v1245, %v1244
        %v1248 = vrot.slane %v1237, 6
        %vm1249 = vcmask 1043459
        %v1250 = vsel %vm1249, %v1248, %v1247
        %v1251 = vrot.slane %v1238, 5
        %vm1252 = vcmask 1044484
        %v1253 = vsel %vm1252, %v1251, %v1250
        %v1254 = vrot.slane %v1239, 4
        %vm1255 = vcmask 1045509
        %v1256 = vsel %vm1255, %v1254, %v1253
        %v1257 = vrot.slane %v1240, 3
        %vm1258 = vcmask 1046534
        %v1259 = vsel %vm1258, %v1257, %v1256
        %v1260 = vrot.slane %v1241, 2
        %vm1261 = vcmask 1047559
        %v1262 = vsel %vm1261, %v1260, %v1259
        %v1263 = vpack.c.b16 %v1262, %v1262
        %v1266 = vunpack.c.l.b16 %v1224
        %v1267 = vunpack.c.l.b16 %v1225
        %v1268 = vpack.c.b16 %v1267, %v1266
        %v1271 = vsel %vm696, %v1263, 0
        %1273 = vmatprep.subr.bf16.mxu0 0
        %1274 = vmatpush1.bf16.msra.mxu0 %v1268
        %1275 = vmatprep.subr.bf16.mxu0 0
        %1276 = vmatpush1.bf16.msra.mxu0 0
        %1277 = vmatprep.subr.bf16.mxu0 0
        %1278 = vmatpush1.bf16.msra.mxu0 0
        %1279 = vmatprep.subr.bf16.mxu0 0
        %1280 = vmatpush1.bf16.msra.mxu0 0
        %1281 = vmatprep.subr.bf16.mxu0 0
        %1282 = vmatpush1.bf16.msra.mxu0 0
        %1283 = vmatprep.subr.bf16.mxu0 0
        %1284 = vmatpush1.bf16.msra.mxu0 0
        %1285 = vmatprep.subr.bf16.mxu0 0
        %1286 = vmatpush1.bf16.msra.mxu0 0
        %1287 = vmatprep.subr.bf16.mxu0 0
        %1288 = vmatpush1.bf16.msra.mxu0 0
        %1289 = vmatprep.subr.bf16.mxu0 0
        %1290 = vmatpush1.bf16.msra.mxu0 0
        %1291 = vmatprep.subr.bf16.mxu0 0
        %1292 = vmatpush1.bf16.msra.mxu0 0
        %1293 = vmatprep.subr.bf16.mxu0 0
        %1294 = vmatpush1.bf16.msra.mxu0 0
        %1295 = vmatprep.subr.bf16.mxu0 0
        %1296 = vmatpush1.bf16.msra.mxu0 0
        %1297 = vmatprep.subr.bf16.mxu0 0
        %1298 = vmatpush1.bf16.msra.mxu0 0
        %1299 = vmatprep.subr.bf16.mxu0 0
        %1300 = vmatpush1.bf16.msra.mxu0 0
        %1301 = vmatprep.subr.bf16.mxu0 0
        %1302 = vmatpush1.bf16.msra.mxu0 0
        %1303 = vmatprep.subr.bf16.mxu0 0
        %1304 = vmatpush1.bf16.msra.mxu0 0
        %1305 = vmatprep.mubr.bf16.mxu0 0
        %1306 = vmatmul.mubr.bf16.gmra.mrb[0].mxu0 %v1271
        %v1307 = vpop.f32.mrb[0].mxu0
        %v1308 = vadd.f32 0.0, %v1307
        %v1309 = vpop.f32.mrb[0].mxu0
        %v1310 = vpop.f32.mrb[0].mxu0
        %v1311 = vpop.f32.mrb[0].mxu0
        %1312 = vdwg.mxu0
        %v1313 = vrot.slane %v1235, 7
        %v1314 = vsel %vm1243, %v1313, %v1234
        %v1315 = vrot.slane %v1236, 6
        %v1316 = vsel %vm1246, %v1315, %v1314
        %v1317 = vrot.slane %v1237, 5
        %v1318 = vsel %vm1249, %v1317, %v1316
        %v1319 = vrot.slane %v1238, 4
        %v1320 = vsel %vm1252, %v1319, %v1318
        %v1321 = vrot.slane %v1239, 3
        %v1322 = vsel %vm1255, %v1321, %v1320
        %v1323 = vrot.slane %v1240, 2
        %v1324 = vsel %vm1258, %v1323, %v1322
        %v1325 = vrot.slane %v1241, 1
        %v1326 = vsel %vm1261, %v1325, %v1324
        %v1327 = vpack.c.b16 %v1326, %v1326
        %v1330 = vunpack.c.l.b16 %v1221
        %v1331 = vunpack.c.l.b16 %v1222
        %v1332 = vpack.c.b16 %v1331, %v1330
        %v1335 = vsel %vm696, %v1327, 0
        %1337 = vmatprep.subr.bf16.mxu0 0
        %1338 = vmatpush1.bf16.msra.mxu0 %v1332
        %1339 = vmatprep.subr.bf16.mxu0 0
        %1340 = vmatpush1.bf16.msra.mxu0 0
        %1341 = vmatprep.subr.bf16.mxu0 0
        %1342 = vmatpush1.bf16.msra.mxu0 0
        %1343 = vmatprep.subr.bf16.mxu0 0
        %1344 = vmatpush1.bf16.msra.mxu0 0
        %1345 = vmatprep.subr.bf16.mxu0 0
        %1346 = vmatpush1.bf16.msra.mxu0 0
        %1347 = vmatprep.subr.bf16.mxu0 0
        %1348 = vmatpush1.bf16.msra.mxu0 0
        %1349 = vmatprep.subr.bf16.mxu0 0
        %1350 = vmatpush1.bf16.msra.mxu0 0
        %1351 = vmatprep.subr.bf16.mxu0 0
        %1352 = vmatpush1.bf16.msra.mxu0 0
        %1353 = vmatprep.subr.bf16.mxu0 0
        %1354 = vmatpush1.bf16.msra.mxu0 0
        %1355 = vmatprep.subr.bf16.mxu0 0
        %1356 = vmatpush1.bf16.msra.mxu0 0
        %1357 = vmatprep.subr.bf16.mxu0 0
        %1358 = vmatpush1.bf16.msra.mxu0 0
        %1359 = vmatprep.subr.bf16.mxu0 0
        %1360 = vmatpush1.bf16.msra.mxu0 0
        %1361 = vmatprep.subr.bf16.mxu0 0
        %1362 = vmatpush1.bf16.msra.mxu0 0
        %1363 = vmatprep.subr.bf16.mxu0 0
        %1364 = vmatpush1.bf16.msra.mxu0 0
        %1365 = vmatprep.subr.bf16.mxu0 0
        %1366 = vmatpush1.bf16.msra.mxu0 0
        %1367 = vmatprep.subr.bf16.mxu0 0
        %1368 = vmatpush1.bf16.msra.mxu0 0
        %1369 = vmatprep.mubr.bf16.mxu0 0
        %1370 = vmatmul.mubr.bf16.gmra.mrb[0].mxu0 %v1335
        %v1371 = vpop.f32.mrb[0].mxu0
        %v1372 = vadd.f32 %v1308, %v1371
        %v1373 = vpop.f32.mrb[0].mxu0
        %v1374 = vpop.f32.mrb[0].mxu0
        %v1375 = vpop.f32.mrb[0].mxu0
        %1376 = vdwg.mxu0
        %s1377 = scalar_lea.vmem %s6, 16
        %v1378 = vld [vmem:[%s1377] sm:$0xf]
        %v1379 = vld [vmem:[%s1377 + $0x4] sm:$0xf]
        %v1380 = vrot.slane %v1234, 2
        %v1381 = vrot.slane %v1235, 1
        %v1382 = vsel %vm1243, %v1381, %v1380
        %v1383 = vsel %vm1246, %v1236, %v1382
        %v1384 = vrot.slane %v1237, 7
        %v1385 = vsel %vm1249, %v1384, %v1383
        %v1386 = vrot.slane %v1238, 6
        %v1387 = vsel %vm1252, %v1386, %v1385
        %v1388 = vrot.slane %v1239, 5
        %v1389 = vsel %vm1255, %v1388, %v1387
        %v1390 = vrot.slane %v1240, 4
        %v1391 = vsel %vm1258, %v1390, %v1389
        %v1392 = vrot.slane %v1241, 3
        %v1393 = vsel %vm1261, %v1392, %v1391
        %v1394 = vpack.c.b16 %v1393, %v1393
        %v1397 = vunpack.c.l.b16 %v1378
        %v1398 = vunpack.c.l.b16 %v1379
        %v1399 = vpack.c.b16 %v1398, %v1397
        %v1402 = vsel %vm696, %v1394, 0
        %1404 = vmatprep.subr.bf16.mxu0 0
        %1405 = vmatpush1.bf16.msra.mxu0 %v1399
        %1406 = vmatprep.subr.bf16.mxu0 0
        %1407 = vmatpush1.bf16.msra.mxu0 0
        %1408 = vmatprep.subr.bf16.mxu0 0
        %1409 = vmatpush1.bf16.msra.mxu0 0
        %1410 = vmatprep.subr.bf16.mxu0 0
        %1411 = vmatpush1.bf16.msra.mxu0 0
        %1412 = vmatprep.subr.bf16.mxu0 0
        %1413 = vmatpush1.bf16.msra.mxu0 0
        %1414 = vmatprep.subr.bf16.mxu0 0
        %1415 = vmatpush1.bf16.msra.mxu0 0
        %1416 = vmatprep.subr.bf16.mxu0 0
        %1417 = vmatpush1.bf16.msra.mxu0 0
        %1418 = vmatprep.subr.bf16.mxu0 0
        %1419 = vmatpush1.bf16.msra.mxu0 0
        %1420 = vmatprep.subr.bf16.mxu0 0
        %1421 = vmatpush1.bf16.msra.mxu0 0
        %1422 = vmatprep.subr.bf16.mxu0 0
        %1423 = vmatpush1.bf16.msra.mxu0 0
        %1424 = vmatprep.subr.bf16.mxu0 0
        %1425 = vmatpush1.bf16.msra.mxu0 0
        %1426 = vmatprep.subr.bf16.mxu0 0
        %1427 = vmatpush1.bf16.msra.mxu0 0
        %1428 = vmatprep.subr.bf16.mxu0 0
        %1429 = vmatpush1.bf16.msra.mxu0 0
        %1430 = vmatprep.subr.bf16.mxu0 0
        %1431 = vmatpush1.bf16.msra.mxu0 0
        %1432 = vmatprep.subr.bf16.mxu0 0
        %1433 = vmatpush1.bf16.msra.mxu0 0
        %1434 = vmatprep.subr.bf16.mxu0 0
        %1435 = vmatpush1.bf16.msra.mxu0 0
        %1436 = vmatprep.mubr.bf16.mxu0 0
        %1437 = vmatmul.mubr.bf16.gmra.mrb[0].mxu0 %v1402
        %v1438 = vpop.f32.mrb[0].mxu0
        %v1439 = vadd.f32 0.0, %v1438
        %v1440 = vpop.f32.mrb[0].mxu0
        %v1441 = vpop.f32.mrb[0].mxu0
        %v1442 = vpop.f32.mrb[0].mxu0
        %1443 = vdwg.mxu0
        %v1444 = vadd.f32 %v1372, %v1439
        %s1445 = scalar_lea.vmem %s6, 24
        %v1446 = vld [vmem:[%s1445] sm:$0xf]
        %v1447 = vld [vmem:[%s1445 + $0x4] sm:$0xf]
        %v1448 = vrot.slane %v1234, 3
        %v1449 = vrot.slane %v1235, 2
        %v1450 = vsel %vm1243, %v1449, %v1448
        %v1451 = vrot.slane %v1236, 1
        %v1452 = vsel %vm1246, %v1451, %v1450
        %v1453 = vsel %vm1249, %v1237, %v1452
        %v1454 = vrot.slane %v1238, 7
        %v1455 = vsel %vm1252, %v1454, %v1453
        %v1456 = vrot.slane %v1239, 6
        %v1457 = vsel %vm1255, %v1456, %v1455
        %v1458 = vrot.slane %v1240, 5
        %v1459 = vsel %vm1258, %v1458, %v1457
        %v1460 = vrot.slane %v1241, 4
        %v1461 = vsel %vm1261, %v1460, %v1459
        %v1462 = vpack.c.b16 %v1461, %v1461
        %v1465 = vunpack.c.l.b16 %v1446
        %v1466 = vunpack.c.l.b16 %v1447
        %v1467 = vpack.c.b16 %v1466, %v1465
        %v1470 = vsel %vm696, %v1462, 0
        %1472 = vmatprep.subr.bf16.mxu0 0
        %1473 = vmatpush1.bf16.msra.mxu0 %v1467
        %1474 = vmatprep.subr.bf16.mxu0 0
        %1475 = vmatpush1.bf16.msra.mxu0 0
        %1476 = vmatprep.subr.bf16.mxu0 0
        %1477 = vmatpush1.bf16.msra.mxu0 0
        %1478 = vmatprep.subr.bf16.mxu0 0
        %1479 = vmatpush1.bf16.msra.mxu0 0
        %1480 = vmatprep.subr.bf16.mxu0 0
        %1481 = vmatpush1.bf16.msra.mxu0 0
        %1482 = vmatprep.subr.bf16.mxu0 0
        %1483 = vmatpush1.bf16.msra.mxu0 0
        %1484 = vmatprep.subr.bf16.mxu0 0
        %1485 = vmatpush1.bf16.msra.mxu0 0
        %1486 = vmatprep.subr.bf16.mxu0 0
        %1487 = vmatpush1.bf16.msra.mxu0 0
        %1488 = vmatprep.subr.bf16.mxu0 0
        %1489 = vmatpush1.bf16.msra.mxu0 0
        %1490 = vmatprep.subr.bf16.mxu0 0
        %1491 = vmatpush1.bf16.msra.mxu0 0
        %1492 = vmatprep.subr.bf16.mxu0 0
        %1493 = vmatpush1.bf16.msra.mxu0 0
        %1494 = vmatprep.subr.bf16.mxu0 0
        %1495 = vmatpush1.bf16.msra.mxu0 0
        %1496 = vmatprep.subr.bf16.mxu0 0
        %1497 = vmatpush1.bf16.msra.mxu0 0
        %1498 = vmatprep.subr.bf16.mxu0 0
        %1499 = vmatpush1.bf16.msra.mxu0 0
        %1500 = vmatprep.subr.bf16.mxu0 0
        %1501 = vmatpush1.bf16.msra.mxu0 0
        %1502 = vmatprep.subr.bf16.mxu0 0
        %1503 = vmatpush1.bf16.msra.mxu0 0
        %1504 = vmatprep.mubr.bf16.mxu0 0
        %1505 = vmatmul.mubr.bf16.gmra.mrb[0].mxu0 %v1470
        %v1506 = vpop.f32.mrb[0].mxu0
        %v1507 = vadd.f32 0.0, %v1506
        %v1508 = vpop.f32.mrb[0].mxu0
        %v1509 = vpop.f32.mrb[0].mxu0
        %v1510 = vpop.f32.mrb[0].mxu0
        %1511 = vdwg.mxu0
        %v1512 = vadd.f32 %v1444, %v1507
        %s1513 = scalar_lea.vmem %s6, 32
        %v1514 = vld [vmem:[%s1513] sm:$0xf]
        %v1515 = vld [vmem:[%s1513 + $0x4] sm:$0xf]
        %v1516 = vrot.slane %v1234, 4
        %v1517 = vrot.slane %v1235, 3
        %v1518 = vsel %vm1243, %v1517, %v1516
        %v1519 = vrot.slane %v1236, 2
        %v1520 = vsel %vm1246, %v1519, %v1518
        %v1521 = vrot.slane %v1237, 1
        %v1522 = vsel %vm1249, %v1521, %v1520
        %v1523 = vsel %vm1252, %v1238, %v1522
        %v1524 = vrot.slane %v1239, 7
        %v1525 = vsel %vm1255, %v1524, %v1523
        %v1526 = vrot.slane %v1240, 6
        %v1527 = vsel %vm1258, %v1526, %v1525
        %v1528 = vrot.slane %v1241, 5
        %v1529 = vsel %vm1261, %v1528, %v1527
        %v1530 = vpack.c.b16 %v1529, %v1529
        %v1533 = vunpack.c.l.b16 %v1514
        %v1534 = vunpack.c.l.b16 %v1515
        %v1535 = vpack.c.b16 %v1534, %v1533
        %v1538 = vsel %vm696, %v1530, 0
        %1540 = vmatprep.subr.bf16.mxu0 0
        %1541 = vmatpush1.bf16.msra.mxu0 %v1535
        %1542 = vmatprep.subr.bf16.mxu0 0
        %1543 = vmatpush1.bf16.msra.mxu0 0
        %1544 = vmatprep.subr.bf16.mxu0 0
        %1545 = vmatpush1.bf16.msra.mxu0 0
        %1546 = vmatprep.subr.bf16.mxu0 0
        %1547 = vmatpush1.bf16.msra.mxu0 0
        %1548 = vmatprep.subr.bf16.mxu0 0
        %1549 = vmatpush1.bf16.msra.mxu0 0
        %1550 = vmatprep.subr.bf16.mxu0 0
        %1551 = vmatpush1.bf16.msra.mxu0 0
        %1552 = vmatprep.subr.bf16.mxu0 0
        %1553 = vmatpush1.bf16.msra.mxu0 0
        %1554 = vmatprep.subr.bf16.mxu0 0
        %1555 = vmatpush1.bf16.msra.mxu0 0
        %1556 = vmatprep.subr.bf16.mxu0 0
        %1557 = vmatpush1.bf16.msra.mxu0 0
        %1558 = vmatprep.subr.bf16.mxu0 0
        %1559 = vmatpush1.bf16.msra.mxu0 0
        %1560 = vmatprep.subr.bf16.mxu0 0
        %1561 = vmatpush1.bf16.msra.mxu0 0
        %1562 = vmatprep.subr.bf16.mxu0 0
        %1563 = vmatpush1.bf16.msra.mxu0 0
        %1564 = vmatprep.subr.bf16.mxu0 0
        %1565 = vmatpush1.bf16.msra.mxu0 0
        %1566 = vmatprep.subr.bf16.mxu0 0
        %1567 = vmatpush1.bf16.msra.mxu0 0
        %1568 = vmatprep.subr.bf16.mxu0 0
        %1569 = vmatpush1.bf16.msra.mxu0 0
        %1570 = vmatprep.subr.bf16.mxu0 0
        %1571 = vmatpush1.bf16.msra.mxu0 0
        %1572 = vmatprep.mubr.bf16.mxu0 0
        %1573 = vmatmul.mubr.bf16.gmra.mrb[0].mxu0 %v1538
        %v1574 = vpop.f32.mrb[0].mxu0
        %v1575 = vadd.f32 0.0, %v1574
        %v1576 = vpop.f32.mrb[0].mxu0
        %v1577 = vpop.f32.mrb[0].mxu0
        %v1578 = vpop.f32.mrb[0].mxu0
        %1579 = vdwg.mxu0
        %v1580 = vadd.f32 %v1512, %v1575
        %s1581 = scalar_lea.vmem %s6, 40
        %v1582 = vld [vmem:[%s1581] sm:$0xf]
        %v1583 = vld [vmem:[%s1581 + $0x4] sm:$0xf]
        %v1584 = vrot.slane %v1234, 5
        %v1585 = vrot.slane %v1235, 4
        %v1586 = vsel %vm1243, %v1585, %v1584
        %v1587 = vrot.slane %v1236, 3
        %v1588 = vsel %vm1246, %v1587, %v1586
        %v1589 = vrot.slane %v1237, 2
        %v1590 = vsel %vm1249, %v1589, %v1588
        %v1591 = vrot.slane %v1238, 1
        %v1592 = vsel %vm1252, %v1591, %v1590
        %v1593 = vsel %vm1255, %v1239, %v1592
        %v1594 = vrot.slane %v1240, 7
        %v1595 = vsel %vm1258, %v1594, %v1593
        %v1596 = vrot.slane %v1241, 6
        %v1597 = vsel %vm1261, %v1596, %v1595
        %v1598 = vpack.c.b16 %v1597, %v1597
        %v1601 = vunpack.c.l.b16 %v1582
        %v1602 = vunpack.c.l.b16 %v1583
        %v1603 = vpack.c.b16 %v1602, %v1601
        %v1606 = vsel %vm696, %v1598, 0
        %1608 = vmatprep.subr.bf16.mxu0 0
        %1609 = vmatpush1.bf16.msra.mxu0 %v1603
        %1610 = vmatprep.subr.bf16.mxu0 0
        %1611 = vmatpush1.bf16.msra.mxu0 0
        %1612 = vmatprep.subr.bf16.mxu0 0
        %1613 = vmatpush1.bf16.msra.mxu0 0
        %1614 = vmatprep.subr.bf16.mxu0 0
        %1615 = vmatpush1.bf16.msra.mxu0 0
        %1616 = vmatprep.subr.bf16.mxu0 0
        %1617 = vmatpush1.bf16.msra.mxu0 0
        %1618 = vmatprep.subr.bf16.mxu0 0
        %1619 = vmatpush1.bf16.msra.mxu0 0
        %1620 = vmatprep.subr.bf16.mxu0 0
        %1621 = vmatpush1.bf16.msra.mxu0 0
        %1622 = vmatprep.subr.bf16.mxu0 0
        %1623 = vmatpush1.bf16.msra.mxu0 0
        %1624 = vmatprep.subr.bf16.mxu0 0
        %1625 = vmatpush1.bf16.msra.mxu0 0
        %1626 = vmatprep.subr.bf16.mxu0 0
        %1627 = vmatpush1.bf16.msra.mxu0 0
        %1628 = vmatprep.subr.bf16.mxu0 0
        %1629 = vmatpush1.bf16.msra.mxu0 0
        %1630 = vmatprep.subr.bf16.mxu0 0
        %1631 = vmatpush1.bf16.msra.mxu0 0
        %1632 = vmatprep.subr.bf16.mxu0 0
        %1633 = vmatpush1.bf16.msra.mxu0 0
        %1634 = vmatprep.subr.bf16.mxu0 0
        %1635 = vmatpush1.bf16.msra.mxu0 0
        %1636 = vmatprep.subr.bf16.mxu0 0
        %1637 = vmatpush1.bf16.msra.mxu0 0
        %1638 = vmatprep.subr.bf16.mxu0 0
        %1639 = vmatpush1.bf16.msra.mxu0 0
        %1640 = vmatprep.mubr.bf16.mxu0 0
        %1641 = vmatmul.mubr.bf16.gmra.mrb[0].mxu0 %v1606
        %v1642 = vpop.f32.mrb[0].mxu0
        %v1643 = vadd.f32 0.0, %v1642
        %v1644 = vpop.f32.mrb[0].mxu0
        %v1645 = vpop.f32.mrb[0].mxu0
        %v1646 = vpop.f32.mrb[0].mxu0
        %1647 = vdwg.mxu0
        %v1648 = vadd.f32 %v1580, %v1643
        %s1649 = scalar_lea.vmem %s6, 48
        %v1650 = vld [vmem:[%s1649] sm:$0xf]
        %v1651 = vld [vmem:[%s1649 + $0x4] sm:$0xf]
        %v1652 = vrot.slane %v1234, 6
        %v1653 = vrot.slane %v1235, 5
        %v1654 = vsel %vm1243, %v1653, %v1652
        %v1655 = vrot.slane %v1236, 4
        %v1656 = vsel %vm1246, %v1655, %v1654
        %v1657 = vrot.slane %v1237, 3
        %v1658 = vsel %vm1249, %v1657, %v1656
        %v1659 = vrot.slane %v1238, 2
        %v1660 = vsel %vm1252, %v1659, %v1658
        %v1661 = vrot.slane %v1239, 1
        %v1662 = vsel %vm1255, %v1661, %v1660
        %v1663 = vsel %vm1258, %v1240, %v1662
        %v1664 = vrot.slane %v1241, 7
        %v1665 = vsel %vm1261, %v1664, %v1663
        %v1666 = vpack.c.b16 %v1665, %v1665
        %v1669 = vunpack.c.l.b16 %v1650
        %v1670 = vunpack.c.l.b16 %v1651
        %v1671 = vpack.c.b16 %v1670, %v1669
        %v1674 = vsel %vm696, %v1666, 0
        %1676 = vmatprep.subr.bf16.mxu0 0
        %1677 = vmatpush1.bf16.msra.mxu0 %v1671
        %1678 = vmatprep.subr.bf16.mxu0 0
        %1679 = vmatpush1.bf16.msra.mxu0 0
        %1680 = vmatprep.subr.bf16.mxu0 0
        %1681 = vmatpush1.bf16.msra.mxu0 0
        %1682 = vmatprep.subr.bf16.mxu0 0
        %1683 = vmatpush1.bf16.msra.mxu0 0
        %1684 = vmatprep.subr.bf16.mxu0 0
        %1685 = vmatpush1.bf16.msra.mxu0 0
        %1686 = vmatprep.subr.bf16.mxu0 0
        %1687 = vmatpush1.bf16.msra.mxu0 0
        %1688 = vmatprep.subr.bf16.mxu0 0
        %1689 = vmatpush1.bf16.msra.mxu0 0
        %1690 = vmatprep.subr.bf16.mxu0 0
        %1691 = vmatpush1.bf16.msra.mxu0 0
        %1692 = vmatprep.subr.bf16.mxu0 0
        %1693 = vmatpush1.bf16.msra.mxu0 0
        %1694 = vmatprep.subr.bf16.mxu0 0
        %1695 = vmatpush1.bf16.msra.mxu0 0
        %1696 = vmatprep.subr.bf16.mxu0 0
        %1697 = vmatpush1.bf16.msra.mxu0 0
        %1698 = vmatprep.subr.bf16.mxu0 0
        %1699 = vmatpush1.bf16.msra.mxu0 0
        %1700 = vmatprep.subr.bf16.mxu0 0
        %1701 = vmatpush1.bf16.msra.mxu0 0
        %1702 = vmatprep.subr.bf16.mxu0 0
        %1703 = vmatpush1.bf16.msra.mxu0 0
        %1704 = vmatprep.subr.bf16.mxu0 0
        %1705 = vmatpush1.bf16.msra.mxu0 0
        %1706 = vmatprep.subr.bf16.mxu0 0
        %1707 = vmatpush1.bf16.msra.mxu0 0
        %1708 = vmatprep.mubr.bf16.mxu0 0
        %1709 = vmatmul.mubr.bf16.gmra.mrb[0].mxu0 %v1674
        %v1710 = vpop.f32.mrb[0].mxu0
        %v1711 = vadd.f32 0.0, %v1710
        %v1712 = vpop.f32.mrb[0].mxu0
        %v1713 = vpop.f32.mrb[0].mxu0
        %v1714 = vpop.f32.mrb[0].mxu0
        %1715 = vdwg.mxu0
        %v1716 = vadd.f32 %v1648, %v1711
        %s1717 = scalar_lea.vmem %s6, 56
        %v1718 = vld [vmem:[%s1717] sm:$0xf]
        %v1719 = vld [vmem:[%s1717 + $0x4] sm:$0xf]
        %v1720 = vrot.slane %v1234, 7
        %v1721 = vrot.slane %v1235, 6
        %v1722 = vsel %vm1243, %v1721, %v1720
        %v1723 = vrot.slane %v1236, 5
        %v1724 = vsel %vm1246, %v1723, %v1722
        %v1725 = vrot.slane %v1237, 4
        %v1726 = vsel %vm1249, %v1725, %v1724
        %v1727 = vrot.slane %v1238, 3
        %v1728 = vsel %vm1252, %v1727, %v1726
        %v1729 = vrot.slane %v1239, 2
        %v1730 = vsel %vm1255, %v1729, %v1728
        %v1731 = vrot.slane %v1240, 1
        %v1732 = vsel %vm1258, %v1731, %v1730
        %v1733 = vsel %vm1261, %v1241, %v1732
        %v1734 = vpack.c.b16 %v1733, %v1733
        %v1737 = vunpack.c.l.b16 %v1718
        %v1738 = vunpack.c.l.b16 %v1719
        %v1739 = vpack.c.b16 %v1738, %v1737
        %v1742 = vsel %vm696, %v1734, 0
        %1744 = vmatprep.subr.bf16.mxu0 0
        %1745 = vmatpush1.bf16.msra.mxu0 %v1739
        %1746 = vmatprep.subr.bf16.mxu0 0
        %1747 = vmatpush1.bf16.msra.mxu0 0
        %1748 = vmatprep.subr.bf16.mxu0 0
        %1749 = vmatpush1.bf16.msra.mxu0 0
        %1750 = vmatprep.subr.bf16.mxu0 0
        %1751 = vmatpush1.bf16.msra.mxu0 0
        %1752 = vmatprep.subr.bf16.mxu0 0
        %1753 = vmatpush1.bf16.msra.mxu0 0
        %1754 = vmatprep.subr.bf16.mxu0 0
        %1755 = vmatpush1.bf16.msra.mxu0 0
        %1756 = vmatprep.subr.bf16.mxu0 0
        %1757 = vmatpush1.bf16.msra.mxu0 0
        %1758 = vmatprep.subr.bf16.mxu0 0
        %1759 = vmatpush1.bf16.msra.mxu0 0
        %1760 = vmatprep.subr.bf16.mxu0 0
        %1761 = vmatpush1.bf16.msra.mxu0 0
        %1762 = vmatprep.subr.bf16.mxu0 0
        %1763 = vmatpush1.bf16.msra.mxu0 0
        %1764 = vmatprep.subr.bf16.mxu0 0
        %1765 = vmatpush1.bf16.msra.mxu0 0
        %1766 = vmatprep.subr.bf16.mxu0 0
        %1767 = vmatpush1.bf16.msra.mxu0 0
        %1768 = vmatprep.subr.bf16.mxu0 0
        %1769 = vmatpush1.bf16.msra.mxu0 0
        %1770 = vmatprep.subr.bf16.mxu0 0
        %1771 = vmatpush1.bf16.msra.mxu0 0
        %1772 = vmatprep.subr.bf16.mxu0 0
        %1773 = vmatpush1.bf16.msra.mxu0 0
        %1774 = vmatprep.subr.bf16.mxu0 0
        %1775 = vmatpush1.bf16.msra.mxu0 0
        %1776 = vmatprep.mubr.bf16.mxu0 0
        %1777 = vmatmul.mubr.bf16.gmra.mrb[0].mxu0 %v1742
        %v1778 = vpop.f32.mrb[0].mxu0
        %v1779 = vadd.f32 0.0, %v1778
        %v1780 = vpop.f32.mrb[0].mxu0
        %v1781 = vpop.f32.mrb[0].mxu0
        %v1782 = vpop.f32.mrb[0].mxu0
        %1783 = vdwg.mxu0
        %v1784 = vadd.f32 %v1716, %v1779
        %s1785 = scalar_lea.vmem %s609, 8 [#allocation2]
        %v1786 = vld [vmem:[%s1785] sm:$0x1]
        %v1787 = vld [vmem:[%s1785 + $0x1] sm:$0x1]
        %v1788 = vld [vmem:[%s1785 + $0x2] sm:$0x1]
        %v1789 = vld [vmem:[%s1785 + $0x3] sm:$0x1]
        %v1790 = vld [vmem:[%s1785 + $0x4] sm:$0x1]
        %v1791 = vld [vmem:[%s1785 + $0x5] sm:$0x1]
        %v1792 = vld [vmem:[%s1785 + $0x6] sm:$0x1]
        %v1793 = vld [vmem:[%s1785 + $0x7] sm:$0x1]
        %s1794 = scalar_lea.vmem %s616, 64 [#allocation3]
        %v1795 = vld [vmem:[%s1794] sm:$0xf]
        %v1796 = vld [vmem:[%s1794 + $0x4] sm:$0xf]
        %v1797 = vld [vmem:[%s1794 + $0x8] sm:$0xf]
        %v1798 = vld [vmem:[%s1794 + $0xc] sm:$0xf]
        %v1799 = vld [vmem:[%s1794 + $0x10] sm:$0xf]
        %v1800 = vld [vmem:[%s1794 + $0x14] sm:$0xf]
        %v1801 = vld [vmem:[%s1794 + $0x18] sm:$0xf]
        %v1802 = vld [vmem:[%s1794 + $0x1c] sm:$0xf]
        %v1803 = vld [vmem:[%s1794 + $0x20] sm:$0xf]
        %v1804 = vld [vmem:[%s1794 + $0x24] sm:$0xf]
        %v1805 = vld [vmem:[%s1794 + $0x28] sm:$0xf]
        %v1806 = vld [vmem:[%s1794 + $0x2c] sm:$0xf]
        %v1807 = vld [vmem:[%s1794 + $0x30] sm:$0xf]
        %v1808 = vld [vmem:[%s1794 + $0x34] sm:$0xf]
        %v1809 = vld [vmem:[%s1794 + $0x38] sm:$0xf]
        %v1810 = vld [vmem:[%s1794 + $0x3c] sm:$0xf]
        %v1813 = vunpack.c.l.b16 %v1795
        %v1814 = vunpack.c.l.b16 %v1796
        %v1815 = vpack.c.b16 %v1814, %v1813
        %v1817 = vsel %vm696, %v1786, 0
        %v1820 = vsel %vm696, %v1815, 0
        %1822 = vmatprep.subr.bf16.mxu0 0
        %1823 = vmatpush1.bf16.xpose.msra.mxu0 %v1820
        %1824 = vmatprep.subr.bf16.mxu0 0
        %1825 = vmatpush1.bf16.xpose.msra.mxu0 0
        %1826 = vmatprep.subr.bf16.mxu0 0
        %1827 = vmatpush1.bf16.xpose.msra.mxu0 0
        %1828 = vmatprep.subr.bf16.mxu0 0
        %1829 = vmatpush1.bf16.xpose.msra.mxu0 0
        %1830 = vmatprep.subr.bf16.mxu0 0
        %1831 = vmatpush1.bf16.xpose.msra.mxu0 0
        %1832 = vmatprep.subr.bf16.mxu0 0
        %1833 = vmatpush1.bf16.xpose.msra.mxu0 0
        %1834 = vmatprep.subr.bf16.mxu0 0
        %1835 = vmatpush1.bf16.xpose.msra.mxu0 0
        %1836 = vmatprep.subr.bf16.mxu0 0
        %1837 = vmatpush1.bf16.xpose.msra.mxu0 0
        %1838 = vmatprep.subr.bf16.mxu0 0
        %1839 = vmatpush1.bf16.xpose.msra.mxu0 0
        %1840 = vmatprep.subr.bf16.mxu0 0
        %1841 = vmatpush1.bf16.xpose.msra.mxu0 0
        %1842 = vmatprep.subr.bf16.mxu0 0
        %1843 = vmatpush1.bf16.xpose.msra.mxu0 0
        %1844 = vmatprep.subr.bf16.mxu0 0
        %1845 = vmatpush1.bf16.xpose.msra.mxu0 0
        %1846 = vmatprep.subr.bf16.mxu0 0
        %1847 = vmatpush1.bf16.xpose.msra.mxu0 0
        %1848 = vmatprep.subr.bf16.mxu0 0
        %1849 = vmatpush1.bf16.xpose.msra.mxu0 0
        %1850 = vmatprep.subr.bf16.mxu0 0
        %1851 = vmatpush1.bf16.xpose.msra.mxu0 0
        %1852 = vmatprep.subr.bf16.mxu0 0
        %1853 = vmatpush1.bf16.xpose.msra.mxu0 0
        %1854 = vmatprep.mubr.bf16.mxu0 0
        %1855 = vmatmul.mubr.bf16.gmra.mrb[0].mxu0 %v1817
        %v1856 = vpop.f32.mrb[0].mxu0
        %v1857 = vadd.f32 0.0, %v1856
        %v1858 = vpop.f32.mrb[0].mxu0
        %v1859 = vpop.f32.mrb[0].mxu0
        %v1860 = vpop.f32.mrb[0].mxu0
        %1861 = vdwg.mxu0
        %v1864 = vunpack.c.l.b16 %v1797
        %v1865 = vunpack.c.l.b16 %v1798
        %v1866 = vpack.c.b16 %v1865, %v1864
        %v1868 = vsel %vm696, %v1787, 0
        %v1871 = vsel %vm696, %v1866, 0
        %1873 = vmatprep.subr.bf16.mxu0 0
        %1874 = vmatpush1.bf16.xpose.msra.mxu0 %v1871
        %1875 = vmatprep.subr.bf16.mxu0 0
        %1876 = vmatpush1.bf16.xpose.msra.mxu0 0
        %1877 = vmatprep.subr.bf16.mxu0 0
        %1878 = vmatpush1.bf16.xpose.msra.mxu0 0
        %1879 = vmatprep.subr.bf16.mxu0 0
        %1880 = vmatpush1.bf16.xpose.msra.mxu0 0
        %1881 = vmatprep.subr.bf16.mxu0 0
        %1882 = vmatpush1.bf16.xpose.msra.mxu0 0
        %1883 = vmatprep.subr.bf16.mxu0 0
        %1884 = vmatpush1.bf16.xpose.msra.mxu0 0
        %1885 = vmatprep.subr.bf16.mxu0 0
        %1886 = vmatpush1.bf16.xpose.msra.mxu0 0
        %1887 = vmatprep.subr.bf16.mxu0 0
        %1888 = vmatpush1.bf16.xpose.msra.mxu0 0
        %1889 = vmatprep.subr.bf16.mxu0 0
        %1890 = vmatpush1.bf16.xpose.msra.mxu0 0
        %1891 = vmatprep.subr.bf16.mxu0 0
        %1892 = vmatpush1.bf16.xpose.msra.mxu0 0
        %1893 = vmatprep.subr.bf16.mxu0 0
        %1894 = vmatpush1.bf16.xpose.msra.mxu0 0
        %1895 = vmatprep.subr.bf16.mxu0 0
        %1896 = vmatpush1.bf16.xpose.msra.mxu0 0
        %1897 = vmatprep.subr.bf16.mxu0 0
        %1898 = vmatpush1.bf16.xpose.msra.mxu0 0
        %1899 = vmatprep.subr.bf16.mxu0 0
        %1900 = vmatpush1.bf16.xpose.msra.mxu0 0
        %1901 = vmatprep.subr.bf16.mxu0 0
        %1902 = vmatpush1.bf16.xpose.msra.mxu0 0
        %1903 = vmatprep.subr.bf16.mxu0 0
        %1904 = vmatpush1.bf16.xpose.msra.mxu0 0
        %1905 = vmatprep.mubr.bf16.mxu0 0
        %1906 = vmatmul.mubr.bf16.gmra.mrb[0].mxu0 %v1868
        %v1907 = vpop.f32.mrb[0].mxu0
        %v1908 = vadd.f32 0.0, %v1907
        %v1909 = vpop.f32.mrb[0].mxu0
        %v1910 = vpop.f32.mrb[0].mxu0
        %v1911 = vpop.f32.mrb[0].mxu0
        %1912 = vdwg.mxu0
        %v1915 = vunpack.c.l.b16 %v1799
        %v1916 = vunpack.c.l.b16 %v1800
        %v1917 = vpack.c.b16 %v1916, %v1915
        %v1919 = vsel %vm696, %v1788, 0
        %v1922 = vsel %vm696, %v1917, 0
        %1924 = vmatprep.subr.bf16.mxu0 0
        %1925 = vmatpush1.bf16.xpose.msra.mxu0 %v1922
        %1926 = vmatprep.subr.bf16.mxu0 0
        %1927 = vmatpush1.bf16.xpose.msra.mxu0 0
        %1928 = vmatprep.subr.bf16.mxu0 0
        %1929 = vmatpush1.bf16.xpose.msra.mxu0 0
        %1930 = vmatprep.subr.bf16.mxu0 0
        %1931 = vmatpush1.bf16.xpose.msra.mxu0 0
        %1932 = vmatprep.subr.bf16.mxu0 0
        %1933 = vmatpush1.bf16.xpose.msra.mxu0 0
        %1934 = vmatprep.subr.bf16.mxu0 0
        %1935 = vmatpush1.bf16.xpose.msra.mxu0 0
        %1936 = vmatprep.subr.bf16.mxu0 0
        %1937 = vmatpush1.bf16.xpose.msra.mxu0 0
        %1938 = vmatprep.subr.bf16.mxu0 0
        %1939 = vmatpush1.bf16.xpose.msra.mxu0 0
        %1940 = vmatprep.subr.bf16.mxu0 0
        %1941 = vmatpush1.bf16.xpose.msra.mxu0 0
        %1942 = vmatprep.subr.bf16.mxu0 0
        %1943 = vmatpush1.bf16.xpose.msra.mxu0 0
        %1944 = vmatprep.subr.bf16.mxu0 0
        %1945 = vmatpush1.bf16.xpose.msra.mxu0 0
        %1946 = vmatprep.subr.bf16.mxu0 0
        %1947 = vmatpush1.bf16.xpose.msra.mxu0 0
        %1948 = vmatprep.subr.bf16.mxu0 0
        %1949 = vmatpush1.bf16.xpose.msra.mxu0 0
        %1950 = vmatprep.subr.bf16.mxu0 0
        %1951 = vmatpush1.bf16.xpose.msra.mxu0 0
        %1952 = vmatprep.subr.bf16.mxu0 0
        %1953 = vmatpush1.bf16.xpose.msra.mxu0 0
        %1954 = vmatprep.subr.bf16.mxu0 0
        %1955 = vmatpush1.bf16.xpose.msra.mxu0 0
        %1956 = vmatprep.mubr.bf16.mxu0 0
        %1957 = vmatmul.mubr.bf16.gmra.mrb[0].mxu0 %v1919
        %v1958 = vpop.f32.mrb[0].mxu0
        %v1959 = vadd.f32 0.0, %v1958
        %v1960 = vpop.f32.mrb[0].mxu0
        %v1961 = vpop.f32.mrb[0].mxu0
        %v1962 = vpop.f32.mrb[0].mxu0
        %1963 = vdwg.mxu0
        %v1966 = vunpack.c.l.b16 %v1801
        %v1967 = vunpack.c.l.b16 %v1802
        %v1968 = vpack.c.b16 %v1967, %v1966
        %v1970 = vsel %vm696, %v1789, 0
        %v1973 = vsel %vm696, %v1968, 0
        %1975 = vmatprep.subr.bf16.mxu0 0
        %1976 = vmatpush1.bf16.xpose.msra.mxu0 %v1973
        %1977 = vmatprep.subr.bf16.mxu0 0
        %1978 = vmatpush1.bf16.xpose.msra.mxu0 0
        %1979 = vmatprep.subr.bf16.mxu0 0
        %1980 = vmatpush1.bf16.xpose.msra.mxu0 0
        %1981 = vmatprep.subr.bf16.mxu0 0
        %1982 = vmatpush1.bf16.xpose.msra.mxu0 0
        %1983 = vmatprep.subr.bf16.mxu0 0
        %1984 = vmatpush1.bf16.xpose.msra.mxu0 0
        %1985 = vmatprep.subr.bf16.mxu0 0
        %1986 = vmatpush1.bf16.xpose.msra.mxu0 0
        %1987 = vmatprep.subr.bf16.mxu0 0
        %1988 = vmatpush1.bf16.xpose.msra.mxu0 0
        %1989 = vmatprep.subr.bf16.mxu0 0
        %1990 = vmatpush1.bf16.xpose.msra.mxu0 0
        %1991 = vmatprep.subr.bf16.mxu0 0
        %1992 = vmatpush1.bf16.xpose.msra.mxu0 0
        %1993 = vmatprep.subr.bf16.mxu0 0
        %1994 = vmatpush1.bf16.xpose.msra.mxu0 0
        %1995 = vmatprep.subr.bf16.mxu0 0
        %1996 = vmatpush1.bf16.xpose.msra.mxu0 0
        %1997 = vmatprep.subr.bf16.mxu0 0
        %1998 = vmatpush1.bf16.xpose.msra.mxu0 0
        %1999 = vmatprep.subr.bf16.mxu0 0
        %2000 = vmatpush1.bf16.xpose.msra.mxu0 0
        %2001 = vmatprep.subr.bf16.mxu0 0
        %2002 = vmatpush1.bf16.xpose.msra.mxu0 0
        %2003 = vmatprep.subr.bf16.mxu0 0
        %2004 = vmatpush1.bf16.xpose.msra.mxu0 0
        %2005 = vmatprep.subr.bf16.mxu0 0
        %2006 = vmatpush1.bf16.xpose.msra.mxu0 0
        %2007 = vmatprep.mubr.bf16.mxu0 0
        %2008 = vmatmul.mubr.bf16.gmra.mrb[0].mxu0 %v1970
        %v2009 = vpop.f32.mrb[0].mxu0
        %v2010 = vadd.f32 0.0, %v2009
        %v2011 = vpop.f32.mrb[0].mxu0
        %v2012 = vpop.f32.mrb[0].mxu0
        %v2013 = vpop.f32.mrb[0].mxu0
        %2014 = vdwg.mxu0
        %v2017 = vunpack.c.l.b16 %v1803
        %v2018 = vunpack.c.l.b16 %v1804
        %v2019 = vpack.c.b16 %v2018, %v2017
        %v2021 = vsel %vm696, %v1790, 0
        %v2024 = vsel %vm696, %v2019, 0
        %2026 = vmatprep.subr.bf16.mxu0 0
        %2027 = vmatpush1.bf16.xpose.msra.mxu0 %v2024
        %2028 = vmatprep.subr.bf16.mxu0 0
        %2029 = vmatpush1.bf16.xpose.msra.mxu0 0
        %2030 = vmatprep.subr.bf16.mxu0 0
        %2031 = vmatpush1.bf16.xpose.msra.mxu0 0
        %2032 = vmatprep.subr.bf16.mxu0 0
        %2033 = vmatpush1.bf16.xpose.msra.mxu0 0
        %2034 = vmatprep.subr.bf16.mxu0 0
        %2035 = vmatpush1.bf16.xpose.msra.mxu0 0
        %2036 = vmatprep.subr.bf16.mxu0 0
        %2037 = vmatpush1.bf16.xpose.msra.mxu0 0
        %2038 = vmatprep.subr.bf16.mxu0 0
        %2039 = vmatpush1.bf16.xpose.msra.mxu0 0
        %2040 = vmatprep.subr.bf16.mxu0 0
        %2041 = vmatpush1.bf16.xpose.msra.mxu0 0
        %2042 = vmatprep.subr.bf16.mxu0 0
        %2043 = vmatpush1.bf16.xpose.msra.mxu0 0
        %2044 = vmatprep.subr.bf16.mxu0 0
        %2045 = vmatpush1.bf16.xpose.msra.mxu0 0
        %2046 = vmatprep.subr.bf16.mxu0 0
        %2047 = vmatpush1.bf16.xpose.msra.mxu0 0
        %2048 = vmatprep.subr.bf16.mxu0 0
        %2049 = vmatpush1.bf16.xpose.msra.mxu0 0
        %2050 = vmatprep.subr.bf16.mxu0 0
        %2051 = vmatpush1.bf16.xpose.msra.mxu0 0
        %2052 = vmatprep.subr.bf16.mxu0 0
        %2053 = vmatpush1.bf16.xpose.msra.mxu0 0
        %2054 = vmatprep.subr.bf16.mxu0 0
        %2055 = vmatpush1.bf16.xpose.msra.mxu0 0
        %2056 = vmatprep.subr.bf16.mxu0 0
        %2057 = vmatpush1.bf16.xpose.msra.mxu0 0
        %2058 = vmatprep.mubr.bf16.mxu0 0
        %2059 = vmatmul.mubr.bf16.gmra.mrb[0].mxu0 %v2021
        %v2060 = vpop.f32.mrb[0].mxu0
        %v2061 = vadd.f32 0.0, %v2060
        %v2062 = vpop.f32.mrb[0].mxu0
        %v2063 = vpop.f32.mrb[0].mxu0
        %v2064 = vpop.f32.mrb[0].mxu0
        %2065 = vdwg.mxu0
        %v2068 = vunpack.c.l.b16 %v1805
        %v2069 = vunpack.c.l.b16 %v1806
        %v2070 = vpack.c.b16 %v2069, %v2068
        %v2072 = vsel %vm696, %v1791, 0
        %v2075 = vsel %vm696, %v2070, 0
        %2077 = vmatprep.subr.bf16.mxu0 0
        %2078 = vmatpush1.bf16.xpose.msra.mxu0 %v2075
        %2079 = vmatprep.subr.bf16.mxu0 0
        %2080 = vmatpush1.bf16.xpose.msra.mxu0 0
        %2081 = vmatprep.subr.bf16.mxu0 0
        %2082 = vmatpush1.bf16.xpose.msra.mxu0 0
        %2083 = vmatprep.subr.bf16.mxu0 0
        %2084 = vmatpush1.bf16.xpose.msra.mxu0 0
        %2085 = vmatprep.subr.bf16.mxu0 0
        %2086 = vmatpush1.bf16.xpose.msra.mxu0 0
        %2087 = vmatprep.subr.bf16.mxu0 0
        %2088 = vmatpush1.bf16.xpose.msra.mxu0 0
        %2089 = vmatprep.subr.bf16.mxu0 0
        %2090 = vmatpush1.bf16.xpose.msra.mxu0 0
        %2091 = vmatprep.subr.bf16.mxu0 0
        %2092 = vmatpush1.bf16.xpose.msra.mxu0 0
        %2093 = vmatprep.subr.bf16.mxu0 0
        %2094 = vmatpush1.bf16.xpose.msra.mxu0 0
        %2095 = vmatprep.subr.bf16.mxu0 0
        %2096 = vmatpush1.bf16.xpose.msra.mxu0 0
        %2097 = vmatprep.subr.bf16.mxu0 0
        %2098 = vmatpush1.bf16.xpose.msra.mxu0 0
        %2099 = vmatprep.subr.bf16.mxu0 0
        %2100 = vmatpush1.bf16.xpose.msra.mxu0 0
        %2101 = vmatprep.subr.bf16.mxu0 0
        %2102 = vmatpush1.bf16.xpose.msra.mxu0 0
        %2103 = vmatprep.subr.bf16.mxu0 0
        %2104 = vmatpush1.bf16.xpose.msra.mxu0 0
        %2105 = vmatprep.subr.bf16.mxu0 0
        %2106 = vmatpush1.bf16.xpose.msra.mxu0 0
        %2107 = vmatprep.subr.bf16.mxu0 0
        %2108 = vmatpush1.bf16.xpose.msra.mxu0 0
        %2109 = vmatprep.mubr.bf16.mxu0 0
        %2110 = vmatmul.mubr.bf16.gmra.mrb[0].mxu0 %v2072
        %v2111 = vpop.f32.mrb[0].mxu0
        %v2112 = vadd.f32 0.0, %v2111
        %v2113 = vpop.f32.mrb[0].mxu0
        %v2114 = vpop.f32.mrb[0].mxu0
        %v2115 = vpop.f32.mrb[0].mxu0
        %2116 = vdwg.mxu0
        %v2119 = vunpack.c.l.b16 %v1807
        %v2120 = vunpack.c.l.b16 %v1808
        %v2121 = vpack.c.b16 %v2120, %v2119
        %v2123 = vsel %vm696, %v1792, 0
        %v2126 = vsel %vm696, %v2121, 0
        %2128 = vmatprep.subr.bf16.mxu0 0
        %2129 = vmatpush1.bf16.xpose.msra.mxu0 %v2126
        %2130 = vmatprep.subr.bf16.mxu0 0
        %2131 = vmatpush1.bf16.xpose.msra.mxu0 0
        %2132 = vmatprep.subr.bf16.mxu0 0
        %2133 = vmatpush1.bf16.xpose.msra.mxu0 0
        %2134 = vmatprep.subr.bf16.mxu0 0
        %2135 = vmatpush1.bf16.xpose.msra.mxu0 0
        %2136 = vmatprep.subr.bf16.mxu0 0
        %2137 = vmatpush1.bf16.xpose.msra.mxu0 0
        %2138 = vmatprep.subr.bf16.mxu0 0
        %2139 = vmatpush1.bf16.xpose.msra.mxu0 0
        %2140 = vmatprep.subr.bf16.mxu0 0
        %2141 = vmatpush1.bf16.xpose.msra.mxu0 0
        %2142 = vmatprep.subr.bf16.mxu0 0
        %2143 = vmatpush1.bf16.xpose.msra.mxu0 0
        %2144 = vmatprep.subr.bf16.mxu0 0
        %2145 = vmatpush1.bf16.xpose.msra.mxu0 0
        %2146 = vmatprep.subr.bf16.mxu0 0
        %2147 = vmatpush1.bf16.xpose.msra.mxu0 0
        %2148 = vmatprep.subr.bf16.mxu0 0
        %2149 = vmatpush1.bf16.xpose.msra.mxu0 0
        %2150 = vmatprep.subr.bf16.mxu0 0
        %2151 = vmatpush1.bf16.xpose.msra.mxu0 0
        %2152 = vmatprep.subr.bf16.mxu0 0
        %2153 = vmatpush1.bf16.xpose.msra.mxu0 0
        %2154 = vmatprep.subr.bf16.mxu0 0
        %2155 = vmatpush1.bf16.xpose.msra.mxu0 0
        %2156 = vmatprep.subr.bf16.mxu0 0
        %2157 = vmatpush1.bf16.xpose.msra.mxu0 0
        %2158 = vmatprep.subr.bf16.mxu0 0
        %2159 = vmatpush1.bf16.xpose.msra.mxu0 0
        %2160 = vmatprep.mubr.bf16.mxu0 0
        %2161 = vmatmul.mubr.bf16.gmra.mrb[0].mxu0 %v2123
        %v2162 = vpop.f32.mrb[0].mxu0
        %v2163 = vadd.f32 0.0, %v2162
        %v2164 = vpop.f32.mrb[0].mxu0
        %v2165 = vpop.f32.mrb[0].mxu0
        %v2166 = vpop.f32.mrb[0].mxu0
        %2167 = vdwg.mxu0
        %v2170 = vunpack.c.l.b16 %v1809
        %v2171 = vunpack.c.l.b16 %v1810
        %v2172 = vpack.c.b16 %v2171, %v2170
        %v2174 = vsel %vm696, %v1793, 0
        %v2177 = vsel %vm696, %v2172, 0
        %2179 = vmatprep.subr.bf16.mxu0 0
        %2180 = vmatpush1.bf16.xpose.msra.mxu0 %v2177
        %2181 = vmatprep.subr.bf16.mxu0 0
        %2182 = vmatpush1.bf16.xpose.msra.mxu0 0
        %2183 = vmatprep.subr.bf16.mxu0 0
        %2184 = vmatpush1.bf16.xpose.msra.mxu0 0
        %2185 = vmatprep.subr.bf16.mxu0 0
        %2186 = vmatpush1.bf16.xpose.msra.mxu0 0
        %2187 = vmatprep.subr.bf16.mxu0 0
        %2188 = vmatpush1.bf16.xpose.msra.mxu0 0
        %2189 = vmatprep.subr.bf16.mxu0 0
        %2190 = vmatpush1.bf16.xpose.msra.mxu0 0
        %2191 = vmatprep.subr.bf16.mxu0 0
        %2192 = vmatpush1.bf16.xpose.msra.mxu0 0
        %2193 = vmatprep.subr.bf16.mxu0 0
        %2194 = vmatpush1.bf16.xpose.msra.mxu0 0
        %2195 = vmatprep.subr.bf16.mxu0 0
        %2196 = vmatpush1.bf16.xpose.msra.mxu0 0
        %2197 = vmatprep.subr.bf16.mxu0 0
        %2198 = vmatpush1.bf16.xpose.msra.mxu0 0
        %2199 = vmatprep.subr.bf16.mxu0 0
        %2200 = vmatpush1.bf16.xpose.msra.mxu0 0
        %2201 = vmatprep.subr.bf16.mxu0 0
        %2202 = vmatpush1.bf16.xpose.msra.mxu0 0
        %2203 = vmatprep.subr.bf16.mxu0 0
        %2204 = vmatpush1.bf16.xpose.msra.mxu0 0
        %2205 = vmatprep.subr.bf16.mxu0 0
        %2206 = vmatpush1.bf16.xpose.msra.mxu0 0
        %2207 = vmatprep.subr.bf16.mxu0 0
        %2208 = vmatpush1.bf16.xpose.msra.mxu0 0
        %2209 = vmatprep.subr.bf16.mxu0 0
        %2210 = vmatpush1.bf16.xpose.msra.mxu0 0
        %2211 = vmatprep.mubr.bf16.mxu0 0
        %2212 = vmatmul.mubr.bf16.gmra.mrb[0].mxu0 %v2174
        %v2213 = vpop.f32.mrb[0].mxu0
        %v2214 = vadd.f32 0.0, %v2213
        %v2215 = vpop.f32.mrb[0].mxu0
        %v2216 = vpop.f32.mrb[0].mxu0
        %v2217 = vpop.f32.mrb[0].mxu0
        %2218 = vdwg.mxu0
        %v2219 = vld [vmem:[%s4] sm:$0xff]
        %v2220 = vlaneseq
        %v2221 = vshrl.u32 %v2220, 7
        %v2222 = vsub.s32 0, %v2221
        %v2223 = vrot.slane %v1857, %v2222
        %v2224 = vlaneseq
        %v2225 = vshrl.u32 %v2224, 7
        %v2226 = vsub.s32 0, %v2225
        %v2227 = vrot.slane %v1908, %v2226
        %v2228 = vlaneseq
        %v2229 = vshrl.u32 %v2228, 7
        %v2230 = vsub.s32 0, %v2229
        %v2231 = vrot.slane %v1959, %v2230
        %v2232 = vlaneseq
        %v2233 = vshrl.u32 %v2232, 7
        %v2234 = vsub.s32 0, %v2233
        %v2235 = vrot.slane %v2010, %v2234
        %v2236 = vlaneseq
        %v2237 = vshrl.u32 %v2236, 7
        %v2238 = vsub.s32 0, %v2237
        %v2239 = vrot.slane %v2061, %v2238
        %v2240 = vlaneseq
        %v2241 = vshrl.u32 %v2240, 7
        %v2242 = vsub.s32 0, %v2241
        %v2243 = vrot.slane %v2112, %v2242
        %v2244 = vlaneseq
        %v2245 = vshrl.u32 %v2244, 7
        %v2246 = vsub.s32 0, %v2245
        %v2247 = vrot.slane %v2163, %v2246
        %v2248 = vlaneseq
        %v2249 = vshrl.u32 %v2248, 7
        %v2250 = vsub.s32 0, %v2249
        %v2251 = vrot.slane %v2214, %v2250
        %v2252 = vmul.f32 %v2223, %v2219
        %v2253 = vmul.f32 %v2227, %v2219
        %v2254 = vmul.f32 %v2231, %v2219
        %v2255 = vmul.f32 %v2235, %v2219
        %v2256 = vmul.f32 %v2239, %v2219
        %v2257 = vmul.f32 %v2243, %v2219
        %v2258 = vmul.f32 %v2247, %v2219
        %v2259 = vmul.f32 %v2251, %v2219
        %s2260 = scalar_lea.vmem %s4, 8
        %v2261 = vld [vmem:[%s2260] sm:$0xff]
        %v2262 = vlaneseq
        %v2263 = vshrl.u32 %v2262, 7
        %v2264 = vsub.s32 1, %v2263
        %v2265 = vrot.slane %v1857, %v2264
        %v2266 = vlaneseq
        %v2267 = vshrl.u32 %v2266, 7
        %v2268 = vsub.s32 1, %v2267
        %v2269 = vrot.slane %v1908, %v2268
        %v2270 = vlaneseq
        %v2271 = vshrl.u32 %v2270, 7
        %v2272 = vsub.s32 1, %v2271
        %v2273 = vrot.slane %v1959, %v2272
        %v2274 = vlaneseq
        %v2275 = vshrl.u32 %v2274, 7
        %v2276 = vsub.s32 1, %v2275
        %v2277 = vrot.slane %v2010, %v2276
        %v2278 = vlaneseq
        %v2279 = vshrl.u32 %v2278, 7
        %v2280 = vsub.s32 1, %v2279
        %v2281 = vrot.slane %v2061, %v2280
        %v2282 = vlaneseq
        %v2283 = vshrl.u32 %v2282, 7
        %v2284 = vsub.s32 1, %v2283
        %v2285 = vrot.slane %v2112, %v2284
        %v2286 = vlaneseq
        %v2287 = vshrl.u32 %v2286, 7
        %v2288 = vsub.s32 1, %v2287
        %v2289 = vrot.slane %v2163, %v2288
        %v2290 = vlaneseq
        %v2291 = vshrl.u32 %v2290, 7
        %v2292 = vsub.s32 1, %v2291
        %v2293 = vrot.slane %v2214, %v2292
        %v2294 = vmul.f32 %v2265, %v2261
        %v2295 = vmul.f32 %v2269, %v2261
        %v2296 = vmul.f32 %v2273, %v2261
        %v2297 = vmul.f32 %v2277, %v2261
        %v2298 = vmul.f32 %v2281, %v2261
        %v2299 = vmul.f32 %v2285, %v2261
        %v2300 = vmul.f32 %v2289, %v2261
        %v2301 = vmul.f32 %v2293, %v2261
        %v2302 = vadd.f32 %v2252, %v2294
        %v2303 = vadd.f32 %v2253, %v2295
        %v2304 = vadd.f32 %v2254, %v2296
        %v2305 = vadd.f32 %v2255, %v2297
        %v2306 = vadd.f32 %v2256, %v2298
        %v2307 = vadd.f32 %v2257, %v2299
        %v2308 = vadd.f32 %v2258, %v2300
        %v2309 = vadd.f32 %v2259, %v2301
        %v2310 = vld [vmem:[%s5] sm:$0xff]
        %2312 = vset.pattern.permute.xlu0 0
        %2313 = vperm.xlu0 %2312, %v2310
        %v2314 = vpop.permute.xlu0 %2313
        %v2316 = vadd.f32 %v2302, %v2314
        %v2317 = vadd.f32 %v2303, %v2314
        %v2318 = vadd.f32 %v2304, %v2314
        %v2319 = vadd.f32 %v2305, %v2314
        %v2320 = vadd.f32 %v2306, %v2314
        %v2321 = vadd.f32 %v2307, %v2314
        %v2322 = vadd.f32 %v2308, %v2314
        %v2323 = vadd.f32 %v2309, %v2314
        %v2324 = vmax.f32 %v2316, 0.0
        %v2325 = vmax.f32 %v2317, 0.0
        %v2326 = vmax.f32 %v2318, 0.0
        %v2327 = vmax.f32 %v2319, 0.0
        %v2328 = vmax.f32 %v2320, 0.0
        %v2329 = vmax.f32 %v2321, 0.0
        %v2330 = vmax.f32 %v2322, 0.0
        %v2331 = vmax.f32 %v2323, 0.0
        %v2332 = vpack.c.bf16 %v2324, %v2324
        %v2333 = vpack.c.bf16 %v2325, %v2325
        %v2334 = vpack.c.bf16 %v2326, %v2326
        %v2335 = vpack.c.bf16 %v2327, %v2327
        %v2336 = vpack.c.bf16 %v2328, %v2328
        %v2337 = vpack.c.bf16 %v2329, %v2329
        %v2338 = vpack.c.bf16 %v2330, %v2330
        %v2339 = vpack.c.bf16 %v2331, %v2331
        %s2340 = scalar_lea.vmem %s6, 64
        %v2341 = vld [vmem:[%s2340] sm:$0xf]
        %v2342 = vld [vmem:[%s2340 + $0x4] sm:$0xf]
        %v2351 = vunpack.c.l.b16 %v2332
        %v2352 = vunpack.c.l.b16 %v2333
        %v2353 = vunpack.c.l.b16 %v2334
        %v2354 = vunpack.c.l.b16 %v2335
        %v2355 = vunpack.c.l.b16 %v2336
        %v2356 = vunpack.c.l.b16 %v2337
        %v2357 = vunpack.c.l.b16 %v2338
        %v2358 = vunpack.c.l.b16 %v2339
        %v2359 = vrot.slane %v2352, 7
        %v2360 = vsel %vm1243, %v2359, %v2351
        %v2361 = vrot.slane %v2353, 6
        %v2362 = vsel %vm1246, %v2361, %v2360
        %v2363 = vrot.slane %v2354, 5
        %v2364 = vsel %vm1249, %v2363, %v2362
        %v2365 = vrot.slane %v2355, 4
        %v2366 = vsel %vm1252, %v2365, %v2364
        %v2367 = vrot.slane %v2356, 3
        %v2368 = vsel %vm1255, %v2367, %v2366
        %v2369 = vrot.slane %v2357, 2
        %v2370 = vsel %vm1258, %v2369, %v2368
        %v2371 = vrot.slane %v2358, 1
        %v2372 = vsel %vm1261, %v2371, %v2370
        %v2373 = vpack.c.b16 %v2372, %v2372
        %v2376 = vunpack.c.l.b16 %v2341
        %v2377 = vunpack.c.l.b16 %v2342
        %v2378 = vpack.c.b16 %v2377, %v2376
        %v2381 = vsel %vm696, %v2373, 0
        %2383 = vmatprep.subr.bf16.mxu0 0
        %2384 = vmatpush1.bf16.msra.mxu0 %v2378
        %2385 = vmatprep.subr.bf16.mxu0 0
        %2386 = vmatpush1.bf16.msra.mxu0 0
        %2387 = vmatprep.subr.bf16.mxu0 0
        %2388 = vmatpush1.bf16.msra.mxu0 0
        %2389 = vmatprep.subr.bf16.mxu0 0
        %2390 = vmatpush1.bf16.msra.mxu0 0
        %2391 = vmatprep.subr.bf16.mxu0 0
        %2392 = vmatpush1.bf16.msra.mxu0 0
        %2393 = vmatprep.subr.bf16.mxu0 0
        %2394 = vmatpush1.bf16.msra.mxu0 0
        %2395 = vmatprep.subr.bf16.mxu0 0
        %2396 = vmatpush1.bf16.msra.mxu0 0
        %2397 = vmatprep.subr.bf16.mxu0 0
        %2398 = vmatpush1.bf16.msra.mxu0 0
        %2399 = vmatprep.subr.bf16.mxu0 0
        %2400 = vmatpush1.bf16.msra.mxu0 0
        %2401 = vmatprep.subr.bf16.mxu0 0
        %2402 = vmatpush1.bf16.msra.mxu0 0
        %2403 = vmatprep.subr.bf16.mxu0 0
        %2404 = vmatpush1.bf16.msra.mxu0 0
        %2405 = vmatprep.subr.bf16.mxu0 0
        %2406 = vmatpush1.bf16.msra.mxu0 0
        %2407 = vmatprep.subr.bf16.mxu0 0
        %2408 = vmatpush1.bf16.msra.mxu0 0
        %2409 = vmatprep.subr.bf16.mxu0 0
        %2410 = vmatpush1.bf16.msra.mxu0 0
        %2411 = vmatprep.subr.bf16.mxu0 0
        %2412 = vmatpush1.bf16.msra.mxu0 0
        %2413 = vmatprep.subr.bf16.mxu0 0
        %2414 = vmatpush1.bf16.msra.mxu0 0
        %2415 = vmatprep.mubr.bf16.mxu0 0
        %2416 = vmatmul.mubr.bf16.gmra.mrb[0].mxu0 %v2381
        %v2417 = vpop.f32.mrb[0].mxu0
        %v2418 = vadd.f32 0.0, %v2417
        %v2419 = vpop.f32.mrb[0].mxu0
        %v2420 = vpop.f32.mrb[0].mxu0
        %v2421 = vpop.f32.mrb[0].mxu0
        %2422 = vdwg.mxu0
        %v2423 = vadd.f32 %v1784, %v2418
        %s2424 = scalar_lea.vmem %s6, 72
        %v2425 = vld [vmem:[%s2424] sm:$0xf]
        %v2426 = vld [vmem:[%s2424 + $0x4] sm:$0xf]
        %v2427 = vrot.slane %v2351, 1
        %v2428 = vsel %vm1243, %v2352, %v2427
        %v2429 = vrot.slane %v2353, 7
        %v2430 = vsel %vm1246, %v2429, %v2428
        %v2431 = vrot.slane %v2354, 6
        %v2432 = vsel %vm1249, %v2431, %v2430
        %v2433 = vrot.slane %v2355, 5
        %v2434 = vsel %vm1252, %v2433, %v2432
        %v2435 = vrot.slane %v2356, 4
        %v2436 = vsel %vm1255, %v2435, %v2434
        %v2437 = vrot.slane %v2357, 3
        %v2438 = vsel %vm1258, %v2437, %v2436
        %v2439 = vrot.slane %v2358, 2
        %v2440 = vsel %vm1261, %v2439, %v2438
        %v2441 = vpack.c.b16 %v2440, %v2440
        %v2444 = vunpack.c.l.b16 %v2425
        %v2445 = vunpack.c.l.b16 %v2426
        %v2446 = vpack.c.b16 %v2445, %v2444
        %v2449 = vsel %vm696, %v2441, 0
        %2451 = vmatprep.subr.bf16.mxu0 0
        %2452 = vmatpush1.bf16.msra.mxu0 %v2446
        %2453 = vmatprep.subr.bf16.mxu0 0
        %2454 = vmatpush1.bf16.msra.mxu0 0
        %2455 = vmatprep.subr.bf16.mxu0 0
        %2456 = vmatpush1.bf16.msra.mxu0 0
        %2457 = vmatprep.subr.bf16.mxu0 0
        %2458 = vmatpush1.bf16.msra.mxu0 0
        %2459 = vmatprep.subr.bf16.mxu0 0
        %2460 = vmatpush1.bf16.msra.mxu0 0
        %2461 = vmatprep.subr.bf16.mxu0 0
        %2462 = vmatpush1.bf16.msra.mxu0 0
        %2463 = vmatprep.subr.bf16.mxu0 0
        %2464 = vmatpush1.bf16.msra.mxu0 0
        %2465 = vmatprep.subr.bf16.mxu0 0
        %2466 = vmatpush1.bf16.msra.mxu0 0
        %2467 = vmatprep.subr.bf16.mxu0 0
        %2468 = vmatpush1.bf16.msra.mxu0 0
        %2469 = vmatprep.subr.bf16.mxu0 0
        %2470 = vmatpush1.bf16.msra.mxu0 0
        %2471 = vmatprep.subr.bf16.mxu0 0
        %2472 = vmatpush1.bf16.msra.mxu0 0
        %2473 = vmatprep.subr.bf16.mxu0 0
        %2474 = vmatpush1.bf16.msra.mxu0 0
        %2475 = vmatprep.subr.bf16.mxu0 0
        %2476 = vmatpush1.bf16.msra.mxu0 0
        %2477 = vmatprep.subr.bf16.mxu0 0
        %2478 = vmatpush1.bf16.msra.mxu0 0
        %2479 = vmatprep.subr.bf16.mxu0 0
        %2480 = vmatpush1.bf16.msra.mxu0 0
        %2481 = vmatprep.subr.bf16.mxu0 0
        %2482 = vmatpush1.bf16.msra.mxu0 0
        %2483 = vmatprep.mubr.bf16.mxu0 0
        %2484 = vmatmul.mubr.bf16.gmra.mrb[0].mxu0 %v2449
        %v2485 = vpop.f32.mrb[0].mxu0
        %v2486 = vadd.f32 0.0, %v2485
        %v2487 = vpop.f32.mrb[0].mxu0
        %v2488 = vpop.f32.mrb[0].mxu0
        %v2489 = vpop.f32.mrb[0].mxu0
        %2490 = vdwg.mxu0
        %v2491 = vadd.f32 %v2423, %v2486
        %s2492 = scalar_lea.vmem %s6, 80
        %v2493 = vld [vmem:[%s2492] sm:$0xf]
        %v2494 = vld [vmem:[%s2492 + $0x4] sm:$0xf]
        %v2495 = vrot.slane %v2351, 2
        %v2496 = vrot.slane %v2352, 1
        %v2497 = vsel %vm1243, %v2496, %v2495
        %v2498 = vsel %vm1246, %v2353, %v2497
        %v2499 = vrot.slane %v2354, 7
        %v2500 = vsel %vm1249, %v2499, %v2498
        %v2501 = vrot.slane %v2355, 6
        %v2502 = vsel %vm1252, %v2501, %v2500
        %v2503 = vrot.slane %v2356, 5
        %v2504 = vsel %vm1255, %v2503, %v2502
        %v2505 = vrot.slane %v2357, 4
        %v2506 = vsel %vm1258, %v2505, %v2504
        %v2507 = vrot.slane %v2358, 3
        %v2508 = vsel %vm1261, %v2507, %v2506
        %v2509 = vpack.c.b16 %v2508, %v2508
        %v2512 = vunpack.c.l.b16 %v2493
        %v2513 = vunpack.c.l.b16 %v2494
        %v2514 = vpack.c.b16 %v2513, %v2512
        %v2517 = vsel %vm696, %v2509, 0
        %2519 = vmatprep.subr.bf16.mxu0 0
        %2520 = vmatpush1.bf16.msra.mxu0 %v2514
        %2521 = vmatprep.subr.bf16.mxu0 0
        %2522 = vmatpush1.bf16.msra.mxu0 0
        %2523 = vmatprep.subr.bf16.mxu0 0
        %2524 = vmatpush1.bf16.msra.mxu0 0
        %2525 = vmatprep.subr.bf16.mxu0 0
        %2526 = vmatpush1.bf16.msra.mxu0 0
        %2527 = vmatprep.subr.bf16.mxu0 0
        %2528 = vmatpush1.bf16.msra.mxu0 0
        %2529 = vmatprep.subr.bf16.mxu0 0
        %2530 = vmatpush1.bf16.msra.mxu0 0
        %2531 = vmatprep.subr.bf16.mxu0 0
        %2532 = vmatpush1.bf16.msra.mxu0 0
        %2533 = vmatprep.subr.bf16.mxu0 0
        %2534 = vmatpush1.bf16.msra.mxu0 0
        %2535 = vmatprep.subr.bf16.mxu0 0
        %2536 = vmatpush1.bf16.msra.mxu0 0
        %2537 = vmatprep.subr.bf16.mxu0 0
        %2538 = vmatpush1.bf16.msra.mxu0 0
        %2539 = vmatprep.subr.bf16.mxu0 0
        %2540 = vmatpush1.bf16.msra.mxu0 0
        %2541 = vmatprep.subr.bf16.mxu0 0
        %2542 = vmatpush1.bf16.msra.mxu0 0
        %2543 = vmatprep.subr.bf16.mxu0 0
        %2544 = vmatpush1.bf16.msra.mxu0 0
        %2545 = vmatprep.subr.bf16.mxu0 0
        %2546 = vmatpush1.bf16.msra.mxu0 0
        %2547 = vmatprep.subr.bf16.mxu0 0
        %2548 = vmatpush1.bf16.msra.mxu0 0
        %2549 = vmatprep.subr.bf16.mxu0 0
        %2550 = vmatpush1.bf16.msra.mxu0 0
        %2551 = vmatprep.mubr.bf16.mxu0 0
        %2552 = vmatmul.mubr.bf16.gmra.mrb[0].mxu0 %v2517
        %v2553 = vpop.f32.mrb[0].mxu0
        %v2554 = vadd.f32 0.0, %v2553
        %v2555 = vpop.f32.mrb[0].mxu0
        %v2556 = vpop.f32.mrb[0].mxu0
        %v2557 = vpop.f32.mrb[0].mxu0
        %2558 = vdwg.mxu0
        %v2559 = vadd.f32 %v2491, %v2554
        %s2560 = scalar_lea.vmem %s6, 88
        %v2561 = vld [vmem:[%s2560] sm:$0xf]
        %v2562 = vld [vmem:[%s2560 + $0x4] sm:$0xf]
        %v2563 = vrot.slane %v2351, 3
        %v2564 = vrot.slane %v2352, 2
        %v2565 = vsel %vm1243, %v2564, %v2563
        %v2566 = vrot.slane %v2353, 1
        %v2567 = vsel %vm1246, %v2566, %v2565
        %v2568 = vsel %vm1249, %v2354, %v2567
        %v2569 = vrot.slane %v2355, 7
        %v2570 = vsel %vm1252, %v2569, %v2568
        %v2571 = vrot.slane %v2356, 6
        %v2572 = vsel %vm1255, %v2571, %v2570
        %v2573 = vrot.slane %v2357, 5
        %v2574 = vsel %vm1258, %v2573, %v2572
        %v2575 = vrot.slane %v2358, 4
        %v2576 = vsel %vm1261, %v2575, %v2574
        %v2577 = vpack.c.b16 %v2576, %v2576
        %v2580 = vunpack.c.l.b16 %v2561
        %v2581 = vunpack.c.l.b16 %v2562
        %v2582 = vpack.c.b16 %v2581, %v2580
        %v2585 = vsel %vm696, %v2577, 0
        %2587 = vmatprep.subr.bf16.mxu0 0
        %2588 = vmatpush1.bf16.msra.mxu0 %v2582
        %2589 = vmatprep.subr.bf16.mxu0 0
        %2590 = vmatpush1.bf16.msra.mxu0 0
        %2591 = vmatprep.subr.bf16.mxu0 0
        %2592 = vmatpush1.bf16.msra.mxu0 0
        %2593 = vmatprep.subr.bf16.mxu0 0
        %2594 = vmatpush1.bf16.msra.mxu0 0
        %2595 = vmatprep.subr.bf16.mxu0 0
        %2596 = vmatpush1.bf16.msra.mxu0 0
        %2597 = vmatprep.subr.bf16.mxu0 0
        %2598 = vmatpush1.bf16.msra.mxu0 0
        %2599 = vmatprep.subr.bf16.mxu0 0
        %2600 = vmatpush1.bf16.msra.mxu0 0
        %2601 = vmatprep.subr.bf16.mxu0 0
        %2602 = vmatpush1.bf16.msra.mxu0 0
        %2603 = vmatprep.subr.bf16.mxu0 0
        %2604 = vmatpush1.bf16.msra.mxu0 0
        %2605 = vmatprep.subr.bf16.mxu0 0
        %2606 = vmatpush1.bf16.msra.mxu0 0
        %2607 = vmatprep.subr.bf16.mxu0 0
        %2608 = vmatpush1.bf16.msra.mxu0 0
        %2609 = vmatprep.subr.bf16.mxu0 0
        %2610 = vmatpush1.bf16.msra.mxu0 0
        %2611 = vmatprep.subr.bf16.mxu0 0
        %2612 = vmatpush1.bf16.msra.mxu0 0
        %2613 = vmatprep.subr.bf16.mxu0 0
        %2614 = vmatpush1.bf16.msra.mxu0 0
        %2615 = vmatprep.subr.bf16.mxu0 0
        %2616 = vmatpush1.bf16.msra.mxu0 0
        %2617 = vmatprep.subr.bf16.mxu0 0
        %2618 = vmatpush1.bf16.msra.mxu0 0
        %2619 = vmatprep.mubr.bf16.mxu0 0
        %2620 = vmatmul.mubr.bf16.gmra.mrb[0].mxu0 %v2585
        %v2621 = vpop.f32.mrb[0].mxu0
        %v2622 = vadd.f32 0.0, %v2621
        %v2623 = vpop.f32.mrb[0].mxu0
        %v2624 = vpop.f32.mrb[0].mxu0
        %v2625 = vpop.f32.mrb[0].mxu0
        %2626 = vdwg.mxu0
        %v2627 = vadd.f32 %v2559, %v2622
        %s2628 = scalar_lea.vmem %s6, 96
        %v2629 = vld [vmem:[%s2628] sm:$0xf]
        %v2630 = vld [vmem:[%s2628 + $0x4] sm:$0xf]
        %v2631 = vrot.slane %v2351, 4
        %v2632 = vrot.slane %v2352, 3
        %v2633 = vsel %vm1243, %v2632, %v2631
        %v2634 = vrot.slane %v2353, 2
        %v2635 = vsel %vm1246, %v2634, %v2633
        %v2636 = vrot.slane %v2354, 1
        %v2637 = vsel %vm1249, %v2636, %v2635
        %v2638 = vsel %vm1252, %v2355, %v2637
        %v2639 = vrot.slane %v2356, 7
        %v2640 = vsel %vm1255, %v2639, %v2638
        %v2641 = vrot.slane %v2357, 6
        %v2642 = vsel %vm1258, %v2641, %v2640
        %v2643 = vrot.slane %v2358, 5
        %v2644 = vsel %vm1261, %v2643, %v2642
        %v2645 = vpack.c.b16 %v2644, %v2644
        %v2648 = vunpack.c.l.b16 %v2629
        %v2649 = vunpack.c.l.b16 %v2630
        %v2650 = vpack.c.b16 %v2649, %v2648
        %v2653 = vsel %vm696, %v2645, 0
        %2655 = vmatprep.subr.bf16.mxu0 0
        %2656 = vmatpush1.bf16.msra.mxu0 %v2650
        %2657 = vmatprep.subr.bf16.mxu0 0
        %2658 = vmatpush1.bf16.msra.mxu0 0
        %2659 = vmatprep.subr.bf16.mxu0 0
        %2660 = vmatpush1.bf16.msra.mxu0 0
        %2661 = vmatprep.subr.bf16.mxu0 0
        %2662 = vmatpush1.bf16.msra.mxu0 0
        %2663 = vmatprep.subr.bf16.mxu0 0
        %2664 = vmatpush1.bf16.msra.mxu0 0
        %2665 = vmatprep.subr.bf16.mxu0 0
        %2666 = vmatpush1.bf16.msra.mxu0 0
        %2667 = vmatprep.subr.bf16.mxu0 0
        %2668 = vmatpush1.bf16.msra.mxu0 0
        %2669 = vmatprep.subr.bf16.mxu0 0
        %2670 = vmatpush1.bf16.msra.mxu0 0
        %2671 = vmatprep.subr.bf16.mxu0 0
        %2672 = vmatpush1.bf16.msra.mxu0 0
        %2673 = vmatprep.subr.bf16.mxu0 0
        %2674 = vmatpush1.bf16.msra.mxu0 0
        %2675 = vmatprep.subr.bf16.mxu0 0
        %2676 = vmatpush1.bf16.msra.mxu0 0
        %2677 = vmatprep.subr.bf16.mxu0 0
        %2678 = vmatpush1.bf16.msra.mxu0 0
        %2679 = vmatprep.subr.bf16.mxu0 0
        %2680 = vmatpush1.bf16.msra.mxu0 0
        %2681 = vmatprep.subr.bf16.mxu0 0
        %2682 = vmatpush1.bf16.msra.mxu0 0
        %2683 = vmatprep.subr.bf16.mxu0 0
        %2684 = vmatpush1.bf16.msra.mxu0 0
        %2685 = vmatprep.subr.bf16.mxu0 0
        %2686 = vmatpush1.bf16.msra.mxu0 0
        %2687 = vmatprep.mubr.bf16.mxu0 0
        %2688 = vmatmul.mubr.bf16.gmra.mrb[0].mxu0 %v2653
        %v2689 = vpop.f32.mrb[0].mxu0
        %v2690 = vadd.f32 0.0, %v2689
        %v2691 = vpop.f32.mrb[0].mxu0
        %v2692 = vpop.f32.mrb[0].mxu0
        %v2693 = vpop.f32.mrb[0].mxu0
        %2694 = vdwg.mxu0
        %v2695 = vadd.f32 %v2627, %v2690
        %s2696 = scalar_lea.vmem %s6, 104
        %v2697 = vld [vmem:[%s2696] sm:$0xf]
        %v2698 = vld [vmem:[%s2696 + $0x4] sm:$0xf]
        %v2699 = vrot.slane %v2351, 5
        %v2700 = vrot.slane %v2352, 4
        %v2701 = vsel %vm1243, %v2700, %v2699
        %v2702 = vrot.slane %v2353, 3
        %v2703 = vsel %vm1246, %v2702, %v2701
        %v2704 = vrot.slane %v2354, 2
        %v2705 = vsel %vm1249, %v2704, %v2703
        %v2706 = vrot.slane %v2355, 1
        %v2707 = vsel %vm1252, %v2706, %v2705
        %v2708 = vsel %vm1255, %v2356, %v2707
        %v2709 = vrot.slane %v2357, 7
        %v2710 = vsel %vm1258, %v2709, %v2708
        %v2711 = vrot.slane %v2358, 6
        %v2712 = vsel %vm1261, %v2711, %v2710
        %v2713 = vpack.c.b16 %v2712, %v2712
        %v2716 = vunpack.c.l.b16 %v2697
        %v2717 = vunpack.c.l.b16 %v2698
        %v2718 = vpack.c.b16 %v2717, %v2716
        %v2721 = vsel %vm696, %v2713, 0
        %2723 = vmatprep.subr.bf16.mxu0 0
        %2724 = vmatpush1.bf16.msra.mxu0 %v2718
        %2725 = vmatprep.subr.bf16.mxu0 0
        %2726 = vmatpush1.bf16.msra.mxu0 0
        %2727 = vmatprep.subr.bf16.mxu0 0
        %2728 = vmatpush1.bf16.msra.mxu0 0
        %2729 = vmatprep.subr.bf16.mxu0 0
        %2730 = vmatpush1.bf16.msra.mxu0 0
        %2731 = vmatprep.subr.bf16.mxu0 0
        %2732 = vmatpush1.bf16.msra.mxu0 0
        %2733 = vmatprep.subr.bf16.mxu0 0
        %2734 = vmatpush1.bf16.msra.mxu0 0
        %2735 = vmatprep.subr.bf16.mxu0 0
        %2736 = vmatpush1.bf16.msra.mxu0 0
        %2737 = vmatprep.subr.bf16.mxu0 0
        %2738 = vmatpush1.bf16.msra.mxu0 0
        %2739 = vmatprep.subr.bf16.mxu0 0
        %2740 = vmatpush1.bf16.msra.mxu0 0
        %2741 = vmatprep.subr.bf16.mxu0 0
        %2742 = vmatpush1.bf16.msra.mxu0 0
        %2743 = vmatprep.subr.bf16.mxu0 0
        %2744 = vmatpush1.bf16.msra.mxu0 0
        %2745 = vmatprep.subr.bf16.mxu0 0
        %2746 = vmatpush1.bf16.msra.mxu0 0
        %2747 = vmatprep.subr.bf16.mxu0 0
        %2748 = vmatpush1.bf16.msra.mxu0 0
        %2749 = vmatprep.subr.bf16.mxu0 0
        %2750 = vmatpush1.bf16.msra.mxu0 0
        %2751 = vmatprep.subr.bf16.mxu0 0
        %2752 = vmatpush1.bf16.msra.mxu0 0
        %2753 = vmatprep.subr.bf16.mxu0 0
        %2754 = vmatpush1.bf16.msra.mxu0 0
        %2755 = vmatprep.mubr.bf16.mxu0 0
        %2756 = vmatmul.mubr.bf16.gmra.mrb[0].mxu0 %v2721
        %v2757 = vpop.f32.mrb[0].mxu0
        %v2758 = vadd.f32 0.0, %v2757
        %v2759 = vpop.f32.mrb[0].mxu0
        %v2760 = vpop.f32.mrb[0].mxu0
        %v2761 = vpop.f32.mrb[0].mxu0
        %2762 = vdwg.mxu0
        %v2763 = vadd.f32 %v2695, %v2758
        %s2764 = scalar_lea.vmem %s6, 112
        %v2765 = vld [vmem:[%s2764] sm:$0xf]
        %v2766 = vld [vmem:[%s2764 + $0x4] sm:$0xf]
        %v2767 = vrot.slane %v2351, 6
        %v2768 = vrot.slane %v2352, 5
        %v2769 = vsel %vm1243, %v2768, %v2767
        %v2770 = vrot.slane %v2353, 4
        %v2771 = vsel %vm1246, %v2770, %v2769
        %v2772 = vrot.slane %v2354, 3
        %v2773 = vsel %vm1249, %v2772, %v2771
        %v2774 = vrot.slane %v2355, 2
        %v2775 = vsel %vm1252, %v2774, %v2773
        %v2776 = vrot.slane %v2356, 1
        %v2777 = vsel %vm1255, %v2776, %v2775
        %v2778 = vsel %vm1258, %v2357, %v2777
        %v2779 = vrot.slane %v2358, 7
        %v2780 = vsel %vm1261, %v2779, %v2778
        %v2781 = vpack.c.b16 %v2780, %v2780
        %v2784 = vunpack.c.l.b16 %v2765
        %v2785 = vunpack.c.l.b16 %v2766
        %v2786 = vpack.c.b16 %v2785, %v2784
        %v2789 = vsel %vm696, %v2781, 0
        %2791 = vmatprep.subr.bf16.mxu0 0
        %2792 = vmatpush1.bf16.msra.mxu0 %v2786
        %2793 = vmatprep.subr.bf16.mxu0 0
        %2794 = vmatpush1.bf16.msra.mxu0 0
        %2795 = vmatprep.subr.bf16.mxu0 0
        %2796 = vmatpush1.bf16.msra.mxu0 0
        %2797 = vmatprep.subr.bf16.mxu0 0
        %2798 = vmatpush1.bf16.msra.mxu0 0
        %2799 = vmatprep.subr.bf16.mxu0 0
        %2800 = vmatpush1.bf16.msra.mxu0 0
        %2801 = vmatprep.subr.bf16.mxu0 0
        %2802 = vmatpush1.bf16.msra.mxu0 0
        %2803 = vmatprep.subr.bf16.mxu0 0
        %2804 = vmatpush1.bf16.msra.mxu0 0
        %2805 = vmatprep.subr.bf16.mxu0 0
        %2806 = vmatpush1.bf16.msra.mxu0 0
        %2807 = vmatprep.subr.bf16.mxu0 0
        %2808 = vmatpush1.bf16.msra.mxu0 0
        %2809 = vmatprep.subr.bf16.mxu0 0
        %2810 = vmatpush1.bf16.msra.mxu0 0
        %2811 = vmatprep.subr.bf16.mxu0 0
        %2812 = vmatpush1.bf16.msra.mxu0 0
        %2813 = vmatprep.subr.bf16.mxu0 0
        %2814 = vmatpush1.bf16.msra.mxu0 0
        %2815 = vmatprep.subr.bf16.mxu0 0
        %2816 = vmatpush1.bf16.msra.mxu0 0
        %2817 = vmatprep.subr.bf16.mxu0 0
        %2818 = vmatpush1.bf16.msra.mxu0 0
        %2819 = vmatprep.subr.bf16.mxu0 0
        %2820 = vmatpush1.bf16.msra.mxu0 0
        %2821 = vmatprep.subr.bf16.mxu0 0
        %2822 = vmatpush1.bf16.msra.mxu0 0
        %2823 = vmatprep.mubr.bf16.mxu0 0
        %2824 = vmatmul.mubr.bf16.gmra.mrb[0].mxu0 %v2789
        %v2825 = vpop.f32.mrb[0].mxu0
        %v2826 = vadd.f32 0.0, %v2825
        %v2827 = vpop.f32.mrb[0].mxu0
        %v2828 = vpop.f32.mrb[0].mxu0
        %v2829 = vpop.f32.mrb[0].mxu0
        %2830 = vdwg.mxu0
        %v2831 = vadd.f32 %v2763, %v2826
        %s2832 = scalar_lea.vmem %s6, 120
        %v2833 = vld [vmem:[%s2832] sm:$0xf]
        %v2834 = vld [vmem:[%s2832 + $0x4] sm:$0xf]
        %v2835 = vrot.slane %v2351, 7
        %v2836 = vrot.slane %v2352, 6
        %v2837 = vsel %vm1243, %v2836, %v2835
        %v2838 = vrot.slane %v2353, 5
        %v2839 = vsel %vm1246, %v2838, %v2837
        %v2840 = vrot.slane %v2354, 4
        %v2841 = vsel %vm1249, %v2840, %v2839
        %v2842 = vrot.slane %v2355, 3
        %v2843 = vsel %vm1252, %v2842, %v2841
        %v2844 = vrot.slane %v2356, 2
        %v2845 = vsel %vm1255, %v2844, %v2843
        %v2846 = vrot.slane %v2357, 1
        %v2847 = vsel %vm1258, %v2846, %v2845
        %v2848 = vsel %vm1261, %v2358, %v2847
        %v2849 = vpack.c.b16 %v2848, %v2848
        %v2852 = vunpack.c.l.b16 %v2833
        %v2853 = vunpack.c.l.b16 %v2834
        %v2854 = vpack.c.b16 %v2853, %v2852
        %v2857 = vsel %vm696, %v2849, 0
        %2859 = vmatprep.subr.bf16.mxu0 0
        %2860 = vmatpush1.bf16.msra.mxu0 %v2854
        %2861 = vmatprep.subr.bf16.mxu0 0
        %2862 = vmatpush1.bf16.msra.mxu0 0
        %2863 = vmatprep.subr.bf16.mxu0 0
        %2864 = vmatpush1.bf16.msra.mxu0 0
        %2865 = vmatprep.subr.bf16.mxu0 0
        %2866 = vmatpush1.bf16.msra.mxu0 0
        %2867 = vmatprep.subr.bf16.mxu0 0
        %2868 = vmatpush1.bf16.msra.mxu0 0
        %2869 = vmatprep.subr.bf16.mxu0 0
        %2870 = vmatpush1.bf16.msra.mxu0 0
        %2871 = vmatprep.subr.bf16.mxu0 0
        %2872 = vmatpush1.bf16.msra.mxu0 0
        %2873 = vmatprep.subr.bf16.mxu0 0
        %2874 = vmatpush1.bf16.msra.mxu0 0
        %2875 = vmatprep.subr.bf16.mxu0 0
        %2876 = vmatpush1.bf16.msra.mxu0 0
        %2877 = vmatprep.subr.bf16.mxu0 0
        %2878 = vmatpush1.bf16.msra.mxu0 0
        %2879 = vmatprep.subr.bf16.mxu0 0
        %2880 = vmatpush1.bf16.msra.mxu0 0
        %2881 = vmatprep.subr.bf16.mxu0 0
        %2882 = vmatpush1.bf16.msra.mxu0 0
        %2883 = vmatprep.subr.bf16.mxu0 0
        %2884 = vmatpush1.bf16.msra.mxu0 0
        %2885 = vmatprep.subr.bf16.mxu0 0
        %2886 = vmatpush1.bf16.msra.mxu0 0
        %2887 = vmatprep.subr.bf16.mxu0 0
        %2888 = vmatpush1.bf16.msra.mxu0 0
        %2889 = vmatprep.subr.bf16.mxu0 0
        %2890 = vmatpush1.bf16.msra.mxu0 0
        %2891 = vmatprep.mubr.bf16.mxu0 0
        %2892 = vmatmul.mubr.bf16.gmra.mrb[0].mxu0 %v2857
        %v2893 = vpop.f32.mrb[0].mxu0
        %v2894 = vadd.f32 0.0, %v2893
        %v2895 = vpop.f32.mrb[0].mxu0
        %v2896 = vpop.f32.mrb[0].mxu0
        %v2897 = vpop.f32.mrb[0].mxu0
        %2898 = vdwg.mxu0
        %v2899 = vadd.f32 %v2831, %v2894
        %v2900 = vld [vmem:[%s7] sm:$0x1]
        %v2902 = vlaneseq
        %v2903 = vshrl.u32 %v2902, 7
        %v2904 = vsub.s32 0, %v2903
        %v2905 = vrot.slane %v2900, %v2904
        %v2907 = vadd.f32 %v2899, %v2905
        %v2908 = vmax.f32 %v2907, 0.0
        %v2909 = vld [vmem:[%s8] sm:$0x3]
        %v2910 = vpack.c.bf16 %v2908, %v2908
        %vm2911 = vcmask 64512
        %v2913 = vsel %vm2911, %v2909, 0
        %vm2915 = vcmask 1043456
        %v2917 = vsel %vm2915, %v2910, 0
        %2919 = vmatprep.subr.bf16.mxu0 0
        %2920 = vmatpush1.bf16.msra.mxu0 %v2917
        %2921 = vmatprep.subr.bf16.mxu0 0
        %2922 = vmatpush1.bf16.msra.mxu0 0
        %2923 = vmatprep.subr.bf16.mxu0 0
        %2924 = vmatpush1.bf16.msra.mxu0 0
        %2925 = vmatprep.subr.bf16.mxu0 0
        %2926 = vmatpush1.bf16.msra.mxu0 0
        %2927 = vmatprep.subr.bf16.mxu0 0
        %2928 = vmatpush1.bf16.msra.mxu0 0
        %2929 = vmatprep.subr.bf16.mxu0 0
        %2930 = vmatpush1.bf16.msra.mxu0 0
        %2931 = vmatprep.subr.bf16.mxu0 0
        %2932 = vmatpush1.bf16.msra.mxu0 0
        %2933 = vmatprep.subr.bf16.mxu0 0
        %2934 = vmatpush1.bf16.msra.mxu0 0
        %2935 = vmatprep.subr.bf16.mxu0 0
        %2936 = vmatpush1.bf16.msra.mxu0 0
        %2937 = vmatprep.subr.bf16.mxu0 0
        %2938 = vmatpush1.bf16.msra.mxu0 0
        %2939 = vmatprep.subr.bf16.mxu0 0
        %2940 = vmatpush1.bf16.msra.mxu0 0
        %2941 = vmatprep.subr.bf16.mxu0 0
        %2942 = vmatpush1.bf16.msra.mxu0 0
        %2943 = vmatprep.subr.bf16.mxu0 0
        %2944 = vmatpush1.bf16.msra.mxu0 0
        %2945 = vmatprep.subr.bf16.mxu0 0
        %2946 = vmatpush1.bf16.msra.mxu0 0
        %2947 = vmatprep.subr.bf16.mxu0 0
        %2948 = vmatpush1.bf16.msra.mxu0 0
        %2949 = vmatprep.subr.bf16.mxu0 0
        %2950 = vmatpush1.bf16.msra.mxu0 0
        %2951 = vmatprep.mubr.bf16.mxu0 0
        %2952 = vmatmul.mubr.bf16.gmra.mrb[0].mxu0 %v2913
        %v2953 = vpop.f32.mrb[0].mxu0
        %v2954 = vadd.f32 0.0, %v2953
        %v2955 = vpop.f32.mrb[0].mxu0
        %v2956 = vpop.f32.mrb[0].mxu0
        %v2957 = vpop.f32.mrb[0].mxu0
        %2958 = vdwg.mxu0
        %v2959 = vpack.c.bf16 %v2954, %v2954
        %v2960 = vld [vmem:[%s9] sm:$0xf]
        %v2961 = vld [vmem:[%s9 + $0x4] sm:$0xf]
        %v2962 = vld [vmem:[%s9 + $0x8] sm:$0xf]
        %v2963 = vld [vmem:[%s9 + $0xc] sm:$0xf]
        %v2964 = vld [vmem:[%s9 + $0x10] sm:$0xf]
        %v2965 = vld [vmem:[%s9 + $0x14] sm:$0xf]
        %v2966 = vld [vmem:[%s9 + $0x18] sm:$0xf]
        %v2967 = vld [vmem:[%s9 + $0x1c] sm:$0xf]
        %v2968 = vld [vmem:[%s9 + $0x20] sm:$0xf]
        %v2969 = vld [vmem:[%s9 + $0x24] sm:$0xf]
        %v2970 = vld [vmem:[%s9 + $0x28] sm:$0xf]
        %v2971 = vld [vmem:[%s9 + $0x2c] sm:$0xf]
        %v2972 = vld [vmem:[%s9 + $0x30] sm:$0xf]
        %v2973 = vld [vmem:[%s9 + $0x34] sm:$0xf]
        %v2974 = vld [vmem:[%s9 + $0x38] sm:$0xf]
        %v2975 = vld [vmem:[%s9 + $0x3c] sm:$0xf]
        %v2976 = vld [vmem:[%s10] sm:$0xf]
        %v2993 = vunpack.c.l.b16 %v2960
        %v2994 = vunpack.c.l.b16 %v2961
        %v2995 = vunpack.c.l.b16 %v2962
        %v2996 = vunpack.c.l.b16 %v2963
        %v2997 = vunpack.c.l.b16 %v2964
        %v2998 = vunpack.c.l.b16 %v2965
        %v2999 = vunpack.c.l.b16 %v2966
        %v3000 = vunpack.c.l.b16 %v2967
        %v3001 = vunpack.c.l.b16 %v2968
        %v3002 = vunpack.c.l.b16 %v2969
        %v3003 = vunpack.c.l.b16 %v2970
        %v3004 = vunpack.c.l.b16 %v2971
        %v3005 = vunpack.c.l.b16 %v2972
        %v3006 = vunpack.c.l.b16 %v2973
        %v3007 = vunpack.c.l.b16 %v2974
        %v3008 = vunpack.c.l.b16 %v2975
        %v3009 = vpack.c.b16 %v2994, %v2993
        %v3010 = vpack.c.b16 %v2996, %v2995
        %v3011 = vpack.c.b16 %v2998, %v2997
        %v3012 = vpack.c.b16 %v3000, %v2999
        %v3013 = vpack.c.b16 %v3002, %v3001
        %v3014 = vpack.c.b16 %v3004, %v3003
        %v3015 = vpack.c.b16 %v3006, %v3005
        %v3016 = vpack.c.b16 %v3008, %v3007
        %3025 = vmatprep.subr.bf16.mxu0 0
        %3026 = vmatpush1.bf16.msra.mxu0 %v3009
        %3027 = vmatprep.subr.bf16.mxu0 0
        %3028 = vmatpush1.bf16.msra.mxu0 %v3010
        %3029 = vmatprep.subr.bf16.mxu0 0
        %3030 = vmatpush1.bf16.msra.mxu0 %v3011
        %3031 = vmatprep.subr.bf16.mxu0 0
        %3032 = vmatpush1.bf16.msra.mxu0 %v3012
        %3033 = vmatprep.subr.bf16.mxu0 0
        %3034 = vmatpush1.bf16.msra.mxu0 %v3013
        %3035 = vmatprep.subr.bf16.mxu0 0
        %3036 = vmatpush1.bf16.msra.mxu0 %v3014
        %3037 = vmatprep.subr.bf16.mxu0 0
        %3038 = vmatpush1.bf16.msra.mxu0 %v3015
        %3039 = vmatprep.subr.bf16.mxu0 0
        %3040 = vmatpush1.bf16.msra.mxu0 %v3016
        %3041 = vmatprep.subr.bf16.mxu0 0
        %3042 = vmatpush1.bf16.msra.mxu0 0
        %3043 = vmatprep.subr.bf16.mxu0 0
        %3044 = vmatpush1.bf16.msra.mxu0 0
        %3045 = vmatprep.subr.bf16.mxu0 0
        %3046 = vmatpush1.bf16.msra.mxu0 0
        %3047 = vmatprep.subr.bf16.mxu0 0
        %3048 = vmatpush1.bf16.msra.mxu0 0
        %3049 = vmatprep.subr.bf16.mxu0 0
        %3050 = vmatpush1.bf16.msra.mxu0 0
        %3051 = vmatprep.subr.bf16.mxu0 0
        %3052 = vmatpush1.bf16.msra.mxu0 0
        %3053 = vmatprep.subr.bf16.mxu0 0
        %3054 = vmatpush1.bf16.msra.mxu0 0
        %3055 = vmatprep.subr.bf16.mxu0 0
        %3056 = vmatpush1.bf16.msra.mxu0 0
        %3057 = vmatprep.mubr.bf16.mxu0 0
        %3058 = vmatmul.mubr.bf16.gmra.mrb[0].mxu0 %v2959
        %v3059 = vpop.f32.mrb[0].mxu0
        %v3060 = vadd.f32 %v2976, %v3059
        %v3061 = vpop.f32.mrb[0].mxu0
        %v3062 = vpop.f32.mrb[0].mxu0
        %v3063 = vpop.f32.mrb[0].mxu0
        %3064 = vdwg.mxu0
        %v3065 = vpack.c.bf16 %v3060, %v3060
        %v3066 = vld [vmem:[%s11] sm:$0xf]
        %v3067 = vld [vmem:[%s11 + $0x4] sm:$0xf]
        %v3068 = vld [vmem:[%s11 + $0x8] sm:$0xf]
        %v3069 = vld [vmem:[%s11 + $0xc] sm:$0xf]
        %v3070 = vld [vmem:[%s11 + $0x10] sm:$0xf]
        %v3071 = vld [vmem:[%s11 + $0x14] sm:$0xf]
        %v3072 = vld [vmem:[%s11 + $0x18] sm:$0xf]
        %v3073 = vld [vmem:[%s11 + $0x1c] sm:$0xf]
        %v3074 = vld [vmem:[%s11 + $0x20] sm:$0xf]
        %v3075 = vld [vmem:[%s11 + $0x24] sm:$0xf]
        %v3076 = vld [vmem:[%s11 + $0x28] sm:$0xf]
        %v3077 = vld [vmem:[%s11 + $0x2c] sm:$0xf]
        %v3078 = vld [vmem:[%s11 + $0x30] sm:$0xf]
        %v3079 = vld [vmem:[%s11 + $0x34] sm:$0xf]
        %v3080 = vld [vmem:[%s11 + $0x38] sm:$0xf]
        %v3081 = vld [vmem:[%s11 + $0x3c] sm:$0xf]
        %v3082 = vld [vmem:[%s12] sm:$0x1]
        %v3084 = vlaneseq
        %v3085 = vshrl.u32 %v3084, 7
        %v3086 = vsub.s32 0, %v3085
        %v3087 = vrot.slane %v3082, %v3086
        %v3105 = vunpack.c.l.b16 %v3066
        %v3106 = vunpack.c.l.b16 %v3067
        %v3107 = vunpack.c.l.b16 %v3068
        %v3108 = vunpack.c.l.b16 %v3069
        %v3109 = vunpack.c.l.b16 %v3070
        %v3110 = vunpack.c.l.b16 %v3071
        %v3111 = vunpack.c.l.b16 %v3072
        %v3112 = vunpack.c.l.b16 %v3073
        %v3113 = vunpack.c.l.b16 %v3074
        %v3114 = vunpack.c.l.b16 %v3075
        %v3115 = vunpack.c.l.b16 %v3076
        %v3116 = vunpack.c.l.b16 %v3077
        %v3117 = vunpack.c.l.b16 %v3078
        %v3118 = vunpack.c.l.b16 %v3079
        %v3119 = vunpack.c.l.b16 %v3080
        %v3120 = vunpack.c.l.b16 %v3081
        %v3121 = vpack.c.b16 %v3106, %v3105
        %v3122 = vpack.c.b16 %v3108, %v3107
        %v3123 = vpack.c.b16 %v3110, %v3109
        %v3124 = vpack.c.b16 %v3112, %v3111
        %v3125 = vpack.c.b16 %v3114, %v3113
        %v3126 = vpack.c.b16 %v3116, %v3115
        %v3127 = vpack.c.b16 %v3118, %v3117
        %v3128 = vpack.c.b16 %v3120, %v3119
        %3137 = vmatprep.subr.bf16.mxu0 0
        %3138 = vmatpush1.bf16.msra.mxu0 %v3121
        %3139 = vmatprep.subr.bf16.mxu0 0
        %3140 = vmatpush1.bf16.msra.mxu0 %v3122
        %3141 = vmatprep.subr.bf16.mxu0 0
        %3142 = vmatpush1.bf16.msra.mxu0 %v3123
        %3143 = vmatprep.subr.bf16.mxu0 0
        %3144 = vmatpush1.bf16.msra.mxu0 %v3124
        %3145 = vmatprep.subr.bf16.mxu0 0
        %3146 = vmatpush1.bf16.msra.mxu0 %v3125
        %3147 = vmatprep.subr.bf16.mxu0 0
        %3148 = vmatpush1.bf16.msra.mxu0 %v3126
        %3149 = vmatprep.subr.bf16.mxu0 0
        %3150 = vmatpush1.bf16.msra.mxu0 %v3127
        %3151 = vmatprep.subr.bf16.mxu0 0
        %3152 = vmatpush1.bf16.msra.mxu0 %v3128
        %3153 = vmatprep.subr.bf16.mxu0 0
        %3154 = vmatpush1.bf16.msra.mxu0 0
        %3155 = vmatprep.subr.bf16.mxu0 0
        %3156 = vmatpush1.bf16.msra.mxu0 0
        %3157 = vmatprep.subr.bf16.mxu0 0
        %3158 = vmatpush1.bf16.msra.mxu0 0
        %3159 = vmatprep.subr.bf16.mxu0 0
        %3160 = vmatpush1.bf16.msra.mxu0 0
        %3161 = vmatprep.subr.bf16.mxu0 0
        %3162 = vmatpush1.bf16.msra.mxu0 0
        %3163 = vmatprep.subr.bf16.mxu0 0
        %3164 = vmatpush1.bf16.msra.mxu0 0
        %3165 = vmatprep.subr.bf16.mxu0 0
        %3166 = vmatpush1.bf16.msra.mxu0 0
        %3167 = vmatprep.subr.bf16.mxu0 0
        %3168 = vmatpush1.bf16.msra.mxu0 0
        %3169 = vmatprep.mubr.bf16.mxu0 0
        %3170 = vmatmul.mubr.bf16.gmra.mrb[0].mxu0 %v3065
        %v3171 = vpop.f32.mrb[0].mxu0
        %v3172 = vadd.f32 %v3087, %v3171
        %v3173 = vpop.f32.mrb[0].mxu0
        %v3174 = vpop.f32.mrb[0].mxu0
        %v3175 = vpop.f32.mrb[0].mxu0
        %3176 = vdwg.mxu0
        %v3177 = vmax.f32 %v3172, 0.0
        %3178 = vst [vmem:[%s665] sm:$0xf] %v3177
        %p3179 = scmp.lt.s32.totalorder %s24, 1
        %s3180 = scalar_select %p3179, %s24, 1
        %s3181 = smul.addr %s3180, 4
        %s3182 = scalar_lea.vmem %s13, %s3181
        // Predicated region
        $region152: #{net_forward.1} parent=142 // pred_check
          %p3183 = pneg %p325
        $region153: #{net_forward.1} parent=142 // pred_check_branch
          %3185 = sbr.rel (%p3183) target = $region155
        $region154: #{net_forward.1} parent=142 // pred_region
          _
        $region155: #{net_forward.1} parent=142 // pred_fallthru
          _
      $region143: #{net_forward.1} parent=5 // pred_fallthru
        _
      %p3186 = scmp.le.s32.totalorder 2, %s19
      // Predicated region
      $region156: #{net_forward.1} parent=5 // pred_check
        %p3187 = pneg %p3186
      $region157: #{net_forward.1} parent=5 // pred_check_branch
        %3189 = sbr.rel (%p3187) target = $region159
      $region158: #{net_forward.1} parent=5 // pred_region
        %s3190 = ssub.s32 %s19, 2
        // Predicated region
        $region160: #{net_forward.1} parent=158 // pred_check
          %p3191 = pneg %p331
        $region161: #{net_forward.1} parent=158 // pred_check_branch
          %3193 = sbr.rel (%p3191) target = $region163
        $region162: #{net_forward.1} parent=158 // pred_region
          %p3194 = scmp.lt.s32.totalorder %s25, 1
          %s3195 = scalar_select %p3194, %s25, 1
          %s3196 = smul.addr %s3195, 4
          %s3197 = scalar_lea.vmem %s13, %s3196
        $region163: #{net_forward.1} parent=158 // pred_fallthru
          _
      $region159: #{net_forward.1} parent=5 // pred_fallthru
        _
    $region6: #{net_forward.1} parent=1 // loop_footer
      %s23 = sadd.s32 1, %s19
    $region7: #{net_forward.1} parent=1 // loop_footer_branch
      %18 = sbr.rel target = $region3
    $region8: #{net_forward.1} parent=1 // loop_exit
      _

</llo_original>
